<compile_context>
chip_gen: v7x
topology: tpu7x:2x2x1
jax: 0.10.0
libtpu: 0.0.40
codegen_flags: <defaults>
</compile_context>

<pallas_src>
import functools

import jax
import jax.numpy as jnp
from jax.experimental import pallas as pl
from jax.experimental.pallas import tpu as pltpu


def _round_up(a, m):
    return (a + m - 1) // m * m


def _vmem_capacity_bytes():
    try:
        return int(pltpu.get_tpu_info().vmem_capacity_bytes)
    except Exception:
        return 64 << 20  # conservative: v7x per-TensorCore physical VMEM


# ----------------------------------------------------------------------------
# Small-N kernel: one grid step, all layers unrolled in-kernel.
# ----------------------------------------------------------------------------
def _gin_concat_small_kernel(adj_ref, x_ref, w1_ref, b1_ref, w2_ref, b2_ref,
                             out_ref, *, num_layers, state_w):
    h = x_ref[...]                                        # (N_pad, W) bf16
    for l in range(num_layers):
        # GIN aggregation ((1+eps) self term folded into adj diagonal).
        agg = jnp.dot(adj_ref[...], h, preferred_element_type=jnp.float32)
        # MLP: Linear -> ReLU -> Linear, bf16 MXU operands, f32 accumulation.
        z = jnp.dot(agg.astype(jnp.bfloat16), w1_ref[l],
                    preferred_element_type=jnp.float32) + b1_ref[l]
        z = jnp.maximum(z, 0.0)
        z = jnp.dot(z.astype(jnp.bfloat16), w2_ref[l],
                    preferred_element_type=jnp.float32) + b2_ref[l]
        # BN already folded into w2/b2.  ReLU on all but the last layer.
        if l != num_layers - 1:
            z = jnp.maximum(z, 0.0)
        zb = z.astype(jnp.bfloat16)
        # Write this layer's 128-lane column block of the concat slab.
        out_ref[:, l * state_w:(l + 1) * state_w] = zb
        h = zb


# ----------------------------------------------------------------------------
# Large-N kernel: grid = (num_layers, num_row_tiles), layers outer.
# ----------------------------------------------------------------------------
def _gin_concat_layered_kernel(adj_ref, x_ref, w1_ref, b1_ref, w2_ref, b2_ref,
                               out_ref, h_ref, *, num_layers, tile_m,
                               num_tiles, state_w, adj_resident):
    l = pl.program_id(0)   # layer index
    i = pl.program_id(1)   # node-row tile index
    n_pad = num_tiles * tile_m

    # One-shot bootstrap: DMA the padded node features into state slot 0.
    @pl.when(jnp.logical_and(l == 0, i == 0))
    def _():
        pltpu.sync_copy(x_ref, h_ref.at[0])

    read_slot = l % 2
    write_slot = 1 - read_slot

    # Previous layer's full node state (bf16), leading dims merged (no-op).
    h_prev = h_ref[read_slot].reshape(n_pad, state_w)

    if adj_resident:
        row0 = pl.multiple_of(i * tile_m, tile_m)
        adj_tile = adj_ref[pl.ds(row0, tile_m), :]
    else:
        adj_tile = adj_ref[...]

    agg = jnp.dot(adj_tile, h_prev, preferred_element_type=jnp.float32)
    z = jnp.dot(agg.astype(jnp.bfloat16), w1_ref[0],
                preferred_element_type=jnp.float32) + b1_ref[0]
    z = jnp.maximum(z, 0.0)
    z = jnp.dot(z.astype(jnp.bfloat16), w2_ref[0],
                preferred_element_type=jnp.float32) + b2_ref[0]

    # ReLU on all but the last layer (floor trick; BN folded into w2/b2).
    floor = jnp.where(l == num_layers - 1, -jnp.inf, 0.0).astype(jnp.float32)
    z = jnp.maximum(z, floor)

    zb = z.astype(jnp.bfloat16)
    out_ref[...] = zb                      # column block l of the concat slab

    # Feed next layer via the ping-pong state; skip the dead store at the end.
    @pl.when(l < num_layers - 1)
    def _():
        h_ref[write_slot, i] = zb


# ----------------------------------------------------------------------------
# Host-side parameter folding / padding.
# ----------------------------------------------------------------------------
def _fold_and_pad_params(params, state_w, h2p, bn_eps):
    def pad2(a, r, c, dtype):
        out = jnp.zeros((r, c), jnp.float32)
        out = out.at[:a.shape[0], :a.shape[1]].set(a.astype(jnp.float32))
        return out.astype(dtype)

    w1s, b1s, w2s, b2s = [], [], [], []
    for p in params:
        s = p["gamma"] / jnp.sqrt(p["running_var"] + bn_eps)
        t = p["beta"] - p["running_mean"] * s
        w2f = p["w2"] * s[None, :]        # BN scale folded column-wise into w2
        b2f = p["b2"] * s + t             # BN scale+shift folded into the bias
        w1s.append(pad2(p["w1"], state_w, h2p, jnp.bfloat16))
        b1s.append(pad2(p["b1"][None, :], 1, h2p, jnp.float32))
        w2s.append(pad2(w2f, h2p, state_w, jnp.bfloat16))
        b2s.append(pad2(b2f[None, :], 1, state_w, jnp.float32))
    return jnp.stack(w1s), jnp.stack(b1s), jnp.stack(w2s), jnp.stack(b2s)


def _build_adjacency(edge_index, n, n_pad, gin_eps):
    src, dst = edge_index[0], edge_index[1]
    adj = jnp.zeros((n_pad, n_pad), jnp.float32).at[dst, src].add(1.0)
    diag = jnp.arange(n)
    # (1 + eps) self term folded into the diagonal.  NOTE: adjacency is bf16;
    # edge multiplicities are small ints (exact).  gin_eps=0 is exact too.
    adj = adj.at[diag, diag].add(1.0 + gin_eps)
    return adj.astype(jnp.bfloat16)


# ----------------------------------------------------------------------------
# GINConcat forward (pred=False): returns node representations (N, L*H).
# ----------------------------------------------------------------------------
def gin_concat_forward(params, x, edge_index, batch, *, num_layers, hidden_dim,
                       bn_eps=1e-5, gin_eps=0.0, force_path=None):
    del batch  # only used when pred=True
    N, F = x.shape
    H = hidden_dim
    L = num_layers
    STATE_W = _round_up(max(F, H), 128)   # lane-padded node-state width
    H2P = _round_up(2 * H, 128)           # lane-padded MLP hidden width

    phys_vmem = _vmem_capacity_bytes()
    w1, b1, w2, b2 = _fold_and_pad_params(params, STATE_W, H2P, bn_eps)
    weight_bytes = int(w1.size * 2 + w2.size * 2 + b1.size * 4 + b2.size * 4)

    # ----- path selection -----------------------------------------------
    n_pad_small = _round_up(N, 128)
    est_small = (2 * n_pad_small * n_pad_small * 2        # adjacency
                 + 2 * n_pad_small * STATE_W * 2          # node features
                 + 2 * weight_bytes                       # stacked params
                 + 2 * n_pad_small * L * STATE_W * 2      # concat slab
                 + 8 * n_pad_small * max(STATE_W, H2P) * 4)  # f32 temporaries
    use_small = (n_pad_small <= 2048) and (est_small <= phys_vmem // 2)
    if force_path == "small":
        use_small = True
    elif force_path == "layered":
        use_small = False

    if use_small:
        N_pad = n_pad_small
        adj = _build_adjacency(edge_index, N, N_pad, gin_eps)
        x_pad = jnp.zeros((N_pad, STATE_W), jnp.bfloat16)
        x_pad = x_pad.at[:N, :F].set(x.astype(jnp.bfloat16))
        vmem_limit = int(min(max(32 << 20, int(1.3 * est_small)),
                             int(0.9 * phys_vmem)))

        kernel = functools.partial(_gin_concat_small_kernel,
                                   num_layers=L, state_w=STATE_W)
        out = pl.pallas_call(
            kernel,
            out_shape=jax.ShapeDtypeStruct((N_pad, L * STATE_W), jnp.bfloat16),
            grid_spec=pltpu.PrefetchScalarGridSpec(
                num_scalar_prefetch=0,
                grid=(1,),
                in_specs=[
                    pl.BlockSpec((N_pad, N_pad), lambda i: (0, 0)),
                    pl.BlockSpec((N_pad, STATE_W), lambda i: (0, 0)),
                    pl.BlockSpec((L, STATE_W, H2P), lambda i: (0, 0, 0)),
                    pl.BlockSpec((L, 1, H2P), lambda i: (0, 0, 0)),
                    pl.BlockSpec((L, H2P, STATE_W), lambda i: (0, 0, 0)),
                    pl.BlockSpec((L, 1, STATE_W), lambda i: (0, 0, 0)),
                ],
                out_specs=pl.BlockSpec((N_pad, L * STATE_W), lambda i: (0, 0)),
            ),
            compiler_params=pltpu.CompilerParams(
                dimension_semantics=("arbitrary",),
                vmem_limit_bytes=vmem_limit,
            ),
        )(adj, x_pad, w1, b1, w2, b2)
    else:
        TILE_M = min(512, _round_up(N, 128))
        N_pad = _round_up(N, TILE_M)
        num_tiles = N_pad // TILE_M
        adj = _build_adjacency(edge_index, N, N_pad, gin_eps)
        x_pad = jnp.zeros((N_pad, STATE_W), jnp.bfloat16)
        x_pad = x_pad.at[:N, :F].set(x.astype(jnp.bfloat16))
        x_pad = x_pad.reshape(num_tiles, TILE_M, STATE_W)

        # Keep the full adjacency VMEM-resident across all layers when it fits
        # (otherwise re-streamed row-tiled once per layer).
        adj_resident = (2 * N_pad * N_pad * 2) <= (phys_vmem // 2)
        adj_bytes = (2 * N_pad * N_pad * 2 if adj_resident
                     else 2 * TILE_M * N_pad * 2)
        per_layer_w_bytes = (STATE_W * H2P * 2 + H2P * STATE_W * 2
                             + H2P * 4 + STATE_W * 4)
        est = (adj_bytes
               + 2 * N_pad * STATE_W * 2         # ping-pong state scratch
               + N_pad * STATE_W * 2             # h_prev temporary
               + 2 * per_layer_w_bytes           # double-buffered weights
               + 2 * TILE_M * STATE_W * 2        # bf16 output window
               + 8 * TILE_M * max(STATE_W, H2P) * 4)  # f32 temporaries
        vmem_limit = int(min(max(32 << 20, int(1.3 * est)),
                             int(0.9 * phys_vmem)))

        if adj_resident:
            adj_spec = pl.BlockSpec((N_pad, N_pad), lambda l, i: (0, 0))
        else:
            adj_spec = pl.BlockSpec((TILE_M, N_pad), lambda l, i: (i, 0))

        kernel = functools.partial(_gin_concat_layered_kernel,
                                   num_layers=L, tile_m=TILE_M,
                                   num_tiles=num_tiles, state_w=STATE_W,
                                   adj_resident=adj_resident)
        out = pl.pallas_call(
            kernel,
            out_shape=jax.ShapeDtypeStruct((N_pad, L * STATE_W), jnp.bfloat16),
            grid_spec=pltpu.PrefetchScalarGridSpec(
                num_scalar_prefetch=0,
                grid=(L, num_tiles),
                in_specs=[
                    adj_spec,
                    pl.BlockSpec(memory_space=pl.ANY),   # x: one-shot DMA
                    pl.BlockSpec((1, STATE_W, H2P), lambda l, i: (l, 0, 0)),
                    pl.BlockSpec((1, 1, H2P), lambda l, i: (l, 0, 0)),
                    pl.BlockSpec((1, H2P, STATE_W), lambda l, i: (l, 0, 0)),
                    pl.BlockSpec((1, 1, STATE_W), lambda l, i: (l, 0, 0)),
                ],
                out_specs=pl.BlockSpec((TILE_M, STATE_W), lambda l, i: (i, l)),
                scratch_shapes=[
                    pltpu.VMEM((2, num_tiles, TILE_M, STATE_W), jnp.bfloat16)],
            ),
            compiler_params=pltpu.CompilerParams(
                # Both axes carry dependencies (layer ping-pong; all row tiles
                # of layer l must land before layer l+1 reads them).
                dimension_semantics=("arbitrary", "arbitrary"),
                vmem_limit_bytes=vmem_limit,
            ),
        )(adj, x_pad, w1, b1, w2, b2)

    # Strip node/lane padding: (N_pad, L*W) -> (N, L*H)
    out = out[:N].reshape(N, L, STATE_W)[:, :, :H].reshape(N, L * H)
    return out.astype(jnp.float32)


# ----------------------------------------------------------------------------
# Pure-JAX f32 reference (correctness check).
# ----------------------------------------------------------------------------
def gin_concat_reference(params, x, edge_index, *, num_layers, bn_eps=1e-5):
    N = x.shape[0]
    src, dst = edge_index[0], edge_index[1]
    adj = jnp.zeros((N, N), jnp.float32).at[dst, src].add(1.0)
    h = x.astype(jnp.float32)
    outs = []
    for layer in range(num_layers):
        p = params[layer]
        agg = adj @ h + h                       # eps = 0
        z = agg @ p["w1"] + p["b1"]
        z = jnp.maximum(z, 0.0)
        z = z @ p["w2"] + p["b2"]
        s = p["gamma"] / jnp.sqrt(p["running_var"] + bn_eps)
        t = p["beta"] - p["running_mean"] * s
        z = z * s + t
        if layer != num_layers - 1:
            z = jnp.maximum(z, 0.0)
        outs.append(z)
        h = z
    return jnp.concatenate(outs, axis=1)


# ----------------------------------------------------------------------------
# Deterministic parameter init (torch.nn.Linear / BatchNorm1d shapes).
# ----------------------------------------------------------------------------
def init_params(key, num_features, hidden_dim, num_layers):
    params = []
    for layer in range(num_layers):
        f_in = num_features if layer == 0 else hidden_dim
        key, k1, k2, k3, k4 = jax.random.split(key, 5)
        bound1 = 1.0 / jnp.sqrt(f_in)
        bound2 = 1.0 / jnp.sqrt(2 * hidden_dim)
        params.append({
            "w1": jax.random.uniform(k1, (f_in, 2 * hidden_dim), jnp.float32,
                                     -bound1, bound1),
            "b1": jax.random.uniform(k2, (2 * hidden_dim,), jnp.float32,
                                     -bound1, bound1),
            "w2": jax.random.uniform(k3, (2 * hidden_dim, hidden_dim),
                                     jnp.float32, -bound2, bound2),
            "b2": jax.random.uniform(k4, (hidden_dim,), jnp.float32,
                                     -bound2, bound2),
            # BatchNorm1d defaults
            "gamma": jnp.ones((hidden_dim,), jnp.float32),
            "beta": jnp.zeros((hidden_dim,), jnp.float32),
            "running_mean": jnp.zeros((hidden_dim,), jnp.float32),
            "running_var": jnp.ones((hidden_dim,), jnp.float32),
        })
    return params


def _make_graph(key, num_nodes, num_extra_edges):
    ring_src = jnp.arange(num_nodes, dtype=jnp.int32)
    ring_dst = (ring_src + 1) % num_nodes
    rand_src = jax.random.randint(key, (num_extra_edges,), 0, num_nodes,
                                  jnp.int32)
    rand_dst = (rand_src + 3) % num_nodes
    src = jnp.concatenate([ring_src, ring_dst, rand_src])
    dst = jnp.concatenate([ring_dst, ring_src, rand_dst])
    return jnp.stack([src, dst], axis=0)


if __name__ == "__main__":
    num_features = 8
    hidden_dim = 32
    num_layers = 5

    key = jax.random.PRNGKey(0)
    key, kp = jax.random.split(key)
    params = init_params(kp, num_features, hidden_dim, num_layers)

    # --- Test 1: small graph -> fused single-grid-step path ------------------
    key, kx1, ke1 = jax.random.split(key, 3)
    n1 = 16
    x1 = jax.random.normal(kx1, (n1, num_features), jnp.float32)
    ei1 = _make_graph(ke1, n1, 8)
    batch1 = jnp.zeros((n1,), jnp.int32)

    out1 = gin_concat_forward(params, x1, ei1, batch1,
                              num_layers=num_layers, hidden_dim=hidden_dim)
    out1 = jax.block_until_ready(out1)
    assert out1.shape == (n1, hidden_dim * num_layers), out1.shape
    assert bool(jnp.all(jnp.isfinite(out1)))
    ref1 = gin_concat_reference(params, x1, ei1, num_layers=num_layers)
    rel1 = float(jnp.max(jnp.abs(out1 - ref1))) / max(
        1.0, float(jnp.max(jnp.abs(ref1))))
    assert rel1 < 0.10, rel1

    # --- Test 2: larger graph -> layered (layers x row-tiles) grid path ------
    key, kx2, ke2 = jax.random.split(key, 3)
    n2 = 600
    x2 = jax.random.normal(kx2, (n2, num_features), jnp.float32)
    ei2 = _make_graph(ke2, n2, 64)
    batch2 = jnp.zeros((n2,), jnp.int32)

    out2 = gin_concat_forward(params, x2, ei2, batch2,
                              num_layers=num_layers, hidden_dim=hidden_dim,
                              force_path="layered")
    out2 = jax.block_until_ready(out2)
    assert out2.shape == (n2, hidden_dim * num_layers), out2.shape
    assert bool(jnp.all(jnp.isfinite(out2)))
    ref2 = gin_concat_reference(params, x2, ei2, num_layers=num_layers)
    rel2 = float(jnp.max(jnp.abs(out2 - ref2))) / max(
        1.0, float(jnp.max(jnp.abs(ref2))))
    assert rel2 < 0.12, rel2

    print("KERNEL_OK")
</pallas_src>

<mosaic_0001>
module attributes {stable_mosaic.version = 11 : i64} {
  func.func @_gin_concat_small_kernel(%arg0: i32, %arg1: memref<128x128xbf16, #tpu.memory_space<vmem>>, %arg2: memref<128x128xbf16, #tpu.memory_space<vmem>>, %arg3: memref<5x128x128xbf16, #tpu.memory_space<vmem>>, %arg4: memref<5x1x128xf32, #tpu.memory_space<vmem>>, %arg5: memref<5x128x128xbf16, #tpu.memory_space<vmem>>, %arg6: memref<5x1x128xf32, #tpu.memory_space<vmem>>, %arg7: memref<128x640xbf16, #tpu.memory_space<vmem>>) attributes {dimension_semantics = [#tpu.dimension_semantics<arbitrary>], iteration_bounds = array<i64: 1>, scalar_prefetch = 0 : i64, scratch_operands = 0 : i64, tpu.core_type = #tpu.core_type<tc>, window_params = [{pipeline_mode = #tpu.pipeline_mode<synchronous>, transform_indices = @transform_0, window_bounds = array<i64: 128, 128>}, {pipeline_mode = #tpu.pipeline_mode<synchronous>, transform_indices = @transform_1, window_bounds = array<i64: 128, 128>}, {pipeline_mode = #tpu.pipeline_mode<synchronous>, transform_indices = @transform_2, window_bounds = array<i64: 5, 128, 128>}, {pipeline_mode = #tpu.pipeline_mode<synchronous>, transform_indices = @transform_3, window_bounds = array<i64: 5, 1, 128>}, {pipeline_mode = #tpu.pipeline_mode<synchronous>, transform_indices = @transform_4, window_bounds = array<i64: 5, 128, 128>}, {pipeline_mode = #tpu.pipeline_mode<synchronous>, transform_indices = @transform_5, window_bounds = array<i64: 5, 1, 128>}, {pipeline_mode = #tpu.pipeline_mode<synchronous>, transform_indices = @transform_6, window_bounds = array<i64: 128, 640>}]} {
    %c0 = arith.constant 0 : index
    %c0_0 = arith.constant 0 : index
    %0 = vector.load %arg2[%c0, %c0_0] : memref<128x128xbf16, #tpu.memory_space<vmem>>, vector<128x128xbf16>
    %c0_1 = arith.constant 0 : index
    %c0_2 = arith.constant 0 : index
    %1 = vector.load %arg1[%c0_1, %c0_2] : memref<128x128xbf16, #tpu.memory_space<vmem>>, vector<128x128xbf16>
    %cst = arith.constant dense<0.000000e+00> : vector<128x128xf32>
    %2 = tpu.matmul %1, %0, %cst {dimension_numbers = #tpu.dot_dimension_numbers<[1], [0], [0], [1], [0, 0, 1, 1], [], []>} : vector<128x128xbf16>, vector<128x128xbf16>, vector<128x128xf32> -> vector<128x128xf32>
    %3 = arith.truncf %2 : vector<128x128xf32> to vector<128x128xbf16>
    %c0_3 = arith.constant 0 : index
    %c0_4 = arith.constant 0 : index
    %c0_5 = arith.constant 0 : index
    %4 = vector.load %arg3[%c0_3, %c0_4, %c0_5] : memref<5x128x128xbf16, #tpu.memory_space<vmem>>, vector<1x128x128xbf16>
    %5 = vector.shape_cast %4 : vector<1x128x128xbf16> to vector<128x128xbf16>
    %cst_6 = arith.constant dense<0.000000e+00> : vector<128x128xf32>
    %6 = tpu.matmul %3, %5, %cst_6 {dimension_numbers = #tpu.dot_dimension_numbers<[1], [0], [0], [1], [0, 0, 1, 1], [], []>} : vector<128x128xbf16>, vector<128x128xbf16>, vector<128x128xf32> -> vector<128x128xf32>
    %c0_7 = arith.constant 0 : index
    %c0_8 = arith.constant 0 : index
    %c0_9 = arith.constant 0 : index
    %7 = vector.load %arg4[%c0_7, %c0_8, %c0_9] : memref<5x1x128xf32, #tpu.memory_space<vmem>>, vector<1x1x128xf32>
    %8 = vector.shape_cast %7 : vector<1x1x128xf32> to vector<1x128xf32>
    %9 = vector.broadcast %8 : vector<1x128xf32> to vector<128x128xf32>
    %10 = arith.addf %6, %9 : vector<128x128xf32>
    %cst_10 = arith.constant 0.000000e+00 : f32
    %11 = vector.broadcast %cst_10 : f32 to vector<128x128xf32>
    %12 = arith.maximumf %10, %11 : vector<128x128xf32>
    %13 = arith.truncf %12 : vector<128x128xf32> to vector<128x128xbf16>
    %c0_11 = arith.constant 0 : index
    %c0_12 = arith.constant 0 : index
    %c0_13 = arith.constant 0 : index
    %14 = vector.load %arg5[%c0_11, %c0_12, %c0_13] : memref<5x128x128xbf16, #tpu.memory_space<vmem>>, vector<1x128x128xbf16>
    %15 = vector.shape_cast %14 : vector<1x128x128xbf16> to vector<128x128xbf16>
    %cst_14 = arith.constant dense<0.000000e+00> : vector<128x128xf32>
    %16 = tpu.matmul %13, %15, %cst_14 {dimension_numbers = #tpu.dot_dimension_numbers<[1], [0], [0], [1], [0, 0, 1, 1], [], []>} : vector<128x128xbf16>, vector<128x128xbf16>, vector<128x128xf32> -> vector<128x128xf32>
    %c0_15 = arith.constant 0 : index
    %c0_16 = arith.constant 0 : index
    %c0_17 = arith.constant 0 : index
    %17 = vector.load %arg6[%c0_15, %c0_16, %c0_17] : memref<5x1x128xf32, #tpu.memory_space<vmem>>, vector<1x1x128xf32>
    %18 = vector.shape_cast %17 : vector<1x1x128xf32> to vector<1x128xf32>
    %19 = vector.broadcast %18 : vector<1x128xf32> to vector<128x128xf32>
    %20 = arith.addf %16, %19 : vector<128x128xf32>
    %cst_18 = arith.constant 0.000000e+00 : f32
    %21 = vector.broadcast %cst_18 : f32 to vector<128x128xf32>
    %22 = arith.maximumf %20, %21 : vector<128x128xf32>
    %23 = arith.truncf %22 : vector<128x128xf32> to vector<128x128xbf16>
    %c0_19 = arith.constant 0 : index
    %c0_20 = arith.constant 0 : index
    %24 = vector.load %arg7[%c0_19, %c0_20] : memref<128x640xbf16, #tpu.memory_space<vmem>>, vector<128x128xbf16>
    tpu.vector_store %arg7[%c0_19, %c0_20], %23 {strides = array<i32>} : memref<128x640xbf16, #tpu.memory_space<vmem>>, vector<128x128xbf16>,
    %c0_21 = arith.constant 0 : index
    %c0_22 = arith.constant 0 : index
    %25 = vector.load %arg1[%c0_21, %c0_22] : memref<128x128xbf16, #tpu.memory_space<vmem>>, vector<128x128xbf16>
    %cst_23 = arith.constant dense<0.000000e+00> : vector<128x128xf32>
    %26 = tpu.matmul %25, %23, %cst_23 {dimension_numbers = #tpu.dot_dimension_numbers<[1], [0], [0], [1], [0, 0, 1, 1], [], []>} : vector<128x128xbf16>, vector<128x128xbf16>, vector<128x128xf32> -> vector<128x128xf32>
    %27 = arith.truncf %26 : vector<128x128xf32> to vector<128x128xbf16>
    %c1 = arith.constant 1 : index
    %c0_24 = arith.constant 0 : index
    %c0_25 = arith.constant 0 : index
    %28 = vector.load %arg3[%c1, %c0_24, %c0_25] : memref<5x128x128xbf16, #tpu.memory_space<vmem>>, vector<1x128x128xbf16>
    %29 = vector.shape_cast %28 : vector<1x128x128xbf16> to vector<128x128xbf16>
    %cst_26 = arith.constant dense<0.000000e+00> : vector<128x128xf32>
    %30 = tpu.matmul %27, %29, %cst_26 {dimension_numbers = #tpu.dot_dimension_numbers<[1], [0], [0], [1], [0, 0, 1, 1], [], []>} : vector<128x128xbf16>, vector<128x128xbf16>, vector<128x128xf32> -> vector<128x128xf32>
    %c1_27 = arith.constant 1 : index
    %c0_28 = arith.constant 0 : index
    %c0_29 = arith.constant 0 : index
    %31 = vector.load %arg4[%c1_27, %c0_28, %c0_29] : memref<5x1x128xf32, #tpu.memory_space<vmem>>, vector<1x1x128xf32>
    %32 = vector.shape_cast %31 : vector<1x1x128xf32> to vector<1x128xf32>
    %33 = vector.broadcast %32 : vector<1x128xf32> to vector<128x128xf32>
    %34 = arith.addf %30, %33 : vector<128x128xf32>
    %cst_30 = arith.constant 0.000000e+00 : f32
    %35 = vector.broadcast %cst_30 : f32 to vector<128x128xf32>
    %36 = arith.maximumf %34, %35 : vector<128x128xf32>
    %37 = arith.truncf %36 : vector<128x128xf32> to vector<128x128xbf16>
    %c1_31 = arith.constant 1 : index
    %c0_32 = arith.constant 0 : index
    %c0_33 = arith.constant 0 : index
    %38 = vector.load %arg5[%c1_31, %c0_32, %c0_33] : memref<5x128x128xbf16, #tpu.memory_space<vmem>>, vector<1x128x128xbf16>
    %39 = vector.shape_cast %38 : vector<1x128x128xbf16> to vector<128x128xbf16>
    %cst_34 = arith.constant dense<0.000000e+00> : vector<128x128xf32>
    %40 = tpu.matmul %37, %39, %cst_34 {dimension_numbers = #tpu.dot_dimension_numbers<[1], [0], [0], [1], [0, 0, 1, 1], [], []>} : vector<128x128xbf16>, vector<128x128xbf16>, vector<128x128xf32> -> vector<128x128xf32>
    %c1_35 = arith.constant 1 : index
    %c0_36 = arith.constant 0 : index
    %c0_37 = arith.constant 0 : index
    %41 = vector.load %arg6[%c1_35, %c0_36, %c0_37] : memref<5x1x128xf32, #tpu.memory_space<vmem>>, vector<1x1x128xf32>
    %42 = vector.shape_cast %41 : vector<1x1x128xf32> to vector<1x128xf32>
    %43 = vector.broadcast %42 : vector<1x128xf32> to vector<128x128xf32>
    %44 = arith.addf %40, %43 : vector<128x128xf32>
    %cst_38 = arith.constant 0.000000e+00 : f32
    %45 = vector.broadcast %cst_38 : f32 to vector<128x128xf32>
    %46 = arith.maximumf %44, %45 : vector<128x128xf32>
    %47 = arith.truncf %46 : vector<128x128xf32> to vector<128x128xbf16>
    %c0_39 = arith.constant 0 : index
    %c128 = arith.constant 128 : index
    %48 = vector.load %arg7[%c0_39, %c128] : memref<128x640xbf16, #tpu.memory_space<vmem>>, vector<128x128xbf16>
    tpu.vector_store %arg7[%c0_39, %c128], %47 {strides = array<i32>} : memref<128x640xbf16, #tpu.memory_space<vmem>>, vector<128x128xbf16>,
    %c0_40 = arith.constant 0 : index
    %c0_41 = arith.constant 0 : index
    %49 = vector.load %arg1[%c0_40, %c0_41] : memref<128x128xbf16, #tpu.memory_space<vmem>>, vector<128x128xbf16>
    %cst_42 = arith.constant dense<0.000000e+00> : vector<128x128xf32>
    %50 = tpu.matmul %49, %47, %cst_42 {dimension_numbers = #tpu.dot_dimension_numbers<[1], [0], [0], [1], [0, 0, 1, 1], [], []>} : vector<128x128xbf16>, vector<128x128xbf16>, vector<128x128xf32> -> vector<128x128xf32>
    %51 = arith.truncf %50 : vector<128x128xf32> to vector<128x128xbf16>
    %c2 = arith.constant 2 : index
    %c0_43 = arith.constant 0 : index
    %c0_44 = arith.constant 0 : index
    %52 = vector.load %arg3[%c2, %c0_43, %c0_44] : memref<5x128x128xbf16, #tpu.memory_space<vmem>>, vector<1x128x128xbf16>
    %53 = vector.shape_cast %52 : vector<1x128x128xbf16> to vector<128x128xbf16>
    %cst_45 = arith.constant dense<0.000000e+00> : vector<128x128xf32>
    %54 = tpu.matmul %51, %53, %cst_45 {dimension_numbers = #tpu.dot_dimension_numbers<[1], [0], [0], [1], [0, 0, 1, 1], [], []>} : vector<128x128xbf16>, vector<128x128xbf16>, vector<128x128xf32> -> vector<128x128xf32>
    %c2_46 = arith.constant 2 : index
    %c0_47 = arith.constant 0 : index
    %c0_48 = arith.constant 0 : index
    %55 = vector.load %arg4[%c2_46, %c0_47, %c0_48] : memref<5x1x128xf32, #tpu.memory_space<vmem>>, vector<1x1x128xf32>
    %56 = vector.shape_cast %55 : vector<1x1x128xf32> to vector<1x128xf32>
    %57 = vector.broadcast %56 : vector<1x128xf32> to vector<128x128xf32>
    %58 = arith.addf %54, %57 : vector<128x128xf32>
    %cst_49 = arith.constant 0.000000e+00 : f32
    %59 = vector.broadcast %cst_49 : f32 to vector<128x128xf32>
    %60 = arith.maximumf %58, %59 : vector<128x128xf32>
    %61 = arith.truncf %60 : vector<128x128xf32> to vector<128x128xbf16>
    %c2_50 = arith.constant 2 : index
    %c0_51 = arith.constant 0 : index
    %c0_52 = arith.constant 0 : index
    %62 = vector.load %arg5[%c2_50, %c0_51, %c0_52] : memref<5x128x128xbf16, #tpu.memory_space<vmem>>, vector<1x128x128xbf16>
    %63 = vector.shape_cast %62 : vector<1x128x128xbf16> to vector<128x128xbf16>
    %cst_53 = arith.constant dense<0.000000e+00> : vector<128x128xf32>
    %64 = tpu.matmul %61, %63, %cst_53 {dimension_numbers = #tpu.dot_dimension_numbers<[1], [0], [0], [1], [0, 0, 1, 1], [], []>} : vector<128x128xbf16>, vector<128x128xbf16>, vector<128x128xf32> -> vector<128x128xf32>
    %c2_54 = arith.constant 2 : index
    %c0_55 = arith.constant 0 : index
    %c0_56 = arith.constant 0 : index
    %65 = vector.load %arg6[%c2_54, %c0_55, %c0_56] : memref<5x1x128xf32, #tpu.memory_space<vmem>>, vector<1x1x128xf32>
    %66 = vector.shape_cast %65 : vector<1x1x128xf32> to vector<1x128xf32>
    %67 = vector.broadcast %66 : vector<1x128xf32> to vector<128x128xf32>
    %68 = arith.addf %64, %67 : vector<128x128xf32>
    %cst_57 = arith.constant 0.000000e+00 : f32
    %69 = vector.broadcast %cst_57 : f32 to vector<128x128xf32>
    %70 = arith.maximumf %68, %69 : vector<128x128xf32>
    %71 = arith.truncf %70 : vector<128x128xf32> to vector<128x128xbf16>
    %c0_58 = arith.constant 0 : index
    %c256 = arith.constant 256 : index
    %72 = vector.load %arg7[%c0_58, %c256] : memref<128x640xbf16, #tpu.memory_space<vmem>>, vector<128x128xbf16>
    tpu.vector_store %arg7[%c0_58, %c256], %71 {strides = array<i32>} : memref<128x640xbf16, #tpu.memory_space<vmem>>, vector<128x128xbf16>,
    %c0_59 = arith.constant 0 : index
    %c0_60 = arith.constant 0 : index
    %73 = vector.load %arg1[%c0_59, %c0_60] : memref<128x128xbf16, #tpu.memory_space<vmem>>, vector<128x128xbf16>
    %cst_61 = arith.constant dense<0.000000e+00> : vector<128x128xf32>
    %74 = tpu.matmul %73, %71, %cst_61 {dimension_numbers = #tpu.dot_dimension_numbers<[1], [0], [0], [1], [0, 0, 1, 1], [], []>} : vector<128x128xbf16>, vector<128x128xbf16>, vector<128x128xf32> -> vector<128x128xf32>
    %75 = arith.truncf %74 : vector<128x128xf32> to vector<128x128xbf16>
    %c3 = arith.constant 3 : index
    %c0_62 = arith.constant 0 : index
    %c0_63 = arith.constant 0 : index
    %76 = vector.load %arg3[%c3, %c0_62, %c0_63] : memref<5x128x128xbf16, #tpu.memory_space<vmem>>, vector<1x128x128xbf16>
    %77 = vector.shape_cast %76 : vector<1x128x128xbf16> to vector<128x128xbf16>
    %cst_64 = arith.constant dense<0.000000e+00> : vector<128x128xf32>
    %78 = tpu.matmul %75, %77, %cst_64 {dimension_numbers = #tpu.dot_dimension_numbers<[1], [0], [0], [1], [0, 0, 1, 1], [], []>} : vector<128x128xbf16>, vector<128x128xbf16>, vector<128x128xf32> -> vector<128x128xf32>
    %c3_65 = arith.constant 3 : index
    %c0_66 = arith.constant 0 : index
    %c0_67 = arith.constant 0 : index
    %79 = vector.load %arg4[%c3_65, %c0_66, %c0_67] : memref<5x1x128xf32, #tpu.memory_space<vmem>>, vector<1x1x128xf32>
    %80 = vector.shape_cast %79 : vector<1x1x128xf32> to vector<1x128xf32>
    %81 = vector.broadcast %80 : vector<1x128xf32> to vector<128x128xf32>
    %82 = arith.addf %78, %81 : vector<128x128xf32>
    %cst_68 = arith.constant 0.000000e+00 : f32
    %83 = vector.broadcast %cst_68 : f32 to vector<128x128xf32>
    %84 = arith.maximumf %82, %83 : vector<128x128xf32>
    %85 = arith.truncf %84 : vector<128x128xf32> to vector<128x128xbf16>
    %c3_69 = arith.constant 3 : index
    %c0_70 = arith.constant 0 : index
    %c0_71 = arith.constant 0 : index
    %86 = vector.load %arg5[%c3_69, %c0_70, %c0_71] : memref<5x128x128xbf16, #tpu.memory_space<vmem>>, vector<1x128x128xbf16>
    %87 = vector.shape_cast %86 : vector<1x128x128xbf16> to vector<128x128xbf16>
    %cst_72 = arith.constant dense<0.000000e+00> : vector<128x128xf32>
    %88 = tpu.matmul %85, %87, %cst_72 {dimension_numbers = #tpu.dot_dimension_numbers<[1], [0], [0], [1], [0, 0, 1, 1], [], []>} : vector<128x128xbf16>, vector<128x128xbf16>, vector<128x128xf32> -> vector<128x128xf32>
    %c3_73 = arith.constant 3 : index
    %c0_74 = arith.constant 0 : index
    %c0_75 = arith.constant 0 : index
    %89 = vector.load %arg6[%c3_73, %c0_74, %c0_75] : memref<5x1x128xf32, #tpu.memory_space<vmem>>, vector<1x1x128xf32>
    %90 = vector.shape_cast %89 : vector<1x1x128xf32> to vector<1x128xf32>
    %91 = vector.broadcast %90 : vector<1x128xf32> to vector<128x128xf32>
    %92 = arith.addf %88, %91 : vector<128x128xf32>
    %cst_76 = arith.constant 0.000000e+00 : f32
    %93 = vector.broadcast %cst_76 : f32 to vector<128x128xf32>
    %94 = arith.maximumf %92, %93 : vector<128x128xf32>
    %95 = arith.truncf %94 : vector<128x128xf32> to vector<128x128xbf16>
    %c0_77 = arith.constant 0 : index
    %c384 = arith.constant 384 : index
    %96 = vector.load %arg7[%c0_77, %c384] : memref<128x640xbf16, #tpu.memory_space<vmem>>, vector<128x128xbf16>
    tpu.vector_store %arg7[%c0_77, %c384], %95 {strides = array<i32>} : memref<128x640xbf16, #tpu.memory_space<vmem>>, vector<128x128xbf16>,
    %c0_78 = arith.constant 0 : index
    %c0_79 = arith.constant 0 : index
    %97 = vector.load %arg1[%c0_78, %c0_79] : memref<128x128xbf16, #tpu.memory_space<vmem>>, vector<128x128xbf16>
    %cst_80 = arith.constant dense<0.000000e+00> : vector<128x128xf32>
    %98 = tpu.matmul %97, %95, %cst_80 {dimension_numbers = #tpu.dot_dimension_numbers<[1], [0], [0], [1], [0, 0, 1, 1], [], []>} : vector<128x128xbf16>, vector<128x128xbf16>, vector<128x128xf32> -> vector<128x128xf32>
    %99 = arith.truncf %98 : vector<128x128xf32> to vector<128x128xbf16>
    %c4 = arith.constant 4 : index
    %c0_81 = arith.constant 0 : index
    %c0_82 = arith.constant 0 : index
    %100 = vector.load %arg3[%c4, %c0_81, %c0_82] : memref<5x128x128xbf16, #tpu.memory_space<vmem>>, vector<1x128x128xbf16>
    %101 = vector.shape_cast %100 : vector<1x128x128xbf16> to vector<128x128xbf16>
    %cst_83 = arith.constant dense<0.000000e+00> : vector<128x128xf32>
    %102 = tpu.matmul %99, %101, %cst_83 {dimension_numbers = #tpu.dot_dimension_numbers<[1], [0], [0], [1], [0, 0, 1, 1], [], []>} : vector<128x128xbf16>, vector<128x128xbf16>, vector<128x128xf32> -> vector<128x128xf32>
    %c4_84 = arith.constant 4 : index
    %c0_85 = arith.constant 0 : index
    %c0_86 = arith.constant 0 : index
    %103 = vector.load %arg4[%c4_84, %c0_85, %c0_86] : memref<5x1x128xf32, #tpu.memory_space<vmem>>, vector<1x1x128xf32>
    %104 = vector.shape_cast %103 : vector<1x1x128xf32> to vector<1x128xf32>
    %105 = vector.broadcast %104 : vector<1x128xf32> to vector<128x128xf32>
    %106 = arith.addf %102, %105 : vector<128x128xf32>
    %cst_87 = arith.constant 0.000000e+00 : f32
    %107 = vector.broadcast %cst_87 : f32 to vector<128x128xf32>
    %108 = arith.maximumf %106, %107 : vector<128x128xf32>
    %109 = arith.truncf %108 : vector<128x128xf32> to vector<128x128xbf16>
    %c4_88 = arith.constant 4 : index
    %c0_89 = arith.constant 0 : index
    %c0_90 = arith.constant 0 : index
    %110 = vector.load %arg5[%c4_88, %c0_89, %c0_90] : memref<5x128x128xbf16, #tpu.memory_space<vmem>>, vector<1x128x128xbf16>
    %111 = vector.shape_cast %110 : vector<1x128x128xbf16> to vector<128x128xbf16>
    %cst_91 = arith.constant dense<0.000000e+00> : vector<128x128xf32>
    %112 = tpu.matmul %109, %111, %cst_91 {dimension_numbers = #tpu.dot_dimension_numbers<[1], [0], [0], [1], [0, 0, 1, 1], [], []>} : vector<128x128xbf16>, vector<128x128xbf16>, vector<128x128xf32> -> vector<128x128xf32>
    %c4_92 = arith.constant 4 : index
    %c0_93 = arith.constant 0 : index
    %c0_94 = arith.constant 0 : index
    %113 = vector.load %arg6[%c4_92, %c0_93, %c0_94] : memref<5x1x128xf32, #tpu.memory_space<vmem>>, vector<1x1x128xf32>
    %114 = vector.shape_cast %113 : vector<1x1x128xf32> to vector<1x128xf32>
    %115 = vector.broadcast %114 : vector<1x128xf32> to vector<128x128xf32>
    %116 = arith.addf %112, %115 : vector<128x128xf32>
    %117 = arith.truncf %116 : vector<128x128xf32> to vector<128x128xbf16>
    %c0_95 = arith.constant 0 : index
    %c512 = arith.constant 512 : index
    %118 = vector.load %arg7[%c0_95, %c512] : memref<128x640xbf16, #tpu.memory_space<vmem>>, vector<128x128xbf16>
    tpu.vector_store %arg7[%c0_95, %c512], %117 {strides = array<i32>} : memref<128x640xbf16, #tpu.memory_space<vmem>>, vector<128x128xbf16>,
    return
  }
  func.func @transform_0(%arg0: i32) -> (i32, i32) {
    %c0_i32 = arith.constant 0 : i32
    %c0_i32_0 = arith.constant 0 : i32
    %c0_i32_1 = arith.constant 0 : i32
    return %c0_i32, %c0_i32_0 : i32, i32
  }
  func.func @transform_1(%arg0: i32) -> (i32, i32) {
    %c0_i32 = arith.constant 0 : i32
    %c0_i32_0 = arith.constant 0 : i32
    %c0_i32_1 = arith.constant 0 : i32
    return %c0_i32, %c0_i32_0 : i32, i32
  }
  func.func @transform_2(%arg0: i32) -> (i32, i32, i32) {
    %c0_i32 = arith.constant 0 : i32
    %c0_i32_0 = arith.constant 0 : i32
    %c0_i32_1 = arith.constant 0 : i32
    %c0_i32_2 = arith.constant 0 : i32
    return %c0_i32, %c0_i32_0, %c0_i32_1 : i32, i32, i32
  }
  func.func @transform_3(%arg0: i32) -> (i32, i32, i32) {
    %c0_i32 = arith.constant 0 : i32
    %c0_i32_0 = arith.constant 0 : i32
    %c0_i32_1 = arith.constant 0 : i32
    %c0_i32_2 = arith.constant 0 : i32
    return %c0_i32, %c0_i32_0, %c0_i32_1 : i32, i32, i32
  }
  func.func @transform_4(%arg0: i32) -> (i32, i32, i32) {
    %c0_i32 = arith.constant 0 : i32
    %c0_i32_0 = arith.constant 0 : i32
    %c0_i32_1 = arith.constant 0 : i32
    %c0_i32_2 = arith.constant 0 : i32
    return %c0_i32, %c0_i32_0, %c0_i32_1 : i32, i32, i32
  }
  func.func @transform_5(%arg0: i32) -> (i32, i32, i32) {
    %c0_i32 = arith.constant 0 : i32
    %c0_i32_0 = arith.constant 0 : i32
    %c0_i32_1 = arith.constant 0 : i32
    %c0_i32_2 = arith.constant 0 : i32
    return %c0_i32, %c0_i32_0, %c0_i32_1 : i32, i32, i32
  }
  func.func @transform_6(%arg0: i32) -> (i32, i32) {
    %c0_i32 = arith.constant 0 : i32
    %c0_i32_0 = arith.constant 0 : i32
    %c0_i32_1 = arith.constant 0 : i32
    return %c0_i32, %c0_i32_0 : i32, i32
  }
}

</mosaic_0001>

<llo_original>
// kernel: tpu_custom_call.1
$region0: #{tpu_custom_call.1}
  #allocation0 [shape = 'u32[]', space=smem, size = 0x4, offset = 0x4, fixed_abs, tag = 'smem constant byte address 0x4 - core index']
  #allocation1 [shape = 'u32[144,128]{1,0:T(1,128)}', space=vmem, size = 0x12000, scoped, tag = 'internal scratch']
  %s0 = inlined_call_operand.hbm [shape: bf16[128,128], index: 0, kind: input, shape index: {}]
  %s1 = inlined_call_operand.hbm [shape: bf16[128,128], index: 1, kind: input, shape index: {}]
  %s2 = inlined_call_operand.hbm [shape: bf16[5,128,128], index: 2, kind: input, shape index: {}]
  %s3 = inlined_call_operand.vmem [shape: f32[5,1,128], index: 3, kind: input, shape index: {}]
  %s4 = inlined_call_operand.hbm [shape: bf16[5,128,128], index: 4, kind: input, shape index: {}]
  %s5 = inlined_call_operand.vmem [shape: f32[5,1,128], index: 5, kind: input, shape index: {}]
  %s6 = inlined_call_operand.hbm [shape: bf16[128,640], index: 6, kind: output, shape index: {}]
  %s7 = sld [smem:[#allocation0]]
  $region50: #{tpu_custom_call.1} parent=0
    _
  %s9 = ssub.s32 1, %s7
  %s10 = scalar_select 0, %s9, %s7
  $region1: #{tpu_custom_call.1} parent=0
    #allocation2 [shape = 'u8[32768]{0}', space=vmem, size = 0x8000, scoped, tag = 'input window, operand 0, single buffered']
    #allocation3 [shape = 's32[1]{0}', space=sflag, size = 0x4, scoped, tag = 'scoped memory for tpu_custom_call.1']
    #allocation4 [shape = 's32[1]{0}', space=sflag, size = 0x4, scoped, tag = 'scoped memory for tpu_custom_call.1']
    #allocation5 [shape = 'u8[32768]{0}', space=vmem, size = 0x8000, scoped, tag = 'input window, operand 1, single buffered']
    #allocation6 [shape = 's32[1]{0}', space=sflag, size = 0x4, scoped, tag = 'scoped memory for tpu_custom_call.1']
    #allocation7 [shape = 'u8[163840]{0}', space=vmem, size = 0x28000, scoped, tag = 'input window, operand 2, single buffered']
    #allocation8 [shape = 'u8[163840]{0}', space=vmem, size = 0x28000, scoped, tag = 'input window, operand 4, single buffered']
    #allocation9 [shape = 's32[1]{0}', space=sflag, size = 0x4, scoped, tag = 'scoped memory for tpu_custom_call.1']
    #allocation10 [shape = 'u8[163840]{0}', space=vmem, size = 0x28000, scoped, tag = 'output window, operand 0, single buffered']
    %11 = vsyncpa [#allocation3], 0
    %12 = vsyncpa [#allocation6], 0
    %13 = vsyncpa [#allocation9], 0
    %14 = vsyncpa [#allocation4], 0
    // Predicated region
    $region2: #{tpu_custom_call.1} parent=1 // pred_check
      _
    $region3: #{tpu_custom_call.1} parent=1 // pred_check_branch
      %16 = sbr.rel (0) target = $region5
    $region4: #{tpu_custom_call.1} parent=1 // pred_region
      %s18 = ssub.s32 1024, 1024
      %19 = vsyncadd [#allocation3], %s18
      %s20 = sshll.u32 [#allocation2], 4
      %s21 = int_to_ptr.vmem [resolvable:$true] %s20
      %26 = dma.hbm_to_vmem [thread:$0]  %s0, 1024, %s21, [#allocation3], 64, 64, 4
    $region5: #{tpu_custom_call.1} parent=1 // pred_fallthru
      _
    // Predicated region
    $region6: #{tpu_custom_call.1} parent=1 // pred_check
      _
    $region7: #{tpu_custom_call.1} parent=1 // pred_check_branch
      %28 = sbr.rel (0) target = $region9
    $region8: #{tpu_custom_call.1} parent=1 // pred_region
      %s30 = ssub.s32 1024, 1024
      %31 = vsyncadd [#allocation6], %s30
      %s32 = sshll.u32 [#allocation5], 4
      %s33 = int_to_ptr.vmem [resolvable:$true] %s32
      %38 = dma.hbm_to_vmem [thread:$0]  %s1, 1024, %s33, [#allocation6], 64, 64, 4
    $region9: #{tpu_custom_call.1} parent=1 // pred_fallthru
      _
    // Predicated region
    $region10: #{tpu_custom_call.1} parent=1 // pred_check
      _
    $region11: #{tpu_custom_call.1} parent=1 // pred_check_branch
      %40 = sbr.rel (0) target = $region13
    $region12: #{tpu_custom_call.1} parent=1 // pred_region
      %s42 = ssub.s32 5120, 5120
      %43 = vsyncadd [#allocation6], %s42
      %s44 = sshll.u32 [#allocation7], 4
      %s45 = int_to_ptr.vmem [resolvable:$true] %s44
      %50 = dma.hbm_to_vmem [thread:$0]  %s2, 5120, %s45, [#allocation6], 64, 64, 4
    $region13: #{tpu_custom_call.1} parent=1 // pred_fallthru
      _
    // Predicated region
    $region14: #{tpu_custom_call.1} parent=1 // pred_check
      _
    $region15: #{tpu_custom_call.1} parent=1 // pred_check_branch
      %52 = sbr.rel (0) target = $region17
    $region16: #{tpu_custom_call.1} parent=1 // pred_region
      _
    $region17: #{tpu_custom_call.1} parent=1 // pred_fallthru
      _
    // Predicated region
    $region18: #{tpu_custom_call.1} parent=1 // pred_check
      _
    $region19: #{tpu_custom_call.1} parent=1 // pred_check_branch
      %54 = sbr.rel (0) target = $region21
    $region20: #{tpu_custom_call.1} parent=1 // pred_region
      %s56 = ssub.s32 5120, 5120
      %57 = vsyncadd [#allocation9], %s56
      %s58 = sshll.u32 [#allocation8], 4
      %s59 = int_to_ptr.vmem [resolvable:$true] %s58
      %64 = dma.hbm_to_vmem [thread:$0]  %s4, 5120, %s59, [#allocation9], 64, 64, 4
    $region21: #{tpu_custom_call.1} parent=1 // pred_fallthru
      _
    // Predicated region
    $region22: #{tpu_custom_call.1} parent=1 // pred_check
      _
    $region23: #{tpu_custom_call.1} parent=1 // pred_check_branch
      %66 = sbr.rel (0) target = $region25
    $region24: #{tpu_custom_call.1} parent=1 // pred_region
      _
    $region25: #{tpu_custom_call.1} parent=1 // pred_fallthru
      _
    // Predicated region
    $region26: #{tpu_custom_call.1} parent=1 // pred_check
      _
    $region27: #{tpu_custom_call.1} parent=1 // pred_check_branch
      %68 = sbr.rel (0) target = $region29
    $region28: #{tpu_custom_call.1} parent=1 // pred_region
      %69 = dma.done [#allocation3], 1024
    $region29: #{tpu_custom_call.1} parent=1 // pred_fallthru
      _
    // Predicated region
    $region30: #{tpu_custom_call.1} parent=1 // pred_check
      _
    $region31: #{tpu_custom_call.1} parent=1 // pred_check_branch
      %71 = sbr.rel (0) target = $region33
    $region32: #{tpu_custom_call.1} parent=1 // pred_region
      %72 = dma.done [#allocation6], 1024
    $region33: #{tpu_custom_call.1} parent=1 // pred_fallthru
      _
    // Predicated region
    $region34: #{tpu_custom_call.1} parent=1 // pred_check
      _
    $region35: #{tpu_custom_call.1} parent=1 // pred_check_branch
      %74 = sbr.rel (0) target = $region37
    $region36: #{tpu_custom_call.1} parent=1 // pred_region
      %75 = dma.done [#allocation6], 5120
    $region37: #{tpu_custom_call.1} parent=1 // pred_fallthru
      _
    // Predicated region
    $region38: #{tpu_custom_call.1} parent=1 // pred_check
      _
    $region39: #{tpu_custom_call.1} parent=1 // pred_check_branch
      %77 = sbr.rel (0) target = $region41
    $region40: #{tpu_custom_call.1} parent=1 // pred_region
      %78 = dma.done [#allocation9], 5120
    $region41: #{tpu_custom_call.1} parent=1 // pred_fallthru
      _
    %v80 = vld [vmem:[#allocation5] sm:$0xf]
    %v81 = vld [vmem:[#allocation5 + $0x4] sm:$0xf]
    %v82 = vld [vmem:[#allocation5 + $0x8] sm:$0xf]
    %v83 = vld [vmem:[#allocation5 + $0xc] sm:$0xf]
    %v84 = vld [vmem:[#allocation5 + $0x10] sm:$0xf]
    %v85 = vld [vmem:[#allocation5 + $0x14] sm:$0xf]
    %v86 = vld [vmem:[#allocation5 + $0x18] sm:$0xf]
    %v87 = vld [vmem:[#allocation5 + $0x1c] sm:$0xf]
    %v88 = vld [vmem:[#allocation5 + $0x20] sm:$0xf]
    %v89 = vld [vmem:[#allocation5 + $0x24] sm:$0xf]
    %v90 = vld [vmem:[#allocation5 + $0x28] sm:$0xf]
    %v91 = vld [vmem:[#allocation5 + $0x2c] sm:$0xf]
    %v92 = vld [vmem:[#allocation5 + $0x30] sm:$0xf]
    %v93 = vld [vmem:[#allocation5 + $0x34] sm:$0xf]
    %v94 = vld [vmem:[#allocation5 + $0x38] sm:$0xf]
    %v95 = vld [vmem:[#allocation5 + $0x3c] sm:$0xf]
    %v96 = vld [vmem:[#allocation2] sm:$0xf]
    %v97 = vld [vmem:[#allocation2 + $0x4] sm:$0xf]
    %v98 = vld [vmem:[#allocation2 + $0x8] sm:$0xf]
    %v99 = vld [vmem:[#allocation2 + $0xc] sm:$0xf]
    %v100 = vld [vmem:[#allocation2 + $0x10] sm:$0xf]
    %v101 = vld [vmem:[#allocation2 + $0x14] sm:$0xf]
    %v102 = vld [vmem:[#allocation2 + $0x18] sm:$0xf]
    %v103 = vld [vmem:[#allocation2 + $0x1c] sm:$0xf]
    %v104 = vld [vmem:[#allocation2 + $0x20] sm:$0xf]
    %v105 = vld [vmem:[#allocation2 + $0x24] sm:$0xf]
    %v106 = vld [vmem:[#allocation2 + $0x28] sm:$0xf]
    %v107 = vld [vmem:[#allocation2 + $0x2c] sm:$0xf]
    %v108 = vld [vmem:[#allocation2 + $0x30] sm:$0xf]
    %v109 = vld [vmem:[#allocation2 + $0x34] sm:$0xf]
    %v110 = vld [vmem:[#allocation2 + $0x38] sm:$0xf]
    %v111 = vld [vmem:[#allocation2 + $0x3c] sm:$0xf]
    %v128 = vunpack.c.l.b16 %v96
    %v129 = vunpack.c.l.b16 %v97
    %v130 = vunpack.c.l.b16 %v98
    %v131 = vunpack.c.l.b16 %v99
    %v132 = vunpack.c.l.b16 %v100
    %v133 = vunpack.c.l.b16 %v101
    %v134 = vunpack.c.l.b16 %v102
    %v135 = vunpack.c.l.b16 %v103
    %v136 = vunpack.c.l.b16 %v104
    %v137 = vunpack.c.l.b16 %v105
    %v138 = vunpack.c.l.b16 %v106
    %v139 = vunpack.c.l.b16 %v107
    %v140 = vunpack.c.l.b16 %v108
    %v141 = vunpack.c.l.b16 %v109
    %v142 = vunpack.c.l.b16 %v110
    %v143 = vunpack.c.l.b16 %v111
    %v144 = vpack.c.b16 %v129, %v128
    %v145 = vpack.c.b16 %v131, %v130
    %v146 = vpack.c.b16 %v133, %v132
    %v147 = vpack.c.b16 %v135, %v134
    %v148 = vpack.c.b16 %v137, %v136
    %v149 = vpack.c.b16 %v139, %v138
    %v150 = vpack.c.b16 %v141, %v140
    %v151 = vpack.c.b16 %v143, %v142
    %v176 = vunpack.c.l.b16 %v80
    %v177 = vunpack.c.l.b16 %v81
    %v178 = vunpack.c.l.b16 %v82
    %v179 = vunpack.c.l.b16 %v83
    %v180 = vunpack.c.l.b16 %v84
    %v181 = vunpack.c.l.b16 %v85
    %v182 = vunpack.c.l.b16 %v86
    %v183 = vunpack.c.l.b16 %v87
    %v184 = vunpack.c.l.b16 %v88
    %v185 = vunpack.c.l.b16 %v89
    %v186 = vunpack.c.l.b16 %v90
    %v187 = vunpack.c.l.b16 %v91
    %v188 = vunpack.c.l.b16 %v92
    %v189 = vunpack.c.l.b16 %v93
    %v190 = vunpack.c.l.b16 %v94
    %v191 = vunpack.c.l.b16 %v95
    %v192 = vpack.c.b16 %v177, %v176
    %v193 = vpack.c.b16 %v179, %v178
    %v194 = vpack.c.b16 %v181, %v180
    %v195 = vpack.c.b16 %v183, %v182
    %v196 = vpack.c.b16 %v185, %v184
    %v197 = vpack.c.b16 %v187, %v186
    %v198 = vpack.c.b16 %v189, %v188
    %v199 = vpack.c.b16 %v191, %v190
    %208 = vmatprep.subr.bf16.mxu0 0
    %209 = vmatpush1.bf16.msra.mxu0 %v192
    %210 = vmatprep.subr.bf16.mxu0 0
    %211 = vmatpush1.bf16.msra.mxu0 %v193
    %212 = vmatprep.subr.bf16.mxu0 0
    %213 = vmatpush1.bf16.msra.mxu0 %v194
    %214 = vmatprep.subr.bf16.mxu0 0
    %215 = vmatpush1.bf16.msra.mxu0 %v195
    %216 = vmatprep.subr.bf16.mxu0 0
    %217 = vmatpush1.bf16.msra.mxu0 %v196
    %218 = vmatprep.subr.bf16.mxu0 0
    %219 = vmatpush1.bf16.msra.mxu0 %v197
    %220 = vmatprep.subr.bf16.mxu0 0
    %221 = vmatpush1.bf16.msra.mxu0 %v198
    %222 = vmatprep.subr.bf16.mxu0 0
    %223 = vmatpush1.bf16.msra.mxu0 %v199
    %224 = vmatprep.subr.bf16.mxu0 0
    %225 = vmatpush1.bf16.msra.mxu0 0
    %226 = vmatprep.subr.bf16.mxu0 0
    %227 = vmatpush1.bf16.msra.mxu0 0
    %228 = vmatprep.subr.bf16.mxu0 0
    %229 = vmatpush1.bf16.msra.mxu0 0
    %230 = vmatprep.subr.bf16.mxu0 0
    %231 = vmatpush1.bf16.msra.mxu0 0
    %232 = vmatprep.subr.bf16.mxu0 0
    %233 = vmatpush1.bf16.msra.mxu0 0
    %234 = vmatprep.subr.bf16.mxu0 0
    %235 = vmatpush1.bf16.msra.mxu0 0
    %236 = vmatprep.subr.bf16.mxu0 0
    %237 = vmatpush1.bf16.msra.mxu0 0
    %238 = vmatprep.subr.bf16.mxu0 0
    %239 = vmatpush1.bf16.msra.mxu0 0
    %240 = vmatprep.mubr.bf16.mxu0 0
    %241 = vmatmul.mubr.bf16.gmra.mrb[0].mxu0 %v144
    %v242 = vpop.f32.mrb[0].mxu0
    %v243 = vadd.f32 0.0, %v242
    %v244 = vpop.f32.mrb[0].mxu0
    %v245 = vpop.f32.mrb[0].mxu0
    %v246 = vadd.f32 0.0, %v245
    %v247 = vpop.f32.mrb[0].mxu0
    %248 = vmatprep.mubr.bf16.mxu0 0
    %249 = vmatmul.mubr.bf16.gmra.mrb[0].mxu0 %v145
    %v250 = vpop.f32.mrb[0].mxu0
    %v251 = vadd.f32 0.0, %v250
    %v252 = vpop.f32.mrb[0].mxu0
    %v253 = vpop.f32.mrb[0].mxu0
    %v254 = vadd.f32 0.0, %v253
    %v255 = vpop.f32.mrb[0].mxu0
    %256 = vmatprep.mubr.bf16.mxu0 0
    %257 = vmatmul.mubr.bf16.gmra.mrb[0].mxu0 %v146
    %v258 = vpop.f32.mrb[0].mxu0
    %v259 = vadd.f32 0.0, %v258
    %v260 = vpop.f32.mrb[0].mxu0
    %v261 = vpop.f32.mrb[0].mxu0
    %v262 = vadd.f32 0.0, %v261
    %v263 = vpop.f32.mrb[0].mxu0
    %264 = vmatprep.mubr.bf16.mxu0 0
    %265 = vmatmul.mubr.bf16.gmra.mrb[0].mxu0 %v147
    %v266 = vpop.f32.mrb[0].mxu0
    %v267 = vadd.f32 0.0, %v266
    %v268 = vpop.f32.mrb[0].mxu0
    %v269 = vpop.f32.mrb[0].mxu0
    %v270 = vadd.f32 0.0, %v269
    %v271 = vpop.f32.mrb[0].mxu0
    %272 = vmatprep.mubr.bf16.mxu0 0
    %273 = vmatmul.mubr.bf16.gmra.mrb[0].mxu0 %v148
    %v274 = vpop.f32.mrb[0].mxu0
    %v275 = vadd.f32 0.0, %v274
    %v276 = vpop.f32.mrb[0].mxu0
    %v277 = vpop.f32.mrb[0].mxu0
    %v278 = vadd.f32 0.0, %v277
    %v279 = vpop.f32.mrb[0].mxu0
    %280 = vmatprep.mubr.bf16.mxu0 0
    %281 = vmatmul.mubr.bf16.gmra.mrb[0].mxu0 %v149
    %v282 = vpop.f32.mrb[0].mxu0
    %v283 = vadd.f32 0.0, %v282
    %v284 = vpop.f32.mrb[0].mxu0
    %v285 = vpop.f32.mrb[0].mxu0
    %v286 = vadd.f32 0.0, %v285
    %v287 = vpop.f32.mrb[0].mxu0
    %288 = vmatprep.mubr.bf16.mxu0 0
    %289 = vmatmul.mubr.bf16.gmra.mrb[0].mxu0 %v150
    %v290 = vpop.f32.mrb[0].mxu0
    %v291 = vadd.f32 0.0, %v290
    %v292 = vpop.f32.mrb[0].mxu0
    %v293 = vpop.f32.mrb[0].mxu0
    %v294 = vadd.f32 0.0, %v293
    %v295 = vpop.f32.mrb[0].mxu0
    %296 = vmatprep.mubr.bf16.mxu0 0
    %297 = vmatmul.mubr.bf16.gmra.mrb[0].mxu0 %v151
    %v298 = vpop.f32.mrb[0].mxu0
    %v299 = vadd.f32 0.0, %v298
    %v300 = vpop.f32.mrb[0].mxu0
    %v301 = vpop.f32.mrb[0].mxu0
    %v302 = vadd.f32 0.0, %v301
    %v303 = vpop.f32.mrb[0].mxu0
    %304 = vdwg.mxu0
    %v305 = vpack.c.bf16 %v246, %v243
    %v306 = vpack.c.bf16 %v254, %v251
    %v307 = vpack.c.bf16 %v262, %v259
    %v308 = vpack.c.bf16 %v270, %v267
    %v309 = vpack.c.bf16 %v278, %v275
    %v310 = vpack.c.bf16 %v286, %v283
    %v311 = vpack.c.bf16 %v294, %v291
    %v312 = vpack.c.bf16 %v302, %v299
    %v313 = vld [vmem:[#allocation7] sm:$0xf]
    %v314 = vld [vmem:[#allocation7 + $0x4] sm:$0xf]
    %v315 = vld [vmem:[#allocation7 + $0x8] sm:$0xf]
    %v316 = vld [vmem:[#allocation7 + $0xc] sm:$0xf]
    %v317 = vld [vmem:[#allocation7 + $0x10] sm:$0xf]
    %v318 = vld [vmem:[#allocation7 + $0x14] sm:$0xf]
    %v319 = vld [vmem:[#allocation7 + $0x18] sm:$0xf]
    %v320 = vld [vmem:[#allocation7 + $0x1c] sm:$0xf]
    %v321 = vld [vmem:[#allocation7 + $0x20] sm:$0xf]
    %v322 = vld [vmem:[#allocation7 + $0x24] sm:$0xf]
    %v323 = vld [vmem:[#allocation7 + $0x28] sm:$0xf]
    %v324 = vld [vmem:[#allocation7 + $0x2c] sm:$0xf]
    %v325 = vld [vmem:[#allocation7 + $0x30] sm:$0xf]
    %v326 = vld [vmem:[#allocation7 + $0x34] sm:$0xf]
    %v327 = vld [vmem:[#allocation7 + $0x38] sm:$0xf]
    %v328 = vld [vmem:[#allocation7 + $0x3c] sm:$0xf]
    %v329 = vld [vmem:[%s3] sm:$0x1]
    %v331 = vlaneseq
    %v332 = vshrl.u32 %v331, 7
    %v333 = vsub.s32 0, %v332
    %v334 = vrot.slane %v329, %v333
    %v352 = vunpack.c.l.b16 %v313
    %v353 = vunpack.c.l.b16 %v314
    %v354 = vunpack.c.l.b16 %v315
    %v355 = vunpack.c.l.b16 %v316
    %v356 = vunpack.c.l.b16 %v317
    %v357 = vunpack.c.l.b16 %v318
    %v358 = vunpack.c.l.b16 %v319
    %v359 = vunpack.c.l.b16 %v320
    %v360 = vunpack.c.l.b16 %v321
    %v361 = vunpack.c.l.b16 %v322
    %v362 = vunpack.c.l.b16 %v323
    %v363 = vunpack.c.l.b16 %v324
    %v364 = vunpack.c.l.b16 %v325
    %v365 = vunpack.c.l.b16 %v326
    %v366 = vunpack.c.l.b16 %v327
    %v367 = vunpack.c.l.b16 %v328
    %v368 = vpack.c.b16 %v353, %v352
    %v369 = vpack.c.b16 %v355, %v354
    %v370 = vpack.c.b16 %v357, %v356
    %v371 = vpack.c.b16 %v359, %v358
    %v372 = vpack.c.b16 %v361, %v360
    %v373 = vpack.c.b16 %v363, %v362
    %v374 = vpack.c.b16 %v365, %v364
    %v375 = vpack.c.b16 %v367, %v366
    %384 = vmatprep.subr.bf16.mxu0 0
    %385 = vmatpush1.bf16.msra.mxu0 %v368
    %386 = vmatprep.subr.bf16.mxu0 0
    %387 = vmatpush1.bf16.msra.mxu0 %v369
    %388 = vmatprep.subr.bf16.mxu0 0
    %389 = vmatpush1.bf16.msra.mxu0 %v370
    %390 = vmatprep.subr.bf16.mxu0 0
    %391 = vmatpush1.bf16.msra.mxu0 %v371
    %392 = vmatprep.subr.bf16.mxu0 0
    %393 = vmatpush1.bf16.msra.mxu0 %v372
    %394 = vmatprep.subr.bf16.mxu0 0
    %395 = vmatpush1.bf16.msra.mxu0 %v373
    %396 = vmatprep.subr.bf16.mxu0 0
    %397 = vmatpush1.bf16.msra.mxu0 %v374
    %398 = vmatprep.subr.bf16.mxu0 0
    %399 = vmatpush1.bf16.msra.mxu0 %v375
    %400 = vmatprep.subr.bf16.mxu0 0
    %401 = vmatpush1.bf16.msra.mxu0 0
    %402 = vmatprep.subr.bf16.mxu0 0
    %403 = vmatpush1.bf16.msra.mxu0 0
    %404 = vmatprep.subr.bf16.mxu0 0
    %405 = vmatpush1.bf16.msra.mxu0 0
    %406 = vmatprep.subr.bf16.mxu0 0
    %407 = vmatpush1.bf16.msra.mxu0 0
    %408 = vmatprep.subr.bf16.mxu0 0
    %409 = vmatpush1.bf16.msra.mxu0 0
    %410 = vmatprep.subr.bf16.mxu0 0
    %411 = vmatpush1.bf16.msra.mxu0 0
    %412 = vmatprep.subr.bf16.mxu0 0
    %413 = vmatpush1.bf16.msra.mxu0 0
    %414 = vmatprep.subr.bf16.mxu0 0
    %415 = vmatpush1.bf16.msra.mxu0 0
    %416 = vmatprep.mubr.bf16.mxu0 0
    %417 = vmatmul.mubr.bf16.gmra.mrb[0].mxu0 %v305
    %v418 = vpop.f32.mrb[0].mxu0
    %v419 = vadd.f32 %v334, %v418
    %v420 = vpop.f32.mrb[0].mxu0
    %v421 = vpop.f32.mrb[0].mxu0
    %v422 = vadd.f32 %v334, %v421
    %v423 = vpop.f32.mrb[0].mxu0
    %424 = vmatprep.mubr.bf16.mxu0 0
    %425 = vmatmul.mubr.bf16.gmra.mrb[0].mxu0 %v306
    %v426 = vpop.f32.mrb[0].mxu0
    %v427 = vadd.f32 %v334, %v426
    %v428 = vpop.f32.mrb[0].mxu0
    %v429 = vpop.f32.mrb[0].mxu0
    %v430 = vadd.f32 %v334, %v429
    %v431 = vpop.f32.mrb[0].mxu0
    %432 = vmatprep.mubr.bf16.mxu0 0
    %433 = vmatmul.mubr.bf16.gmra.mrb[0].mxu0 %v307
    %v434 = vpop.f32.mrb[0].mxu0
    %v435 = vadd.f32 %v334, %v434
    %v436 = vpop.f32.mrb[0].mxu0
    %v437 = vpop.f32.mrb[0].mxu0
    %v438 = vadd.f32 %v334, %v437
    %v439 = vpop.f32.mrb[0].mxu0
    %440 = vmatprep.mubr.bf16.mxu0 0
    %441 = vmatmul.mubr.bf16.gmra.mrb[0].mxu0 %v308
    %v442 = vpop.f32.mrb[0].mxu0
    %v443 = vadd.f32 %v334, %v442
    %v444 = vpop.f32.mrb[0].mxu0
    %v445 = vpop.f32.mrb[0].mxu0
    %v446 = vadd.f32 %v334, %v445
    %v447 = vpop.f32.mrb[0].mxu0
    %448 = vmatprep.mubr.bf16.mxu0 0
    %449 = vmatmul.mubr.bf16.gmra.mrb[0].mxu0 %v309
    %v450 = vpop.f32.mrb[0].mxu0
    %v451 = vadd.f32 %v334, %v450
    %v452 = vpop.f32.mrb[0].mxu0
    %v453 = vpop.f32.mrb[0].mxu0
    %v454 = vadd.f32 %v334, %v453
    %v455 = vpop.f32.mrb[0].mxu0
    %456 = vmatprep.mubr.bf16.mxu0 0
    %457 = vmatmul.mubr.bf16.gmra.mrb[0].mxu0 %v310
    %v458 = vpop.f32.mrb[0].mxu0
    %v459 = vadd.f32 %v334, %v458
    %v460 = vpop.f32.mrb[0].mxu0
    %v461 = vpop.f32.mrb[0].mxu0
    %v462 = vadd.f32 %v334, %v461
    %v463 = vpop.f32.mrb[0].mxu0
    %464 = vmatprep.mubr.bf16.mxu0 0
    %465 = vmatmul.mubr.bf16.gmra.mrb[0].mxu0 %v311
    %v466 = vpop.f32.mrb[0].mxu0
    %v467 = vadd.f32 %v334, %v466
    %v468 = vpop.f32.mrb[0].mxu0
    %v469 = vpop.f32.mrb[0].mxu0
    %v470 = vadd.f32 %v334, %v469
    %v471 = vpop.f32.mrb[0].mxu0
    %472 = vmatprep.mubr.bf16.mxu0 0
    %473 = vmatmul.mubr.bf16.gmra.mrb[0].mxu0 %v312
    %v474 = vpop.f32.mrb[0].mxu0
    %v475 = vadd.f32 %v334, %v474
    %v476 = vpop.f32.mrb[0].mxu0
    %v477 = vpop.f32.mrb[0].mxu0
    %v478 = vadd.f32 %v334, %v477
    %v479 = vpop.f32.mrb[0].mxu0
    %480 = vdwg.mxu0
    %v481 = vmax.f32 %v419, 0.0
    %v482 = vmax.f32 %v422, 0.0
    %v483 = vmax.f32 %v427, 0.0
    %v484 = vmax.f32 %v430, 0.0
    %v485 = vmax.f32 %v435, 0.0
    %v486 = vmax.f32 %v438, 0.0
    %v487 = vmax.f32 %v443, 0.0
    %v488 = vmax.f32 %v446, 0.0
    %v489 = vmax.f32 %v451, 0.0
    %v490 = vmax.f32 %v454, 0.0
    %v491 = vmax.f32 %v459, 0.0
    %v492 = vmax.f32 %v462, 0.0
    %v493 = vmax.f32 %v467, 0.0
    %v494 = vmax.f32 %v470, 0.0
    %v495 = vmax.f32 %v475, 0.0
    %v496 = vmax.f32 %v478, 0.0
    %v497 = vpack.c.bf16 %v482, %v481
    %v498 = vpack.c.bf16 %v484, %v483
    %v499 = vpack.c.bf16 %v486, %v485
    %v500 = vpack.c.bf16 %v488, %v487
    %v501 = vpack.c.bf16 %v490, %v489
    %v502 = vpack.c.bf16 %v492, %v491
    %v503 = vpack.c.bf16 %v494, %v493
    %v504 = vpack.c.bf16 %v496, %v495
    %v505 = vld [vmem:[#allocation8] sm:$0xf]
    %v506 = vld [vmem:[#allocation8 + $0x4] sm:$0xf]
    %v507 = vld [vmem:[#allocation8 + $0x8] sm:$0xf]
    %v508 = vld [vmem:[#allocation8 + $0xc] sm:$0xf]
    %v509 = vld [vmem:[#allocation8 + $0x10] sm:$0xf]
    %v510 = vld [vmem:[#allocation8 + $0x14] sm:$0xf]
    %v511 = vld [vmem:[#allocation8 + $0x18] sm:$0xf]
    %v512 = vld [vmem:[#allocation8 + $0x1c] sm:$0xf]
    %v513 = vld [vmem:[#allocation8 + $0x20] sm:$0xf]
    %v514 = vld [vmem:[#allocation8 + $0x24] sm:$0xf]
    %v515 = vld [vmem:[#allocation8 + $0x28] sm:$0xf]
    %v516 = vld [vmem:[#allocation8 + $0x2c] sm:$0xf]
    %v517 = vld [vmem:[#allocation8 + $0x30] sm:$0xf]
    %v518 = vld [vmem:[#allocation8 + $0x34] sm:$0xf]
    %v519 = vld [vmem:[#allocation8 + $0x38] sm:$0xf]
    %v520 = vld [vmem:[#allocation8 + $0x3c] sm:$0xf]
    %v521 = vld [vmem:[%s5] sm:$0x1]
    %v523 = vlaneseq
    %v524 = vshrl.u32 %v523, 7
    %v525 = vsub.s32 0, %v524
    %v526 = vrot.slane %v521, %v525
    %v544 = vunpack.c.l.b16 %v505
    %v545 = vunpack.c.l.b16 %v506
    %v546 = vunpack.c.l.b16 %v507
    %v547 = vunpack.c.l.b16 %v508
    %v548 = vunpack.c.l.b16 %v509
    %v549 = vunpack.c.l.b16 %v510
    %v550 = vunpack.c.l.b16 %v511
    %v551 = vunpack.c.l.b16 %v512
    %v552 = vunpack.c.l.b16 %v513
    %v553 = vunpack.c.l.b16 %v514
    %v554 = vunpack.c.l.b16 %v515
    %v555 = vunpack.c.l.b16 %v516
    %v556 = vunpack.c.l.b16 %v517
    %v557 = vunpack.c.l.b16 %v518
    %v558 = vunpack.c.l.b16 %v519
    %v559 = vunpack.c.l.b16 %v520
    %v560 = vpack.c.b16 %v545, %v544
    %v561 = vpack.c.b16 %v547, %v546
    %v562 = vpack.c.b16 %v549, %v548
    %v563 = vpack.c.b16 %v551, %v550
    %v564 = vpack.c.b16 %v553, %v552
    %v565 = vpack.c.b16 %v555, %v554
    %v566 = vpack.c.b16 %v557, %v556
    %v567 = vpack.c.b16 %v559, %v558
    %576 = vmatprep.subr.bf16.mxu0 0
    %577 = vmatpush1.bf16.msra.mxu0 %v560
    %578 = vmatprep.subr.bf16.mxu0 0
    %579 = vmatpush1.bf16.msra.mxu0 %v561
    %580 = vmatprep.subr.bf16.mxu0 0
    %581 = vmatpush1.bf16.msra.mxu0 %v562
    %582 = vmatprep.subr.bf16.mxu0 0
    %583 = vmatpush1.bf16.msra.mxu0 %v563
    %584 = vmatprep.subr.bf16.mxu0 0
    %585 = vmatpush1.bf16.msra.mxu0 %v564
    %586 = vmatprep.subr.bf16.mxu0 0
    %587 = vmatpush1.bf16.msra.mxu0 %v565
    %588 = vmatprep.subr.bf16.mxu0 0
    %589 = vmatpush1.bf16.msra.mxu0 %v566
    %590 = vmatprep.subr.bf16.mxu0 0
    %591 = vmatpush1.bf16.msra.mxu0 %v567
    %592 = vmatprep.subr.bf16.mxu0 0
    %593 = vmatpush1.bf16.msra.mxu0 0
    %594 = vmatprep.subr.bf16.mxu0 0
    %595 = vmatpush1.bf16.msra.mxu0 0
    %596 = vmatprep.subr.bf16.mxu0 0
    %597 = vmatpush1.bf16.msra.mxu0 0
    %598 = vmatprep.subr.bf16.mxu0 0
    %599 = vmatpush1.bf16.msra.mxu0 0
    %600 = vmatprep.subr.bf16.mxu0 0
    %601 = vmatpush1.bf16.msra.mxu0 0
    %602 = vmatprep.subr.bf16.mxu0 0
    %603 = vmatpush1.bf16.msra.mxu0 0
    %604 = vmatprep.subr.bf16.mxu0 0
    %605 = vmatpush1.bf16.msra.mxu0 0
    %606 = vmatprep.subr.bf16.mxu0 0
    %607 = vmatpush1.bf16.msra.mxu0 0
    %608 = vmatprep.mubr.bf16.mxu0 0
    %609 = vmatmul.mubr.bf16.gmra.mrb[0].mxu0 %v497
    %v610 = vpop.f32.mrb[0].mxu0
    %v611 = vadd.f32 %v526, %v610
    %v612 = vpop.f32.mrb[0].mxu0
    %v613 = vpop.f32.mrb[0].mxu0
    %v614 = vadd.f32 %v526, %v613
    %v615 = vpop.f32.mrb[0].mxu0
    %616 = vmatprep.mubr.bf16.mxu0 0
    %617 = vmatmul.mubr.bf16.gmra.mrb[0].mxu0 %v498
    %v618 = vpop.f32.mrb[0].mxu0
    %v619 = vadd.f32 %v526, %v618
    %v620 = vpop.f32.mrb[0].mxu0
    %v621 = vpop.f32.mrb[0].mxu0
    %v622 = vadd.f32 %v526, %v621
    %v623 = vpop.f32.mrb[0].mxu0
    %624 = vmatprep.mubr.bf16.mxu0 0
    %625 = vmatmul.mubr.bf16.gmra.mrb[0].mxu0 %v499
    %v626 = vpop.f32.mrb[0].mxu0
    %v627 = vadd.f32 %v526, %v626
    %v628 = vpop.f32.mrb[0].mxu0
    %v629 = vpop.f32.mrb[0].mxu0
    %v630 = vadd.f32 %v526, %v629
    %v631 = vpop.f32.mrb[0].mxu0
    %632 = vmatprep.mubr.bf16.mxu0 0
    %633 = vmatmul.mubr.bf16.gmra.mrb[0].mxu0 %v500
    %v634 = vpop.f32.mrb[0].mxu0
    %v635 = vadd.f32 %v526, %v634
    %v636 = vpop.f32.mrb[0].mxu0
    %v637 = vpop.f32.mrb[0].mxu0
    %v638 = vadd.f32 %v526, %v637
    %v639 = vpop.f32.mrb[0].mxu0
    %640 = vmatprep.mubr.bf16.mxu0 0
    %641 = vmatmul.mubr.bf16.gmra.mrb[0].mxu0 %v501
    %v642 = vpop.f32.mrb[0].mxu0
    %v643 = vadd.f32 %v526, %v642
    %v644 = vpop.f32.mrb[0].mxu0
    %v645 = vpop.f32.mrb[0].mxu0
    %v646 = vadd.f32 %v526, %v645
    %v647 = vpop.f32.mrb[0].mxu0
    %648 = vmatprep.mubr.bf16.mxu0 0
    %649 = vmatmul.mubr.bf16.gmra.mrb[0].mxu0 %v502
    %v650 = vpop.f32.mrb[0].mxu0
    %v651 = vadd.f32 %v526, %v650
    %v652 = vpop.f32.mrb[0].mxu0
    %v653 = vpop.f32.mrb[0].mxu0
    %v654 = vadd.f32 %v526, %v653
    %v655 = vpop.f32.mrb[0].mxu0
    %656 = vmatprep.mubr.bf16.mxu0 0
    %657 = vmatmul.mubr.bf16.gmra.mrb[0].mxu0 %v503
    %v658 = vpop.f32.mrb[0].mxu0
    %v659 = vadd.f32 %v526, %v658
    %v660 = vpop.f32.mrb[0].mxu0
    %v661 = vpop.f32.mrb[0].mxu0
    %v662 = vadd.f32 %v526, %v661
    %v663 = vpop.f32.mrb[0].mxu0
    %664 = vmatprep.mubr.bf16.mxu0 0
    %665 = vmatmul.mubr.bf16.gmra.mrb[0].mxu0 %v504
    %v666 = vpop.f32.mrb[0].mxu0
    %v667 = vadd.f32 %v526, %v666
    %v668 = vpop.f32.mrb[0].mxu0
    %v669 = vpop.f32.mrb[0].mxu0
    %v670 = vadd.f32 %v526, %v669
    %v671 = vpop.f32.mrb[0].mxu0
    %672 = vdwg.mxu0
    %v673 = vmax.f32 %v611, 0.0
    %v674 = vmax.f32 %v614, 0.0
    %v675 = vmax.f32 %v619, 0.0
    %v676 = vmax.f32 %v622, 0.0
    %v677 = vmax.f32 %v627, 0.0
    %v678 = vmax.f32 %v630, 0.0
    %v679 = vmax.f32 %v635, 0.0
    %v680 = vmax.f32 %v638, 0.0
    %v681 = vmax.f32 %v643, 0.0
    %v682 = vmax.f32 %v646, 0.0
    %v683 = vmax.f32 %v651, 0.0
    %v684 = vmax.f32 %v654, 0.0
    %v685 = vmax.f32 %v659, 0.0
    %v686 = vmax.f32 %v662, 0.0
    %v687 = vmax.f32 %v667, 0.0
    %v688 = vmax.f32 %v670, 0.0
    %v689 = vpack.c.bf16 %v674, %v673
    %v690 = vpack.c.bf16 %v676, %v675
    %v691 = vpack.c.bf16 %v678, %v677
    %v692 = vpack.c.bf16 %v680, %v679
    %v693 = vpack.c.bf16 %v682, %v681
    %v694 = vpack.c.bf16 %v684, %v683
    %v695 = vpack.c.bf16 %v686, %v685
    %v696 = vpack.c.bf16 %v688, %v687
    %v705 = vunpack.c.l.b16 %v689
    %v706 = vunpack.c.h.b16 %v689
    %v707 = vunpack.c.l.b16 %v690
    %v708 = vunpack.c.h.b16 %v690
    %v709 = vunpack.c.l.b16 %v691
    %v710 = vunpack.c.h.b16 %v691
    %v711 = vunpack.c.l.b16 %v692
    %v712 = vunpack.c.h.b16 %v692
    %v713 = vunpack.c.l.b16 %v693
    %v714 = vunpack.c.h.b16 %v693
    %v715 = vunpack.c.l.b16 %v694
    %v716 = vunpack.c.h.b16 %v694
    %v717 = vunpack.c.l.b16 %v695
    %v718 = vunpack.c.h.b16 %v695
    %v719 = vunpack.c.l.b16 %v696
    %v720 = vunpack.c.h.b16 %v696
    %v721 = vpack.c.b16 %v705, %v705
    %v722 = vpack.c.b16 %v706, %v706
    %v723 = vpack.c.b16 %v707, %v707
    %v724 = vpack.c.b16 %v708, %v708
    %v725 = vpack.c.b16 %v709, %v709
    %v726 = vpack.c.b16 %v710, %v710
    %v727 = vpack.c.b16 %v711, %v711
    %v728 = vpack.c.b16 %v712, %v712
    %v729 = vpack.c.b16 %v713, %v713
    %v730 = vpack.c.b16 %v714, %v714
    %v731 = vpack.c.b16 %v715, %v715
    %v732 = vpack.c.b16 %v716, %v716
    %v733 = vpack.c.b16 %v717, %v717
    %v734 = vpack.c.b16 %v718, %v718
    %v735 = vpack.c.b16 %v719, %v719
    %v736 = vpack.c.b16 %v720, %v720
    %753 = vst [vmem:[#allocation10] sm:$0xf] %v721
    %754 = vst [vmem:[#allocation10 + $0x14] sm:$0xf] %v722
    %755 = vst [vmem:[#allocation10 + $0x28] sm:$0xf] %v723
    %756 = vst [vmem:[#allocation10 + $0x3c] sm:$0xf] %v724
    %757 = vst [vmem:[#allocation10 + $0x50] sm:$0xf] %v725
    %758 = vst [vmem:[#allocation10 + $0x64] sm:$0xf] %v726
    %759 = vst [vmem:[#allocation10 + $0x78] sm:$0xf] %v727
    %760 = vst [vmem:[#allocation10 + $0x8c] sm:$0xf] %v728
    %761 = vst [vmem:[#allocation10 + $0xa0] sm:$0xf] %v729
    %762 = vst [vmem:[#allocation10 + $0xb4] sm:$0xf] %v730
    %763 = vst [vmem:[#allocation10 + $0xc8] sm:$0xf] %v731
    %764 = vst [vmem:[#allocation10 + $0xdc] sm:$0xf] %v732
    %765 = vst [vmem:[#allocation10 + $0xf0] sm:$0xf] %v733
    %766 = vst [vmem:[#allocation10 + $0x104] sm:$0xf] %v734
    %767 = vst [vmem:[#allocation10 + $0x118] sm:$0xf] %v735
    %768 = vst [vmem:[#allocation10 + $0x12c] sm:$0xf] %v736
    %v769 = vld [vmem:[#allocation2] sm:$0xf]
    %v770 = vld [vmem:[#allocation2 + $0x4] sm:$0xf]
    %v771 = vld [vmem:[#allocation2 + $0x8] sm:$0xf]
    %v772 = vld [vmem:[#allocation2 + $0xc] sm:$0xf]
    %v773 = vld [vmem:[#allocation2 + $0x10] sm:$0xf]
    %v774 = vld [vmem:[#allocation2 + $0x14] sm:$0xf]
    %v775 = vld [vmem:[#allocation2 + $0x18] sm:$0xf]
    %v776 = vld [vmem:[#allocation2 + $0x1c] sm:$0xf]
    %v777 = vld [vmem:[#allocation2 + $0x20] sm:$0xf]
    %v778 = vld [vmem:[#allocation2 + $0x24] sm:$0xf]
    %v779 = vld [vmem:[#allocation2 + $0x28] sm:$0xf]
    %v780 = vld [vmem:[#allocation2 + $0x2c] sm:$0xf]
    %v781 = vld [vmem:[#allocation2 + $0x30] sm:$0xf]
    %v782 = vld [vmem:[#allocation2 + $0x34] sm:$0xf]
    %v783 = vld [vmem:[#allocation2 + $0x38] sm:$0xf]
    %v784 = vld [vmem:[#allocation2 + $0x3c] sm:$0xf]
    %v801 = vunpack.c.l.b16 %v769
    %v802 = vunpack.c.l.b16 %v770
    %v803 = vunpack.c.l.b16 %v771
    %v804 = vunpack.c.l.b16 %v772
    %v805 = vunpack.c.l.b16 %v773
    %v806 = vunpack.c.l.b16 %v774
    %v807 = vunpack.c.l.b16 %v775
    %v808 = vunpack.c.l.b16 %v776
    %v809 = vunpack.c.l.b16 %v777
    %v810 = vunpack.c.l.b16 %v778
    %v811 = vunpack.c.l.b16 %v779
    %v812 = vunpack.c.l.b16 %v780
    %v813 = vunpack.c.l.b16 %v781
    %v814 = vunpack.c.l.b16 %v782
    %v815 = vunpack.c.l.b16 %v783
    %v816 = vunpack.c.l.b16 %v784
    %v817 = vpack.c.b16 %v802, %v801
    %v818 = vpack.c.b16 %v804, %v803
    %v819 = vpack.c.b16 %v806, %v805
    %v820 = vpack.c.b16 %v808, %v807
    %v821 = vpack.c.b16 %v810, %v809
    %v822 = vpack.c.b16 %v812, %v811
    %v823 = vpack.c.b16 %v814, %v813
    %v824 = vpack.c.b16 %v816, %v815
    %833 = vmatprep.subr.bf16.mxu0 0
    %834 = vmatpush1.bf16.msra.mxu0 %v689
    %835 = vmatprep.subr.bf16.mxu0 0
    %836 = vmatpush1.bf16.msra.mxu0 %v690
    %837 = vmatprep.subr.bf16.mxu0 0
    %838 = vmatpush1.bf16.msra.mxu0 %v691
    %839 = vmatprep.subr.bf16.mxu0 0
    %840 = vmatpush1.bf16.msra.mxu0 %v692
    %841 = vmatprep.subr.bf16.mxu0 0
    %842 = vmatpush1.bf16.msra.mxu0 %v693
    %843 = vmatprep.subr.bf16.mxu0 0
    %844 = vmatpush1.bf16.msra.mxu0 %v694
    %845 = vmatprep.subr.bf16.mxu0 0
    %846 = vmatpush1.bf16.msra.mxu0 %v695
    %847 = vmatprep.subr.bf16.mxu0 0
    %848 = vmatpush1.bf16.msra.mxu0 %v696
    %849 = vmatprep.subr.bf16.mxu0 0
    %850 = vmatpush1.bf16.msra.mxu0 0
    %851 = vmatprep.subr.bf16.mxu0 0
    %852 = vmatpush1.bf16.msra.mxu0 0
    %853 = vmatprep.subr.bf16.mxu0 0
    %854 = vmatpush1.bf16.msra.mxu0 0
    %855 = vmatprep.subr.bf16.mxu0 0
    %856 = vmatpush1.bf16.msra.mxu0 0
    %857 = vmatprep.subr.bf16.mxu0 0
    %858 = vmatpush1.bf16.msra.mxu0 0
    %859 = vmatprep.subr.bf16.mxu0 0
    %860 = vmatpush1.bf16.msra.mxu0 0
    %861 = vmatprep.subr.bf16.mxu0 0
    %862 = vmatpush1.bf16.msra.mxu0 0
    %863 = vmatprep.subr.bf16.mxu0 0
    %864 = vmatpush1.bf16.msra.mxu0 0
    %865 = vmatprep.mubr.bf16.mxu0 0
    %866 = vmatmul.mubr.bf16.gmra.mrb[0].mxu0 %v817
    %v867 = vpop.f32.mrb[0].mxu0
    %v868 = vadd.f32 0.0, %v867
    %v869 = vpop.f32.mrb[0].mxu0
    %v870 = vpop.f32.mrb[0].mxu0
    %v871 = vadd.f32 0.0, %v870
    %v872 = vpop.f32.mrb[0].mxu0
    %873 = vmatprep.mubr.bf16.mxu0 0
    %874 = vmatmul.mubr.bf16.gmra.mrb[0].mxu0 %v818
    %v875 = vpop.f32.mrb[0].mxu0
    %v876 = vadd.f32 0.0, %v875
    %v877 = vpop.f32.mrb[0].mxu0
    %v878 = vpop.f32.mrb[0].mxu0
    %v879 = vadd.f32 0.0, %v878
    %v880 = vpop.f32.mrb[0].mxu0
    %881 = vmatprep.mubr.bf16.mxu0 0
    %882 = vmatmul.mubr.bf16.gmra.mrb[0].mxu0 %v819
    %v883 = vpop.f32.mrb[0].mxu0
    %v884 = vadd.f32 0.0, %v883
    %v885 = vpop.f32.mrb[0].mxu0
    %v886 = vpop.f32.mrb[0].mxu0
    %v887 = vadd.f32 0.0, %v886
    %v888 = vpop.f32.mrb[0].mxu0
    %889 = vmatprep.mubr.bf16.mxu0 0
    %890 = vmatmul.mubr.bf16.gmra.mrb[0].mxu0 %v820
    %v891 = vpop.f32.mrb[0].mxu0
    %v892 = vadd.f32 0.0, %v891
    %v893 = vpop.f32.mrb[0].mxu0
    %v894 = vpop.f32.mrb[0].mxu0
    %v895 = vadd.f32 0.0, %v894
    %v896 = vpop.f32.mrb[0].mxu0
    %897 = vmatprep.mubr.bf16.mxu0 0
    %898 = vmatmul.mubr.bf16.gmra.mrb[0].mxu0 %v821
    %v899 = vpop.f32.mrb[0].mxu0
    %v900 = vadd.f32 0.0, %v899
    %v901 = vpop.f32.mrb[0].mxu0
    %v902 = vpop.f32.mrb[0].mxu0
    %v903 = vadd.f32 0.0, %v902
    %v904 = vpop.f32.mrb[0].mxu0
    %905 = vmatprep.mubr.bf16.mxu0 0
    %906 = vmatmul.mubr.bf16.gmra.mrb[0].mxu0 %v822
    %v907 = vpop.f32.mrb[0].mxu0
    %v908 = vadd.f32 0.0, %v907
    %v909 = vpop.f32.mrb[0].mxu0
    %v910 = vpop.f32.mrb[0].mxu0
    %v911 = vadd.f32 0.0, %v910
    %v912 = vpop.f32.mrb[0].mxu0
    %913 = vmatprep.mubr.bf16.mxu0 0
    %914 = vmatmul.mubr.bf16.gmra.mrb[0].mxu0 %v823
    %v915 = vpop.f32.mrb[0].mxu0
    %v916 = vadd.f32 0.0, %v915
    %v917 = vpop.f32.mrb[0].mxu0
    %v918 = vpop.f32.mrb[0].mxu0
    %v919 = vadd.f32 0.0, %v918
    %v920 = vpop.f32.mrb[0].mxu0
    %921 = vmatprep.mubr.bf16.mxu0 0
    %922 = vmatmul.mubr.bf16.gmra.mrb[0].mxu0 %v824
    %v923 = vpop.f32.mrb[0].mxu0
    %v924 = vadd.f32 0.0, %v923
    %v925 = vpop.f32.mrb[0].mxu0
    %v926 = vpop.f32.mrb[0].mxu0
    %v927 = vadd.f32 0.0, %v926
    %v928 = vpop.f32.mrb[0].mxu0
    %929 = vdwg.mxu0
    %v930 = vpack.c.bf16 %v871, %v868
    %v931 = vpack.c.bf16 %v879, %v876
    %v932 = vpack.c.bf16 %v887, %v884
    %v933 = vpack.c.bf16 %v895, %v892
    %v934 = vpack.c.bf16 %v903, %v900
    %v935 = vpack.c.bf16 %v911, %v908
    %v936 = vpack.c.bf16 %v919, %v916
    %v937 = vpack.c.bf16 %v927, %v924
    %s938 = scalar_lea.vmem [#allocation7], 64
    %v939 = vld [vmem:[%s938] sm:$0xf]
    %v940 = vld [vmem:[%s938 + $0x4] sm:$0xf]
    %v941 = vld [vmem:[%s938 + $0x8] sm:$0xf]
    %v942 = vld [vmem:[%s938 + $0xc] sm:$0xf]
    %v943 = vld [vmem:[%s938 + $0x10] sm:$0xf]
    %v944 = vld [vmem:[%s938 + $0x14] sm:$0xf]
    %v945 = vld [vmem:[%s938 + $0x18] sm:$0xf]
    %v946 = vld [vmem:[%s938 + $0x1c] sm:$0xf]
    %v947 = vld [vmem:[%s938 + $0x20] sm:$0xf]
    %v948 = vld [vmem:[%s938 + $0x24] sm:$0xf]
    %v949 = vld [vmem:[%s938 + $0x28] sm:$0xf]
    %v950 = vld [vmem:[%s938 + $0x2c] sm:$0xf]
    %v951 = vld [vmem:[%s938 + $0x30] sm:$0xf]
    %v952 = vld [vmem:[%s938 + $0x34] sm:$0xf]
    %v953 = vld [vmem:[%s938 + $0x38] sm:$0xf]
    %v954 = vld [vmem:[%s938 + $0x3c] sm:$0xf]
    %s955 = scalar_lea.vmem %s3, 1
    %v956 = vld [vmem:[%s955] sm:$0x1]
    %v958 = vlaneseq
    %v959 = vshrl.u32 %v958, 7
    %v960 = vsub.s32 0, %v959
    %v961 = vrot.slane %v956, %v960
    %v979 = vunpack.c.l.b16 %v939
    %v980 = vunpack.c.l.b16 %v940
    %v981 = vunpack.c.l.b16 %v941
    %v982 = vunpack.c.l.b16 %v942
    %v983 = vunpack.c.l.b16 %v943
    %v984 = vunpack.c.l.b16 %v944
    %v985 = vunpack.c.l.b16 %v945
    %v986 = vunpack.c.l.b16 %v946
    %v987 = vunpack.c.l.b16 %v947
    %v988 = vunpack.c.l.b16 %v948
    %v989 = vunpack.c.l.b16 %v949
    %v990 = vunpack.c.l.b16 %v950
    %v991 = vunpack.c.l.b16 %v951
    %v992 = vunpack.c.l.b16 %v952
    %v993 = vunpack.c.l.b16 %v953
    %v994 = vunpack.c.l.b16 %v954
    %v995 = vpack.c.b16 %v980, %v979
    %v996 = vpack.c.b16 %v982, %v981
    %v997 = vpack.c.b16 %v984, %v983
    %v998 = vpack.c.b16 %v986, %v985
    %v999 = vpack.c.b16 %v988, %v987
    %v1000 = vpack.c.b16 %v990, %v989
    %v1001 = vpack.c.b16 %v992, %v991
    %v1002 = vpack.c.b16 %v994, %v993
    %1011 = vmatprep.subr.bf16.mxu0 0
    %1012 = vmatpush1.bf16.msra.mxu0 %v995
    %1013 = vmatprep.subr.bf16.mxu0 0
    %1014 = vmatpush1.bf16.msra.mxu0 %v996
    %1015 = vmatprep.subr.bf16.mxu0 0
    %1016 = vmatpush1.bf16.msra.mxu0 %v997
    %1017 = vmatprep.subr.bf16.mxu0 0
    %1018 = vmatpush1.bf16.msra.mxu0 %v998
    %1019 = vmatprep.subr.bf16.mxu0 0
    %1020 = vmatpush1.bf16.msra.mxu0 %v999
    %1021 = vmatprep.subr.bf16.mxu0 0
    %1022 = vmatpush1.bf16.msra.mxu0 %v1000
    %1023 = vmatprep.subr.bf16.mxu0 0
    %1024 = vmatpush1.bf16.msra.mxu0 %v1001
    %1025 = vmatprep.subr.bf16.mxu0 0
    %1026 = vmatpush1.bf16.msra.mxu0 %v1002
    %1027 = vmatprep.subr.bf16.mxu0 0
    %1028 = vmatpush1.bf16.msra.mxu0 0
    %1029 = vmatprep.subr.bf16.mxu0 0
    %1030 = vmatpush1.bf16.msra.mxu0 0
    %1031 = vmatprep.subr.bf16.mxu0 0
    %1032 = vmatpush1.bf16.msra.mxu0 0
    %1033 = vmatprep.subr.bf16.mxu0 0
    %1034 = vmatpush1.bf16.msra.mxu0 0
    %1035 = vmatprep.subr.bf16.mxu0 0
    %1036 = vmatpush1.bf16.msra.mxu0 0
    %1037 = vmatprep.subr.bf16.mxu0 0
    %1038 = vmatpush1.bf16.msra.mxu0 0
    %1039 = vmatprep.subr.bf16.mxu0 0
    %1040 = vmatpush1.bf16.msra.mxu0 0
    %1041 = vmatprep.subr.bf16.mxu0 0
    %1042 = vmatpush1.bf16.msra.mxu0 0
    %1043 = vmatprep.mubr.bf16.mxu0 0
    %1044 = vmatmul.mubr.bf16.gmra.mrb[0].mxu0 %v930
    %v1045 = vpop.f32.mrb[0].mxu0
    %v1046 = vadd.f32 %v961, %v1045
    %v1047 = vpop.f32.mrb[0].mxu0
    %v1048 = vpop.f32.mrb[0].mxu0
    %v1049 = vadd.f32 %v961, %v1048
    %v1050 = vpop.f32.mrb[0].mxu0
    %1051 = vmatprep.mubr.bf16.mxu0 0
    %1052 = vmatmul.mubr.bf16.gmra.mrb[0].mxu0 %v931
    %v1053 = vpop.f32.mrb[0].mxu0
    %v1054 = vadd.f32 %v961, %v1053
    %v1055 = vpop.f32.mrb[0].mxu0
    %v1056 = vpop.f32.mrb[0].mxu0
    %v1057 = vadd.f32 %v961, %v1056
    %v1058 = vpop.f32.mrb[0].mxu0
    %1059 = vmatprep.mubr.bf16.mxu0 0
    %1060 = vmatmul.mubr.bf16.gmra.mrb[0].mxu0 %v932
    %v1061 = vpop.f32.mrb[0].mxu0
    %v1062 = vadd.f32 %v961, %v1061
    %v1063 = vpop.f32.mrb[0].mxu0
    %v1064 = vpop.f32.mrb[0].mxu0
    %v1065 = vadd.f32 %v961, %v1064
    %v1066 = vpop.f32.mrb[0].mxu0
    %1067 = vmatprep.mubr.bf16.mxu0 0
    %1068 = vmatmul.mubr.bf16.gmra.mrb[0].mxu0 %v933
    %v1069 = vpop.f32.mrb[0].mxu0
    %v1070 = vadd.f32 %v961, %v1069
    %v1071 = vpop.f32.mrb[0].mxu0
    %v1072 = vpop.f32.mrb[0].mxu0
    %v1073 = vadd.f32 %v961, %v1072
    %v1074 = vpop.f32.mrb[0].mxu0
    %1075 = vmatprep.mubr.bf16.mxu0 0
    %1076 = vmatmul.mubr.bf16.gmra.mrb[0].mxu0 %v934
    %v1077 = vpop.f32.mrb[0].mxu0
    %v1078 = vadd.f32 %v961, %v1077
    %v1079 = vpop.f32.mrb[0].mxu0
    %v1080 = vpop.f32.mrb[0].mxu0
    %v1081 = vadd.f32 %v961, %v1080
    %v1082 = vpop.f32.mrb[0].mxu0
    %1083 = vmatprep.mubr.bf16.mxu0 0
    %1084 = vmatmul.mubr.bf16.gmra.mrb[0].mxu0 %v935
    %v1085 = vpop.f32.mrb[0].mxu0
    %v1086 = vadd.f32 %v961, %v1085
    %v1087 = vpop.f32.mrb[0].mxu0
    %v1088 = vpop.f32.mrb[0].mxu0
    %v1089 = vadd.f32 %v961, %v1088
    %v1090 = vpop.f32.mrb[0].mxu0
    %1091 = vmatprep.mubr.bf16.mxu0 0
    %1092 = vmatmul.mubr.bf16.gmra.mrb[0].mxu0 %v936
    %v1093 = vpop.f32.mrb[0].mxu0
    %v1094 = vadd.f32 %v961, %v1093
    %v1095 = vpop.f32.mrb[0].mxu0
    %v1096 = vpop.f32.mrb[0].mxu0
    %v1097 = vadd.f32 %v961, %v1096
    %v1098 = vpop.f32.mrb[0].mxu0
    %1099 = vmatprep.mubr.bf16.mxu0 0
    %1100 = vmatmul.mubr.bf16.gmra.mrb[0].mxu0 %v937
    %v1101 = vpop.f32.mrb[0].mxu0
    %v1102 = vadd.f32 %v961, %v1101
    %v1103 = vpop.f32.mrb[0].mxu0
    %v1104 = vpop.f32.mrb[0].mxu0
    %v1105 = vadd.f32 %v961, %v1104
    %v1106 = vpop.f32.mrb[0].mxu0
    %1107 = vdwg.mxu0
    %v1108 = vmax.f32 %v1046, 0.0
    %v1109 = vmax.f32 %v1049, 0.0
    %v1110 = vmax.f32 %v1054, 0.0
    %v1111 = vmax.f32 %v1057, 0.0
    %v1112 = vmax.f32 %v1062, 0.0
    %v1113 = vmax.f32 %v1065, 0.0
    %v1114 = vmax.f32 %v1070, 0.0
    %v1115 = vmax.f32 %v1073, 0.0
    %v1116 = vmax.f32 %v1078, 0.0
    %v1117 = vmax.f32 %v1081, 0.0
    %v1118 = vmax.f32 %v1086, 0.0
    %v1119 = vmax.f32 %v1089, 0.0
    %v1120 = vmax.f32 %v1094, 0.0
    %v1121 = vmax.f32 %v1097, 0.0
    %v1122 = vmax.f32 %v1102, 0.0
    %v1123 = vmax.f32 %v1105, 0.0
    %v1124 = vpack.c.bf16 %v1109, %v1108
    %v1125 = vpack.c.bf16 %v1111, %v1110
    %v1126 = vpack.c.bf16 %v1113, %v1112
    %v1127 = vpack.c.bf16 %v1115, %v1114
    %v1128 = vpack.c.bf16 %v1117, %v1116
    %v1129 = vpack.c.bf16 %v1119, %v1118
    %v1130 = vpack.c.bf16 %v1121, %v1120
    %v1131 = vpack.c.bf16 %v1123, %v1122
    %s1132 = scalar_lea.vmem [#allocation8], 64
    %v1133 = vld [vmem:[%s1132] sm:$0xf]
    %v1134 = vld [vmem:[%s1132 + $0x4] sm:$0xf]
    %v1135 = vld [vmem:[%s1132 + $0x8] sm:$0xf]
    %v1136 = vld [vmem:[%s1132 + $0xc] sm:$0xf]
    %v1137 = vld [vmem:[%s1132 + $0x10] sm:$0xf]
    %v1138 = vld [vmem:[%s1132 + $0x14] sm:$0xf]
    %v1139 = vld [vmem:[%s1132 + $0x18] sm:$0xf]
    %v1140 = vld [vmem:[%s1132 + $0x1c] sm:$0xf]
    %v1141 = vld [vmem:[%s1132 + $0x20] sm:$0xf]
    %v1142 = vld [vmem:[%s1132 + $0x24] sm:$0xf]
    %v1143 = vld [vmem:[%s1132 + $0x28] sm:$0xf]
    %v1144 = vld [vmem:[%s1132 + $0x2c] sm:$0xf]
    %v1145 = vld [vmem:[%s1132 + $0x30] sm:$0xf]
    %v1146 = vld [vmem:[%s1132 + $0x34] sm:$0xf]
    %v1147 = vld [vmem:[%s1132 + $0x38] sm:$0xf]
    %v1148 = vld [vmem:[%s1132 + $0x3c] sm:$0xf]
    %s1149 = scalar_lea.vmem %s5, 1
    %v1150 = vld [vmem:[%s1149] sm:$0x1]
    %v1152 = vlaneseq
    %v1153 = vshrl.u32 %v1152, 7
    %v1154 = vsub.s32 0, %v1153
    %v1155 = vrot.slane %v1150, %v1154
    %v1173 = vunpack.c.l.b16 %v1133
    %v1174 = vunpack.c.l.b16 %v1134
    %v1175 = vunpack.c.l.b16 %v1135
    %v1176 = vunpack.c.l.b16 %v1136
    %v1177 = vunpack.c.l.b16 %v1137
    %v1178 = vunpack.c.l.b16 %v1138
    %v1179 = vunpack.c.l.b16 %v1139
    %v1180 = vunpack.c.l.b16 %v1140
    %v1181 = vunpack.c.l.b16 %v1141
    %v1182 = vunpack.c.l.b16 %v1142
    %v1183 = vunpack.c.l.b16 %v1143
    %v1184 = vunpack.c.l.b16 %v1144
    %v1185 = vunpack.c.l.b16 %v1145
    %v1186 = vunpack.c.l.b16 %v1146
    %v1187 = vunpack.c.l.b16 %v1147
    %v1188 = vunpack.c.l.b16 %v1148
    %v1189 = vpack.c.b16 %v1174, %v1173
    %v1190 = vpack.c.b16 %v1176, %v1175
    %v1191 = vpack.c.b16 %v1178, %v1177
    %v1192 = vpack.c.b16 %v1180, %v1179
    %v1193 = vpack.c.b16 %v1182, %v1181
    %v1194 = vpack.c.b16 %v1184, %v1183
    %v1195 = vpack.c.b16 %v1186, %v1185
    %v1196 = vpack.c.b16 %v1188, %v1187
    %1205 = vmatprep.subr.bf16.mxu0 0
    %1206 = vmatpush1.bf16.msra.mxu0 %v1189
    %1207 = vmatprep.subr.bf16.mxu0 0
    %1208 = vmatpush1.bf16.msra.mxu0 %v1190
    %1209 = vmatprep.subr.bf16.mxu0 0
    %1210 = vmatpush1.bf16.msra.mxu0 %v1191
    %1211 = vmatprep.subr.bf16.mxu0 0
    %1212 = vmatpush1.bf16.msra.mxu0 %v1192
    %1213 = vmatprep.subr.bf16.mxu0 0
    %1214 = vmatpush1.bf16.msra.mxu0 %v1193
    %1215 = vmatprep.subr.bf16.mxu0 0
    %1216 = vmatpush1.bf16.msra.mxu0 %v1194
    %1217 = vmatprep.subr.bf16.mxu0 0
    %1218 = vmatpush1.bf16.msra.mxu0 %v1195
    %1219 = vmatprep.subr.bf16.mxu0 0
    %1220 = vmatpush1.bf16.msra.mxu0 %v1196
    %1221 = vmatprep.subr.bf16.mxu0 0
    %1222 = vmatpush1.bf16.msra.mxu0 0
    %1223 = vmatprep.subr.bf16.mxu0 0
    %1224 = vmatpush1.bf16.msra.mxu0 0
    %1225 = vmatprep.subr.bf16.mxu0 0
    %1226 = vmatpush1.bf16.msra.mxu0 0
    %1227 = vmatprep.subr.bf16.mxu0 0
    %1228 = vmatpush1.bf16.msra.mxu0 0
    %1229 = vmatprep.subr.bf16.mxu0 0
    %1230 = vmatpush1.bf16.msra.mxu0 0
    %1231 = vmatprep.subr.bf16.mxu0 0
    %1232 = vmatpush1.bf16.msra.mxu0 0
    %1233 = vmatprep.subr.bf16.mxu0 0
    %1234 = vmatpush1.bf16.msra.mxu0 0
    %1235 = vmatprep.subr.bf16.mxu0 0
    %1236 = vmatpush1.bf16.msra.mxu0 0
    %1237 = vmatprep.mubr.bf16.mxu0 0
    %1238 = vmatmul.mubr.bf16.gmra.mrb[0].mxu0 %v1124
    %v1239 = vpop.f32.mrb[0].mxu0
    %v1240 = vadd.f32 %v1155, %v1239
    %v1241 = vpop.f32.mrb[0].mxu0
    %v1242 = vpop.f32.mrb[0].mxu0
    %v1243 = vadd.f32 %v1155, %v1242
    %v1244 = vpop.f32.mrb[0].mxu0
    %1245 = vmatprep.mubr.bf16.mxu0 0
    %1246 = vmatmul.mubr.bf16.gmra.mrb[0].mxu0 %v1125
    %v1247 = vpop.f32.mrb[0].mxu0
    %v1248 = vadd.f32 %v1155, %v1247
    %v1249 = vpop.f32.mrb[0].mxu0
    %v1250 = vpop.f32.mrb[0].mxu0
    %v1251 = vadd.f32 %v1155, %v1250
    %v1252 = vpop.f32.mrb[0].mxu0
    %1253 = vmatprep.mubr.bf16.mxu0 0
    %1254 = vmatmul.mubr.bf16.gmra.mrb[0].mxu0 %v1126
    %v1255 = vpop.f32.mrb[0].mxu0
    %v1256 = vadd.f32 %v1155, %v1255
    %v1257 = vpop.f32.mrb[0].mxu0
    %v1258 = vpop.f32.mrb[0].mxu0
    %v1259 = vadd.f32 %v1155, %v1258
    %v1260 = vpop.f32.mrb[0].mxu0
    %1261 = vmatprep.mubr.bf16.mxu0 0
    %1262 = vmatmul.mubr.bf16.gmra.mrb[0].mxu0 %v1127
    %v1263 = vpop.f32.mrb[0].mxu0
    %v1264 = vadd.f32 %v1155, %v1263
    %v1265 = vpop.f32.mrb[0].mxu0
    %v1266 = vpop.f32.mrb[0].mxu0
    %v1267 = vadd.f32 %v1155, %v1266
    %v1268 = vpop.f32.mrb[0].mxu0
    %1269 = vmatprep.mubr.bf16.mxu0 0
    %1270 = vmatmul.mubr.bf16.gmra.mrb[0].mxu0 %v1128
    %v1271 = vpop.f32.mrb[0].mxu0
    %v1272 = vadd.f32 %v1155, %v1271
    %v1273 = vpop.f32.mrb[0].mxu0
    %v1274 = vpop.f32.mrb[0].mxu0
    %v1275 = vadd.f32 %v1155, %v1274
    %v1276 = vpop.f32.mrb[0].mxu0
    %1277 = vmatprep.mubr.bf16.mxu0 0
    %1278 = vmatmul.mubr.bf16.gmra.mrb[0].mxu0 %v1129
    %v1279 = vpop.f32.mrb[0].mxu0
    %v1280 = vadd.f32 %v1155, %v1279
    %v1281 = vpop.f32.mrb[0].mxu0
    %v1282 = vpop.f32.mrb[0].mxu0
    %v1283 = vadd.f32 %v1155, %v1282
    %v1284 = vpop.f32.mrb[0].mxu0
    %1285 = vmatprep.mubr.bf16.mxu0 0
    %1286 = vmatmul.mubr.bf16.gmra.mrb[0].mxu0 %v1130
    %v1287 = vpop.f32.mrb[0].mxu0
    %v1288 = vadd.f32 %v1155, %v1287
    %v1289 = vpop.f32.mrb[0].mxu0
    %v1290 = vpop.f32.mrb[0].mxu0
    %v1291 = vadd.f32 %v1155, %v1290
    %v1292 = vpop.f32.mrb[0].mxu0
    %1293 = vmatprep.mubr.bf16.mxu0 0
    %1294 = vmatmul.mubr.bf16.gmra.mrb[0].mxu0 %v1131
    %v1295 = vpop.f32.mrb[0].mxu0
    %v1296 = vadd.f32 %v1155, %v1295
    %v1297 = vpop.f32.mrb[0].mxu0
    %v1298 = vpop.f32.mrb[0].mxu0
    %v1299 = vadd.f32 %v1155, %v1298
    %v1300 = vpop.f32.mrb[0].mxu0
    %1301 = vdwg.mxu0
    %v1302 = vmax.f32 %v1240, 0.0
    %v1303 = vmax.f32 %v1243, 0.0
    %v1304 = vmax.f32 %v1248, 0.0
    %v1305 = vmax.f32 %v1251, 0.0
    %v1306 = vmax.f32 %v1256, 0.0
    %v1307 = vmax.f32 %v1259, 0.0
    %v1308 = vmax.f32 %v1264, 0.0
    %v1309 = vmax.f32 %v1267, 0.0
    %v1310 = vmax.f32 %v1272, 0.0
    %v1311 = vmax.f32 %v1275, 0.0
    %v1312 = vmax.f32 %v1280, 0.0
    %v1313 = vmax.f32 %v1283, 0.0
    %v1314 = vmax.f32 %v1288, 0.0
    %v1315 = vmax.f32 %v1291, 0.0
    %v1316 = vmax.f32 %v1296, 0.0
    %v1317 = vmax.f32 %v1299, 0.0
    %v1318 = vpack.c.bf16 %v1303, %v1302
    %v1319 = vpack.c.bf16 %v1305, %v1304
    %v1320 = vpack.c.bf16 %v1307, %v1306
    %v1321 = vpack.c.bf16 %v1309, %v1308
    %v1322 = vpack.c.bf16 %v1311, %v1310
    %v1323 = vpack.c.bf16 %v1313, %v1312
    %v1324 = vpack.c.bf16 %v1315, %v1314
    %v1325 = vpack.c.bf16 %v1317, %v1316
    %v1334 = vunpack.c.l.b16 %v1318
    %v1335 = vunpack.c.h.b16 %v1318
    %v1336 = vunpack.c.l.b16 %v1319
    %v1337 = vunpack.c.h.b16 %v1319
    %v1338 = vunpack.c.l.b16 %v1320
    %v1339 = vunpack.c.h.b16 %v1320
    %v1340 = vunpack.c.l.b16 %v1321
    %v1341 = vunpack.c.h.b16 %v1321
    %v1342 = vunpack.c.l.b16 %v1322
    %v1343 = vunpack.c.h.b16 %v1322
    %v1344 = vunpack.c.l.b16 %v1323
    %v1345 = vunpack.c.h.b16 %v1323
    %v1346 = vunpack.c.l.b16 %v1324
    %v1347 = vunpack.c.h.b16 %v1324
    %v1348 = vunpack.c.l.b16 %v1325
    %v1349 = vunpack.c.h.b16 %v1325
    %v1350 = vpack.c.b16 %v1334, %v1334
    %v1351 = vpack.c.b16 %v1335, %v1335
    %v1352 = vpack.c.b16 %v1336, %v1336
    %v1353 = vpack.c.b16 %v1337, %v1337
    %v1354 = vpack.c.b16 %v1338, %v1338
    %v1355 = vpack.c.b16 %v1339, %v1339
    %v1356 = vpack.c.b16 %v1340, %v1340
    %v1357 = vpack.c.b16 %v1341, %v1341
    %v1358 = vpack.c.b16 %v1342, %v1342
    %v1359 = vpack.c.b16 %v1343, %v1343
    %v1360 = vpack.c.b16 %v1344, %v1344
    %v1361 = vpack.c.b16 %v1345, %v1345
    %v1362 = vpack.c.b16 %v1346, %v1346
    %v1363 = vpack.c.b16 %v1347, %v1347
    %v1364 = vpack.c.b16 %v1348, %v1348
    %v1365 = vpack.c.b16 %v1349, %v1349
    %1382 = vst [vmem:[#allocation10 + $0x4] sm:$0xf] %v1350
    %1383 = vst [vmem:[#allocation10 + $0x18] sm:$0xf] %v1351
    %1384 = vst [vmem:[#allocation10 + $0x2c] sm:$0xf] %v1352
    %1385 = vst [vmem:[#allocation10 + $0x40] sm:$0xf] %v1353
    %1386 = vst [vmem:[#allocation10 + $0x54] sm:$0xf] %v1354
    %1387 = vst [vmem:[#allocation10 + $0x68] sm:$0xf] %v1355
    %1388 = vst [vmem:[#allocation10 + $0x7c] sm:$0xf] %v1356
    %1389 = vst [vmem:[#allocation10 + $0x90] sm:$0xf] %v1357
    %1390 = vst [vmem:[#allocation10 + $0xa4] sm:$0xf] %v1358
    %1391 = vst [vmem:[#allocation10 + $0xb8] sm:$0xf] %v1359
    %1392 = vst [vmem:[#allocation10 + $0xcc] sm:$0xf] %v1360
    %1393 = vst [vmem:[#allocation10 + $0xe0] sm:$0xf] %v1361
    %1394 = vst [vmem:[#allocation10 + $0xf4] sm:$0xf] %v1362
    %1395 = vst [vmem:[#allocation10 + $0x108] sm:$0xf] %v1363
    %1396 = vst [vmem:[#allocation10 + $0x11c] sm:$0xf] %v1364
    %1397 = vst [vmem:[#allocation10 + $0x130] sm:$0xf] %v1365
    %v1398 = vld [vmem:[#allocation2] sm:$0xf]
    %v1399 = vld [vmem:[#allocation2 + $0x4] sm:$0xf]
    %v1400 = vld [vmem:[#allocation2 + $0x8] sm:$0xf]
    %v1401 = vld [vmem:[#allocation2 + $0xc] sm:$0xf]
    %v1402 = vld [vmem:[#allocation2 + $0x10] sm:$0xf]
    %v1403 = vld [vmem:[#allocation2 + $0x14] sm:$0xf]
    %v1404 = vld [vmem:[#allocation2 + $0x18] sm:$0xf]
    %v1405 = vld [vmem:[#allocation2 + $0x1c] sm:$0xf]
    %v1406 = vld [vmem:[#allocation2 + $0x20] sm:$0xf]
    %v1407 = vld [vmem:[#allocation2 + $0x24] sm:$0xf]
    %v1408 = vld [vmem:[#allocation2 + $0x28] sm:$0xf]
    %v1409 = vld [vmem:[#allocation2 + $0x2c] sm:$0xf]
    %v1410 = vld [vmem:[#allocation2 + $0x30] sm:$0xf]
    %v1411 = vld [vmem:[#allocation2 + $0x34] sm:$0xf]
    %v1412 = vld [vmem:[#allocation2 + $0x38] sm:$0xf]
    %v1413 = vld [vmem:[#allocation2 + $0x3c] sm:$0xf]
    %v1430 = vunpack.c.l.b16 %v1398
    %v1431 = vunpack.c.l.b16 %v1399
    %v1432 = vunpack.c.l.b16 %v1400
    %v1433 = vunpack.c.l.b16 %v1401
    %v1434 = vunpack.c.l.b16 %v1402
    %v1435 = vunpack.c.l.b16 %v1403
    %v1436 = vunpack.c.l.b16 %v1404
    %v1437 = vunpack.c.l.b16 %v1405
    %v1438 = vunpack.c.l.b16 %v1406
    %v1439 = vunpack.c.l.b16 %v1407
    %v1440 = vunpack.c.l.b16 %v1408
    %v1441 = vunpack.c.l.b16 %v1409
    %v1442 = vunpack.c.l.b16 %v1410
    %v1443 = vunpack.c.l.b16 %v1411
    %v1444 = vunpack.c.l.b16 %v1412
    %v1445 = vunpack.c.l.b16 %v1413
    %v1446 = vpack.c.b16 %v1431, %v1430
    %v1447 = vpack.c.b16 %v1433, %v1432
    %v1448 = vpack.c.b16 %v1435, %v1434
    %v1449 = vpack.c.b16 %v1437, %v1436
    %v1450 = vpack.c.b16 %v1439, %v1438
    %v1451 = vpack.c.b16 %v1441, %v1440
    %v1452 = vpack.c.b16 %v1443, %v1442
    %v1453 = vpack.c.b16 %v1445, %v1444
    %1462 = vmatprep.subr.bf16.mxu0 0
    %1463 = vmatpush1.bf16.msra.mxu0 %v1318
    %1464 = vmatprep.subr.bf16.mxu0 0
    %1465 = vmatpush1.bf16.msra.mxu0 %v1319
    %1466 = vmatprep.subr.bf16.mxu0 0
    %1467 = vmatpush1.bf16.msra.mxu0 %v1320
    %1468 = vmatprep.subr.bf16.mxu0 0
    %1469 = vmatpush1.bf16.msra.mxu0 %v1321
    %1470 = vmatprep.subr.bf16.mxu0 0
    %1471 = vmatpush1.bf16.msra.mxu0 %v1322
    %1472 = vmatprep.subr.bf16.mxu0 0
    %1473 = vmatpush1.bf16.msra.mxu0 %v1323
    %1474 = vmatprep.subr.bf16.mxu0 0
    %1475 = vmatpush1.bf16.msra.mxu0 %v1324
    %1476 = vmatprep.subr.bf16.mxu0 0
    %1477 = vmatpush1.bf16.msra.mxu0 %v1325
    %1478 = vmatprep.subr.bf16.mxu0 0
    %1479 = vmatpush1.bf16.msra.mxu0 0
    %1480 = vmatprep.subr.bf16.mxu0 0
    %1481 = vmatpush1.bf16.msra.mxu0 0
    %1482 = vmatprep.subr.bf16.mxu0 0
    %1483 = vmatpush1.bf16.msra.mxu0 0
    %1484 = vmatprep.subr.bf16.mxu0 0
    %1485 = vmatpush1.bf16.msra.mxu0 0
    %1486 = vmatprep.subr.bf16.mxu0 0
    %1487 = vmatpush1.bf16.msra.mxu0 0
    %1488 = vmatprep.subr.bf16.mxu0 0
    %1489 = vmatpush1.bf16.msra.mxu0 0
    %1490 = vmatprep.subr.bf16.mxu0 0
    %1491 = vmatpush1.bf16.msra.mxu0 0
    %1492 = vmatprep.subr.bf16.mxu0 0
    %1493 = vmatpush1.bf16.msra.mxu0 0
    %1494 = vmatprep.mubr.bf16.mxu0 0
    %1495 = vmatmul.mubr.bf16.gmra.mrb[0].mxu0 %v1446
    %v1496 = vpop.f32.mrb[0].mxu0
    %v1497 = vadd.f32 0.0, %v1496
    %v1498 = vpop.f32.mrb[0].mxu0
    %v1499 = vpop.f32.mrb[0].mxu0
    %v1500 = vadd.f32 0.0, %v1499
    %v1501 = vpop.f32.mrb[0].mxu0
    %1502 = vmatprep.mubr.bf16.mxu0 0
    %1503 = vmatmul.mubr.bf16.gmra.mrb[0].mxu0 %v1447
    %v1504 = vpop.f32.mrb[0].mxu0
    %v1505 = vadd.f32 0.0, %v1504
    %v1506 = vpop.f32.mrb[0].mxu0
    %v1507 = vpop.f32.mrb[0].mxu0
    %v1508 = vadd.f32 0.0, %v1507
    %v1509 = vpop.f32.mrb[0].mxu0
    %1510 = vmatprep.mubr.bf16.mxu0 0
    %1511 = vmatmul.mubr.bf16.gmra.mrb[0].mxu0 %v1448
    %v1512 = vpop.f32.mrb[0].mxu0
    %v1513 = vadd.f32 0.0, %v1512
    %v1514 = vpop.f32.mrb[0].mxu0
    %v1515 = vpop.f32.mrb[0].mxu0
    %v1516 = vadd.f32 0.0, %v1515
    %v1517 = vpop.f32.mrb[0].mxu0
    %1518 = vmatprep.mubr.bf16.mxu0 0
    %1519 = vmatmul.mubr.bf16.gmra.mrb[0].mxu0 %v1449
    %v1520 = vpop.f32.mrb[0].mxu0
    %v1521 = vadd.f32 0.0, %v1520
    %v1522 = vpop.f32.mrb[0].mxu0
    %v1523 = vpop.f32.mrb[0].mxu0
    %v1524 = vadd.f32 0.0, %v1523
    %v1525 = vpop.f32.mrb[0].mxu0
    %1526 = vmatprep.mubr.bf16.mxu0 0
    %1527 = vmatmul.mubr.bf16.gmra.mrb[0].mxu0 %v1450
    %v1528 = vpop.f32.mrb[0].mxu0
    %v1529 = vadd.f32 0.0, %v1528
    %v1530 = vpop.f32.mrb[0].mxu0
    %v1531 = vpop.f32.mrb[0].mxu0
    %v1532 = vadd.f32 0.0, %v1531
    %v1533 = vpop.f32.mrb[0].mxu0
    %1534 = vmatprep.mubr.bf16.mxu0 0
    %1535 = vmatmul.mubr.bf16.gmra.mrb[0].mxu0 %v1451
    %v1536 = vpop.f32.mrb[0].mxu0
    %v1537 = vadd.f32 0.0, %v1536
    %v1538 = vpop.f32.mrb[0].mxu0
    %v1539 = vpop.f32.mrb[0].mxu0
    %v1540 = vadd.f32 0.0, %v1539
    %v1541 = vpop.f32.mrb[0].mxu0
    %1542 = vmatprep.mubr.bf16.mxu0 0
    %1543 = vmatmul.mubr.bf16.gmra.mrb[0].mxu0 %v1452
    %v1544 = vpop.f32.mrb[0].mxu0
    %v1545 = vadd.f32 0.0, %v1544
    %v1546 = vpop.f32.mrb[0].mxu0
    %v1547 = vpop.f32.mrb[0].mxu0
    %v1548 = vadd.f32 0.0, %v1547
    %v1549 = vpop.f32.mrb[0].mxu0
    %1550 = vmatprep.mubr.bf16.mxu0 0
    %1551 = vmatmul.mubr.bf16.gmra.mrb[0].mxu0 %v1453
    %v1552 = vpop.f32.mrb[0].mxu0
    %v1553 = vadd.f32 0.0, %v1552
    %v1554 = vpop.f32.mrb[0].mxu0
    %v1555 = vpop.f32.mrb[0].mxu0
    %v1556 = vadd.f32 0.0, %v1555
    %v1557 = vpop.f32.mrb[0].mxu0
    %1558 = vdwg.mxu0
    %v1559 = vpack.c.bf16 %v1500, %v1497
    %v1560 = vpack.c.bf16 %v1508, %v1505
    %v1561 = vpack.c.bf16 %v1516, %v1513
    %v1562 = vpack.c.bf16 %v1524, %v1521
    %v1563 = vpack.c.bf16 %v1532, %v1529
    %v1564 = vpack.c.bf16 %v1540, %v1537
    %v1565 = vpack.c.bf16 %v1548, %v1545
    %v1566 = vpack.c.bf16 %v1556, %v1553
    %s1567 = scalar_lea.vmem [#allocation7], 128
    %v1568 = vld [vmem:[%s1567] sm:$0xf]
    %v1569 = vld [vmem:[%s1567 + $0x4] sm:$0xf]
    %v1570 = vld [vmem:[%s1567 + $0x8] sm:$0xf]
    %v1571 = vld [vmem:[%s1567 + $0xc] sm:$0xf]
    %v1572 = vld [vmem:[%s1567 + $0x10] sm:$0xf]
    %v1573 = vld [vmem:[%s1567 + $0x14] sm:$0xf]
    %v1574 = vld [vmem:[%s1567 + $0x18] sm:$0xf]
    %v1575 = vld [vmem:[%s1567 + $0x1c] sm:$0xf]
    %v1576 = vld [vmem:[%s1567 + $0x20] sm:$0xf]
    %v1577 = vld [vmem:[%s1567 + $0x24] sm:$0xf]
    %v1578 = vld [vmem:[%s1567 + $0x28] sm:$0xf]
    %v1579 = vld [vmem:[%s1567 + $0x2c] sm:$0xf]
    %v1580 = vld [vmem:[%s1567 + $0x30] sm:$0xf]
    %v1581 = vld [vmem:[%s1567 + $0x34] sm:$0xf]
    %v1582 = vld [vmem:[%s1567 + $0x38] sm:$0xf]
    %v1583 = vld [vmem:[%s1567 + $0x3c] sm:$0xf]
    %s1584 = scalar_lea.vmem %s3, 2
    %v1585 = vld [vmem:[%s1584] sm:$0x1]
    %v1587 = vlaneseq
    %v1588 = vshrl.u32 %v1587, 7
    %v1589 = vsub.s32 0, %v1588
    %v1590 = vrot.slane %v1585, %v1589
    %v1608 = vunpack.c.l.b16 %v1568
    %v1609 = vunpack.c.l.b16 %v1569
    %v1610 = vunpack.c.l.b16 %v1570
    %v1611 = vunpack.c.l.b16 %v1571
    %v1612 = vunpack.c.l.b16 %v1572
    %v1613 = vunpack.c.l.b16 %v1573
    %v1614 = vunpack.c.l.b16 %v1574
    %v1615 = vunpack.c.l.b16 %v1575
    %v1616 = vunpack.c.l.b16 %v1576
    %v1617 = vunpack.c.l.b16 %v1577
    %v1618 = vunpack.c.l.b16 %v1578
    %v1619 = vunpack.c.l.b16 %v1579
    %v1620 = vunpack.c.l.b16 %v1580
    %v1621 = vunpack.c.l.b16 %v1581
    %v1622 = vunpack.c.l.b16 %v1582
    %v1623 = vunpack.c.l.b16 %v1583
    %v1624 = vpack.c.b16 %v1609, %v1608
    %v1625 = vpack.c.b16 %v1611, %v1610
    %v1626 = vpack.c.b16 %v1613, %v1612
    %v1627 = vpack.c.b16 %v1615, %v1614
    %v1628 = vpack.c.b16 %v1617, %v1616
    %v1629 = vpack.c.b16 %v1619, %v1618
    %v1630 = vpack.c.b16 %v1621, %v1620
    %v1631 = vpack.c.b16 %v1623, %v1622
    %1640 = vmatprep.subr.bf16.mxu0 0
    %1641 = vmatpush1.bf16.msra.mxu0 %v1624
    %1642 = vmatprep.subr.bf16.mxu0 0
    %1643 = vmatpush1.bf16.msra.mxu0 %v1625
    %1644 = vmatprep.subr.bf16.mxu0 0
    %1645 = vmatpush1.bf16.msra.mxu0 %v1626
    %1646 = vmatprep.subr.bf16.mxu0 0
    %1647 = vmatpush1.bf16.msra.mxu0 %v1627
    %1648 = vmatprep.subr.bf16.mxu0 0
    %1649 = vmatpush1.bf16.msra.mxu0 %v1628
    %1650 = vmatprep.subr.bf16.mxu0 0
    %1651 = vmatpush1.bf16.msra.mxu0 %v1629
    %1652 = vmatprep.subr.bf16.mxu0 0
    %1653 = vmatpush1.bf16.msra.mxu0 %v1630
    %1654 = vmatprep.subr.bf16.mxu0 0
    %1655 = vmatpush1.bf16.msra.mxu0 %v1631
    %1656 = vmatprep.subr.bf16.mxu0 0
    %1657 = vmatpush1.bf16.msra.mxu0 0
    %1658 = vmatprep.subr.bf16.mxu0 0
    %1659 = vmatpush1.bf16.msra.mxu0 0
    %1660 = vmatprep.subr.bf16.mxu0 0
    %1661 = vmatpush1.bf16.msra.mxu0 0
    %1662 = vmatprep.subr.bf16.mxu0 0
    %1663 = vmatpush1.bf16.msra.mxu0 0
    %1664 = vmatprep.subr.bf16.mxu0 0
    %1665 = vmatpush1.bf16.msra.mxu0 0
    %1666 = vmatprep.subr.bf16.mxu0 0
    %1667 = vmatpush1.bf16.msra.mxu0 0
    %1668 = vmatprep.subr.bf16.mxu0 0
    %1669 = vmatpush1.bf16.msra.mxu0 0
    %1670 = vmatprep.subr.bf16.mxu0 0
    %1671 = vmatpush1.bf16.msra.mxu0 0
    %1672 = vmatprep.mubr.bf16.mxu0 0
    %1673 = vmatmul.mubr.bf16.gmra.mrb[0].mxu0 %v1559
    %v1674 = vpop.f32.mrb[0].mxu0
    %v1675 = vadd.f32 %v1590, %v1674
    %v1676 = vpop.f32.mrb[0].mxu0
    %v1677 = vpop.f32.mrb[0].mxu0
    %v1678 = vadd.f32 %v1590, %v1677
    %v1679 = vpop.f32.mrb[0].mxu0
    %1680 = vmatprep.mubr.bf16.mxu0 0
    %1681 = vmatmul.mubr.bf16.gmra.mrb[0].mxu0 %v1560
    %v1682 = vpop.f32.mrb[0].mxu0
    %v1683 = vadd.f32 %v1590, %v1682
    %v1684 = vpop.f32.mrb[0].mxu0
    %v1685 = vpop.f32.mrb[0].mxu0
    %v1686 = vadd.f32 %v1590, %v1685
    %v1687 = vpop.f32.mrb[0].mxu0
    %1688 = vmatprep.mubr.bf16.mxu0 0
    %1689 = vmatmul.mubr.bf16.gmra.mrb[0].mxu0 %v1561
    %v1690 = vpop.f32.mrb[0].mxu0
    %v1691 = vadd.f32 %v1590, %v1690
    %v1692 = vpop.f32.mrb[0].mxu0
    %v1693 = vpop.f32.mrb[0].mxu0
    %v1694 = vadd.f32 %v1590, %v1693
    %v1695 = vpop.f32.mrb[0].mxu0
    %1696 = vmatprep.mubr.bf16.mxu0 0
    %1697 = vmatmul.mubr.bf16.gmra.mrb[0].mxu0 %v1562
    %v1698 = vpop.f32.mrb[0].mxu0
    %v1699 = vadd.f32 %v1590, %v1698
    %v1700 = vpop.f32.mrb[0].mxu0
    %v1701 = vpop.f32.mrb[0].mxu0
    %v1702 = vadd.f32 %v1590, %v1701
    %v1703 = vpop.f32.mrb[0].mxu0
    %1704 = vmatprep.mubr.bf16.mxu0 0
    %1705 = vmatmul.mubr.bf16.gmra.mrb[0].mxu0 %v1563
    %v1706 = vpop.f32.mrb[0].mxu0
    %v1707 = vadd.f32 %v1590, %v1706
    %v1708 = vpop.f32.mrb[0].mxu0
    %v1709 = vpop.f32.mrb[0].mxu0
    %v1710 = vadd.f32 %v1590, %v1709
    %v1711 = vpop.f32.mrb[0].mxu0
    %1712 = vmatprep.mubr.bf16.mxu0 0
    %1713 = vmatmul.mubr.bf16.gmra.mrb[0].mxu0 %v1564
    %v1714 = vpop.f32.mrb[0].mxu0
    %v1715 = vadd.f32 %v1590, %v1714
    %v1716 = vpop.f32.mrb[0].mxu0
    %v1717 = vpop.f32.mrb[0].mxu0
    %v1718 = vadd.f32 %v1590, %v1717
    %v1719 = vpop.f32.mrb[0].mxu0
    %1720 = vmatprep.mubr.bf16.mxu0 0
    %1721 = vmatmul.mubr.bf16.gmra.mrb[0].mxu0 %v1565
    %v1722 = vpop.f32.mrb[0].mxu0
    %v1723 = vadd.f32 %v1590, %v1722
    %v1724 = vpop.f32.mrb[0].mxu0
    %v1725 = vpop.f32.mrb[0].mxu0
    %v1726 = vadd.f32 %v1590, %v1725
    %v1727 = vpop.f32.mrb[0].mxu0
    %1728 = vmatprep.mubr.bf16.mxu0 0
    %1729 = vmatmul.mubr.bf16.gmra.mrb[0].mxu0 %v1566
    %v1730 = vpop.f32.mrb[0].mxu0
    %v1731 = vadd.f32 %v1590, %v1730
    %v1732 = vpop.f32.mrb[0].mxu0
    %v1733 = vpop.f32.mrb[0].mxu0
    %v1734 = vadd.f32 %v1590, %v1733
    %v1735 = vpop.f32.mrb[0].mxu0
    %1736 = vdwg.mxu0
    %v1737 = vmax.f32 %v1675, 0.0
    %v1738 = vmax.f32 %v1678, 0.0
    %v1739 = vmax.f32 %v1683, 0.0
    %v1740 = vmax.f32 %v1686, 0.0
    %v1741 = vmax.f32 %v1691, 0.0
    %v1742 = vmax.f32 %v1694, 0.0
    %v1743 = vmax.f32 %v1699, 0.0
    %v1744 = vmax.f32 %v1702, 0.0
    %v1745 = vmax.f32 %v1707, 0.0
    %v1746 = vmax.f32 %v1710, 0.0
    %v1747 = vmax.f32 %v1715, 0.0
    %v1748 = vmax.f32 %v1718, 0.0
    %v1749 = vmax.f32 %v1723, 0.0
    %v1750 = vmax.f32 %v1726, 0.0
    %v1751 = vmax.f32 %v1731, 0.0
    %v1752 = vmax.f32 %v1734, 0.0
    %v1753 = vpack.c.bf16 %v1738, %v1737
    %v1754 = vpack.c.bf16 %v1740, %v1739
    %v1755 = vpack.c.bf16 %v1742, %v1741
    %v1756 = vpack.c.bf16 %v1744, %v1743
    %v1757 = vpack.c.bf16 %v1746, %v1745
    %v1758 = vpack.c.bf16 %v1748, %v1747
    %v1759 = vpack.c.bf16 %v1750, %v1749
    %v1760 = vpack.c.bf16 %v1752, %v1751
    %s1761 = scalar_lea.vmem [#allocation8], 128
    %v1762 = vld [vmem:[%s1761] sm:$0xf]
    %v1763 = vld [vmem:[%s1761 + $0x4] sm:$0xf]
    %v1764 = vld [vmem:[%s1761 + $0x8] sm:$0xf]
    %v1765 = vld [vmem:[%s1761 + $0xc] sm:$0xf]
    %v1766 = vld [vmem:[%s1761 + $0x10] sm:$0xf]
    %v1767 = vld [vmem:[%s1761 + $0x14] sm:$0xf]
    %v1768 = vld [vmem:[%s1761 + $0x18] sm:$0xf]
    %v1769 = vld [vmem:[%s1761 + $0x1c] sm:$0xf]
    %v1770 = vld [vmem:[%s1761 + $0x20] sm:$0xf]
    %v1771 = vld [vmem:[%s1761 + $0x24] sm:$0xf]
    %v1772 = vld [vmem:[%s1761 + $0x28] sm:$0xf]
    %v1773 = vld [vmem:[%s1761 + $0x2c] sm:$0xf]
    %v1774 = vld [vmem:[%s1761 + $0x30] sm:$0xf]
    %v1775 = vld [vmem:[%s1761 + $0x34] sm:$0xf]
    %v1776 = vld [vmem:[%s1761 + $0x38] sm:$0xf]
    %v1777 = vld [vmem:[%s1761 + $0x3c] sm:$0xf]
    %s1778 = scalar_lea.vmem %s5, 2
    %v1779 = vld [vmem:[%s1778] sm:$0x1]
    %v1781 = vlaneseq
    %v1782 = vshrl.u32 %v1781, 7
    %v1783 = vsub.s32 0, %v1782
    %v1784 = vrot.slane %v1779, %v1783
    %v1802 = vunpack.c.l.b16 %v1762
    %v1803 = vunpack.c.l.b16 %v1763
    %v1804 = vunpack.c.l.b16 %v1764
    %v1805 = vunpack.c.l.b16 %v1765
    %v1806 = vunpack.c.l.b16 %v1766
    %v1807 = vunpack.c.l.b16 %v1767
    %v1808 = vunpack.c.l.b16 %v1768
    %v1809 = vunpack.c.l.b16 %v1769
    %v1810 = vunpack.c.l.b16 %v1770
    %v1811 = vunpack.c.l.b16 %v1771
    %v1812 = vunpack.c.l.b16 %v1772
    %v1813 = vunpack.c.l.b16 %v1773
    %v1814 = vunpack.c.l.b16 %v1774
    %v1815 = vunpack.c.l.b16 %v1775
    %v1816 = vunpack.c.l.b16 %v1776
    %v1817 = vunpack.c.l.b16 %v1777
    %v1818 = vpack.c.b16 %v1803, %v1802
    %v1819 = vpack.c.b16 %v1805, %v1804
    %v1820 = vpack.c.b16 %v1807, %v1806
    %v1821 = vpack.c.b16 %v1809, %v1808
    %v1822 = vpack.c.b16 %v1811, %v1810
    %v1823 = vpack.c.b16 %v1813, %v1812
    %v1824 = vpack.c.b16 %v1815, %v1814
    %v1825 = vpack.c.b16 %v1817, %v1816
    %1834 = vmatprep.subr.bf16.mxu0 0
    %1835 = vmatpush1.bf16.msra.mxu0 %v1818
    %1836 = vmatprep.subr.bf16.mxu0 0
    %1837 = vmatpush1.bf16.msra.mxu0 %v1819
    %1838 = vmatprep.subr.bf16.mxu0 0
    %1839 = vmatpush1.bf16.msra.mxu0 %v1820
    %1840 = vmatprep.subr.bf16.mxu0 0
    %1841 = vmatpush1.bf16.msra.mxu0 %v1821
    %1842 = vmatprep.subr.bf16.mxu0 0
    %1843 = vmatpush1.bf16.msra.mxu0 %v1822
    %1844 = vmatprep.subr.bf16.mxu0 0
    %1845 = vmatpush1.bf16.msra.mxu0 %v1823
    %1846 = vmatprep.subr.bf16.mxu0 0
    %1847 = vmatpush1.bf16.msra.mxu0 %v1824
    %1848 = vmatprep.subr.bf16.mxu0 0
    %1849 = vmatpush1.bf16.msra.mxu0 %v1825
    %1850 = vmatprep.subr.bf16.mxu0 0
    %1851 = vmatpush1.bf16.msra.mxu0 0
    %1852 = vmatprep.subr.bf16.mxu0 0
    %1853 = vmatpush1.bf16.msra.mxu0 0
    %1854 = vmatprep.subr.bf16.mxu0 0
    %1855 = vmatpush1.bf16.msra.mxu0 0
    %1856 = vmatprep.subr.bf16.mxu0 0
    %1857 = vmatpush1.bf16.msra.mxu0 0
    %1858 = vmatprep.subr.bf16.mxu0 0
    %1859 = vmatpush1.bf16.msra.mxu0 0
    %1860 = vmatprep.subr.bf16.mxu0 0
    %1861 = vmatpush1.bf16.msra.mxu0 0
    %1862 = vmatprep.subr.bf16.mxu0 0
    %1863 = vmatpush1.bf16.msra.mxu0 0
    %1864 = vmatprep.subr.bf16.mxu0 0
    %1865 = vmatpush1.bf16.msra.mxu0 0
    %1866 = vmatprep.mubr.bf16.mxu0 0
    %1867 = vmatmul.mubr.bf16.gmra.mrb[0].mxu0 %v1753
    %v1868 = vpop.f32.mrb[0].mxu0
    %v1869 = vadd.f32 %v1784, %v1868
    %v1870 = vpop.f32.mrb[0].mxu0
    %v1871 = vpop.f32.mrb[0].mxu0
    %v1872 = vadd.f32 %v1784, %v1871
    %v1873 = vpop.f32.mrb[0].mxu0
    %1874 = vmatprep.mubr.bf16.mxu0 0
    %1875 = vmatmul.mubr.bf16.gmra.mrb[0].mxu0 %v1754
    %v1876 = vpop.f32.mrb[0].mxu0
    %v1877 = vadd.f32 %v1784, %v1876
    %v1878 = vpop.f32.mrb[0].mxu0
    %v1879 = vpop.f32.mrb[0].mxu0
    %v1880 = vadd.f32 %v1784, %v1879
    %v1881 = vpop.f32.mrb[0].mxu0
    %1882 = vmatprep.mubr.bf16.mxu0 0
    %1883 = vmatmul.mubr.bf16.gmra.mrb[0].mxu0 %v1755
    %v1884 = vpop.f32.mrb[0].mxu0
    %v1885 = vadd.f32 %v1784, %v1884
    %v1886 = vpop.f32.mrb[0].mxu0
    %v1887 = vpop.f32.mrb[0].mxu0
    %v1888 = vadd.f32 %v1784, %v1887
    %v1889 = vpop.f32.mrb[0].mxu0
    %1890 = vmatprep.mubr.bf16.mxu0 0
    %1891 = vmatmul.mubr.bf16.gmra.mrb[0].mxu0 %v1756
    %v1892 = vpop.f32.mrb[0].mxu0
    %v1893 = vadd.f32 %v1784, %v1892
    %v1894 = vpop.f32.mrb[0].mxu0
    %v1895 = vpop.f32.mrb[0].mxu0
    %v1896 = vadd.f32 %v1784, %v1895
    %v1897 = vpop.f32.mrb[0].mxu0
    %1898 = vmatprep.mubr.bf16.mxu0 0
    %1899 = vmatmul.mubr.bf16.gmra.mrb[0].mxu0 %v1757
    %v1900 = vpop.f32.mrb[0].mxu0
    %v1901 = vadd.f32 %v1784, %v1900
    %v1902 = vpop.f32.mrb[0].mxu0
    %v1903 = vpop.f32.mrb[0].mxu0
    %v1904 = vadd.f32 %v1784, %v1903
    %v1905 = vpop.f32.mrb[0].mxu0
    %1906 = vmatprep.mubr.bf16.mxu0 0
    %1907 = vmatmul.mubr.bf16.gmra.mrb[0].mxu0 %v1758
    %v1908 = vpop.f32.mrb[0].mxu0
    %v1909 = vadd.f32 %v1784, %v1908
    %v1910 = vpop.f32.mrb[0].mxu0
    %v1911 = vpop.f32.mrb[0].mxu0
    %v1912 = vadd.f32 %v1784, %v1911
    %v1913 = vpop.f32.mrb[0].mxu0
    %1914 = vmatprep.mubr.bf16.mxu0 0
    %1915 = vmatmul.mubr.bf16.gmra.mrb[0].mxu0 %v1759
    %v1916 = vpop.f32.mrb[0].mxu0
    %v1917 = vadd.f32 %v1784, %v1916
    %v1918 = vpop.f32.mrb[0].mxu0
    %v1919 = vpop.f32.mrb[0].mxu0
    %v1920 = vadd.f32 %v1784, %v1919
    %v1921 = vpop.f32.mrb[0].mxu0
    %1922 = vmatprep.mubr.bf16.mxu0 0
    %1923 = vmatmul.mubr.bf16.gmra.mrb[0].mxu0 %v1760
    %v1924 = vpop.f32.mrb[0].mxu0
    %v1925 = vadd.f32 %v1784, %v1924
    %v1926 = vpop.f32.mrb[0].mxu0
    %v1927 = vpop.f32.mrb[0].mxu0
    %v1928 = vadd.f32 %v1784, %v1927
    %v1929 = vpop.f32.mrb[0].mxu0
    %1930 = vdwg.mxu0
    %v1931 = vmax.f32 %v1869, 0.0
    %v1932 = vmax.f32 %v1872, 0.0
    %v1933 = vmax.f32 %v1877, 0.0
    %v1934 = vmax.f32 %v1880, 0.0
    %v1935 = vmax.f32 %v1885, 0.0
    %v1936 = vmax.f32 %v1888, 0.0
    %v1937 = vmax.f32 %v1893, 0.0
    %v1938 = vmax.f32 %v1896, 0.0
    %v1939 = vmax.f32 %v1901, 0.0
    %v1940 = vmax.f32 %v1904, 0.0
    %v1941 = vmax.f32 %v1909, 0.0
    %v1942 = vmax.f32 %v1912, 0.0
    %v1943 = vmax.f32 %v1917, 0.0
    %v1944 = vmax.f32 %v1920, 0.0
    %v1945 = vmax.f32 %v1925, 0.0
    %v1946 = vmax.f32 %v1928, 0.0
    %v1947 = vpack.c.bf16 %v1932, %v1931
    %v1948 = vpack.c.bf16 %v1934, %v1933
    %v1949 = vpack.c.bf16 %v1936, %v1935
    %v1950 = vpack.c.bf16 %v1938, %v1937
    %v1951 = vpack.c.bf16 %v1940, %v1939
    %v1952 = vpack.c.bf16 %v1942, %v1941
    %v1953 = vpack.c.bf16 %v1944, %v1943
    %v1954 = vpack.c.bf16 %v1946, %v1945
    %v1963 = vunpack.c.l.b16 %v1947
    %v1964 = vunpack.c.h.b16 %v1947
    %v1965 = vunpack.c.l.b16 %v1948
    %v1966 = vunpack.c.h.b16 %v1948
    %v1967 = vunpack.c.l.b16 %v1949
    %v1968 = vunpack.c.h.b16 %v1949
    %v1969 = vunpack.c.l.b16 %v1950
    %v1970 = vunpack.c.h.b16 %v1950
    %v1971 = vunpack.c.l.b16 %v1951
    %v1972 = vunpack.c.h.b16 %v1951
    %v1973 = vunpack.c.l.b16 %v1952
    %v1974 = vunpack.c.h.b16 %v1952
    %v1975 = vunpack.c.l.b16 %v1953
    %v1976 = vunpack.c.h.b16 %v1953
    %v1977 = vunpack.c.l.b16 %v1954
    %v1978 = vunpack.c.h.b16 %v1954
    %v1979 = vpack.c.b16 %v1963, %v1963
    %v1980 = vpack.c.b16 %v1964, %v1964
    %v1981 = vpack.c.b16 %v1965, %v1965
    %v1982 = vpack.c.b16 %v1966, %v1966
    %v1983 = vpack.c.b16 %v1967, %v1967
    %v1984 = vpack.c.b16 %v1968, %v1968
    %v1985 = vpack.c.b16 %v1969, %v1969
    %v1986 = vpack.c.b16 %v1970, %v1970
    %v1987 = vpack.c.b16 %v1971, %v1971
    %v1988 = vpack.c.b16 %v1972, %v1972
    %v1989 = vpack.c.b16 %v1973, %v1973
    %v1990 = vpack.c.b16 %v1974, %v1974
    %v1991 = vpack.c.b16 %v1975, %v1975
    %v1992 = vpack.c.b16 %v1976, %v1976
    %v1993 = vpack.c.b16 %v1977, %v1977
    %v1994 = vpack.c.b16 %v1978, %v1978
    %2011 = vst [vmem:[#allocation10 + $0x8] sm:$0xf] %v1979
    %2012 = vst [vmem:[#allocation10 + $0x1c] sm:$0xf] %v1980
    %2013 = vst [vmem:[#allocation10 + $0x30] sm:$0xf] %v1981
    %2014 = vst [vmem:[#allocation10 + $0x44] sm:$0xf] %v1982
    %2015 = vst [vmem:[#allocation10 + $0x58] sm:$0xf] %v1983
    %2016 = vst [vmem:[#allocation10 + $0x6c] sm:$0xf] %v1984
    %2017 = vst [vmem:[#allocation10 + $0x80] sm:$0xf] %v1985
    %2018 = vst [vmem:[#allocation10 + $0x94] sm:$0xf] %v1986
    %2019 = vst [vmem:[#allocation10 + $0xa8] sm:$0xf] %v1987
    %2020 = vst [vmem:[#allocation10 + $0xbc] sm:$0xf] %v1988
    %2021 = vst [vmem:[#allocation10 + $0xd0] sm:$0xf] %v1989
    %2022 = vst [vmem:[#allocation10 + $0xe4] sm:$0xf] %v1990
    %2023 = vst [vmem:[#allocation10 + $0xf8] sm:$0xf] %v1991
    %2024 = vst [vmem:[#allocation10 + $0x10c] sm:$0xf] %v1992
    %2025 = vst [vmem:[#allocation10 + $0x120] sm:$0xf] %v1993
    %2026 = vst [vmem:[#allocation10 + $0x134] sm:$0xf] %v1994
    %v2027 = vld [vmem:[#allocation2] sm:$0xf]
    %v2028 = vld [vmem:[#allocation2 + $0x4] sm:$0xf]
    %v2029 = vld [vmem:[#allocation2 + $0x8] sm:$0xf]
    %v2030 = vld [vmem:[#allocation2 + $0xc] sm:$0xf]
    %v2031 = vld [vmem:[#allocation2 + $0x10] sm:$0xf]
    %v2032 = vld [vmem:[#allocation2 + $0x14] sm:$0xf]
    %v2033 = vld [vmem:[#allocation2 + $0x18] sm:$0xf]
    %v2034 = vld [vmem:[#allocation2 + $0x1c] sm:$0xf]
    %v2035 = vld [vmem:[#allocation2 + $0x20] sm:$0xf]
    %v2036 = vld [vmem:[#allocation2 + $0x24] sm:$0xf]
    %v2037 = vld [vmem:[#allocation2 + $0x28] sm:$0xf]
    %v2038 = vld [vmem:[#allocation2 + $0x2c] sm:$0xf]
    %v2039 = vld [vmem:[#allocation2 + $0x30] sm:$0xf]
    %v2040 = vld [vmem:[#allocation2 + $0x34] sm:$0xf]
    %v2041 = vld [vmem:[#allocation2 + $0x38] sm:$0xf]
    %v2042 = vld [vmem:[#allocation2 + $0x3c] sm:$0xf]
    %v2059 = vunpack.c.l.b16 %v2027
    %v2060 = vunpack.c.l.b16 %v2028
    %v2061 = vunpack.c.l.b16 %v2029
    %v2062 = vunpack.c.l.b16 %v2030
    %v2063 = vunpack.c.l.b16 %v2031
    %v2064 = vunpack.c.l.b16 %v2032
    %v2065 = vunpack.c.l.b16 %v2033
    %v2066 = vunpack.c.l.b16 %v2034
    %v2067 = vunpack.c.l.b16 %v2035
    %v2068 = vunpack.c.l.b16 %v2036
    %v2069 = vunpack.c.l.b16 %v2037
    %v2070 = vunpack.c.l.b16 %v2038
    %v2071 = vunpack.c.l.b16 %v2039
    %v2072 = vunpack.c.l.b16 %v2040
    %v2073 = vunpack.c.l.b16 %v2041
    %v2074 = vunpack.c.l.b16 %v2042
    %v2075 = vpack.c.b16 %v2060, %v2059
    %v2076 = vpack.c.b16 %v2062, %v2061
    %v2077 = vpack.c.b16 %v2064, %v2063
    %v2078 = vpack.c.b16 %v2066, %v2065
    %v2079 = vpack.c.b16 %v2068, %v2067
    %v2080 = vpack.c.b16 %v2070, %v2069
    %v2081 = vpack.c.b16 %v2072, %v2071
    %v2082 = vpack.c.b16 %v2074, %v2073
    %2091 = vmatprep.subr.bf16.mxu0 0
    %2092 = vmatpush1.bf16.msra.mxu0 %v1947
    %2093 = vmatprep.subr.bf16.mxu0 0
    %2094 = vmatpush1.bf16.msra.mxu0 %v1948
    %2095 = vmatprep.subr.bf16.mxu0 0
    %2096 = vmatpush1.bf16.msra.mxu0 %v1949
    %2097 = vmatprep.subr.bf16.mxu0 0
    %2098 = vmatpush1.bf16.msra.mxu0 %v1950
    %2099 = vmatprep.subr.bf16.mxu0 0
    %2100 = vmatpush1.bf16.msra.mxu0 %v1951
    %2101 = vmatprep.subr.bf16.mxu0 0
    %2102 = vmatpush1.bf16.msra.mxu0 %v1952
    %2103 = vmatprep.subr.bf16.mxu0 0
    %2104 = vmatpush1.bf16.msra.mxu0 %v1953
    %2105 = vmatprep.subr.bf16.mxu0 0
    %2106 = vmatpush1.bf16.msra.mxu0 %v1954
    %2107 = vmatprep.subr.bf16.mxu0 0
    %2108 = vmatpush1.bf16.msra.mxu0 0
    %2109 = vmatprep.subr.bf16.mxu0 0
    %2110 = vmatpush1.bf16.msra.mxu0 0
    %2111 = vmatprep.subr.bf16.mxu0 0
    %2112 = vmatpush1.bf16.msra.mxu0 0
    %2113 = vmatprep.subr.bf16.mxu0 0
    %2114 = vmatpush1.bf16.msra.mxu0 0
    %2115 = vmatprep.subr.bf16.mxu0 0
    %2116 = vmatpush1.bf16.msra.mxu0 0
    %2117 = vmatprep.subr.bf16.mxu0 0
    %2118 = vmatpush1.bf16.msra.mxu0 0
    %2119 = vmatprep.subr.bf16.mxu0 0
    %2120 = vmatpush1.bf16.msra.mxu0 0
    %2121 = vmatprep.subr.bf16.mxu0 0
    %2122 = vmatpush1.bf16.msra.mxu0 0
    %2123 = vmatprep.mubr.bf16.mxu0 0
    %2124 = vmatmul.mubr.bf16.gmra.mrb[0].mxu0 %v2075
    %v2125 = vpop.f32.mrb[0].mxu0
    %v2126 = vadd.f32 0.0, %v2125
    %v2127 = vpop.f32.mrb[0].mxu0
    %v2128 = vpop.f32.mrb[0].mxu0
    %v2129 = vadd.f32 0.0, %v2128
    %v2130 = vpop.f32.mrb[0].mxu0
    %2131 = vmatprep.mubr.bf16.mxu0 0
    %2132 = vmatmul.mubr.bf16.gmra.mrb[0].mxu0 %v2076
    %v2133 = vpop.f32.mrb[0].mxu0
    %v2134 = vadd.f32 0.0, %v2133
    %v2135 = vpop.f32.mrb[0].mxu0
    %v2136 = vpop.f32.mrb[0].mxu0
    %v2137 = vadd.f32 0.0, %v2136
    %v2138 = vpop.f32.mrb[0].mxu0
    %2139 = vmatprep.mubr.bf16.mxu0 0
    %2140 = vmatmul.mubr.bf16.gmra.mrb[0].mxu0 %v2077
    %v2141 = vpop.f32.mrb[0].mxu0
    %v2142 = vadd.f32 0.0, %v2141
    %v2143 = vpop.f32.mrb[0].mxu0
    %v2144 = vpop.f32.mrb[0].mxu0
    %v2145 = vadd.f32 0.0, %v2144
    %v2146 = vpop.f32.mrb[0].mxu0
    %2147 = vmatprep.mubr.bf16.mxu0 0
    %2148 = vmatmul.mubr.bf16.gmra.mrb[0].mxu0 %v2078
    %v2149 = vpop.f32.mrb[0].mxu0
    %v2150 = vadd.f32 0.0, %v2149
    %v2151 = vpop.f32.mrb[0].mxu0
    %v2152 = vpop.f32.mrb[0].mxu0
    %v2153 = vadd.f32 0.0, %v2152
    %v2154 = vpop.f32.mrb[0].mxu0
    %2155 = vmatprep.mubr.bf16.mxu0 0
    %2156 = vmatmul.mubr.bf16.gmra.mrb[0].mxu0 %v2079
    %v2157 = vpop.f32.mrb[0].mxu0
    %v2158 = vadd.f32 0.0, %v2157
    %v2159 = vpop.f32.mrb[0].mxu0
    %v2160 = vpop.f32.mrb[0].mxu0
    %v2161 = vadd.f32 0.0, %v2160
    %v2162 = vpop.f32.mrb[0].mxu0
    %2163 = vmatprep.mubr.bf16.mxu0 0
    %2164 = vmatmul.mubr.bf16.gmra.mrb[0].mxu0 %v2080
    %v2165 = vpop.f32.mrb[0].mxu0
    %v2166 = vadd.f32 0.0, %v2165
    %v2167 = vpop.f32.mrb[0].mxu0
    %v2168 = vpop.f32.mrb[0].mxu0
    %v2169 = vadd.f32 0.0, %v2168
    %v2170 = vpop.f32.mrb[0].mxu0
    %2171 = vmatprep.mubr.bf16.mxu0 0
    %2172 = vmatmul.mubr.bf16.gmra.mrb[0].mxu0 %v2081
    %v2173 = vpop.f32.mrb[0].mxu0
    %v2174 = vadd.f32 0.0, %v2173
    %v2175 = vpop.f32.mrb[0].mxu0
    %v2176 = vpop.f32.mrb[0].mxu0
    %v2177 = vadd.f32 0.0, %v2176
    %v2178 = vpop.f32.mrb[0].mxu0
    %2179 = vmatprep.mubr.bf16.mxu0 0
    %2180 = vmatmul.mubr.bf16.gmra.mrb[0].mxu0 %v2082
    %v2181 = vpop.f32.mrb[0].mxu0
    %v2182 = vadd.f32 0.0, %v2181
    %v2183 = vpop.f32.mrb[0].mxu0
    %v2184 = vpop.f32.mrb[0].mxu0
    %v2185 = vadd.f32 0.0, %v2184
    %v2186 = vpop.f32.mrb[0].mxu0
    %2187 = vdwg.mxu0
    %v2188 = vpack.c.bf16 %v2129, %v2126
    %v2189 = vpack.c.bf16 %v2137, %v2134
    %v2190 = vpack.c.bf16 %v2145, %v2142
    %v2191 = vpack.c.bf16 %v2153, %v2150
    %v2192 = vpack.c.bf16 %v2161, %v2158
    %v2193 = vpack.c.bf16 %v2169, %v2166
    %v2194 = vpack.c.bf16 %v2177, %v2174
    %v2195 = vpack.c.bf16 %v2185, %v2182
    %s2196 = scalar_lea.vmem [#allocation7], 192
    %v2197 = vld [vmem:[%s2196] sm:$0xf]
    %v2198 = vld [vmem:[%s2196 + $0x4] sm:$0xf]
    %v2199 = vld [vmem:[%s2196 + $0x8] sm:$0xf]
    %v2200 = vld [vmem:[%s2196 + $0xc] sm:$0xf]
    %v2201 = vld [vmem:[%s2196 + $0x10] sm:$0xf]
    %v2202 = vld [vmem:[%s2196 + $0x14] sm:$0xf]
    %v2203 = vld [vmem:[%s2196 + $0x18] sm:$0xf]
    %v2204 = vld [vmem:[%s2196 + $0x1c] sm:$0xf]
    %v2205 = vld [vmem:[%s2196 + $0x20] sm:$0xf]
    %v2206 = vld [vmem:[%s2196 + $0x24] sm:$0xf]
    %v2207 = vld [vmem:[%s2196 + $0x28] sm:$0xf]
    %v2208 = vld [vmem:[%s2196 + $0x2c] sm:$0xf]
    %v2209 = vld [vmem:[%s2196 + $0x30] sm:$0xf]
    %v2210 = vld [vmem:[%s2196 + $0x34] sm:$0xf]
    %v2211 = vld [vmem:[%s2196 + $0x38] sm:$0xf]
    %v2212 = vld [vmem:[%s2196 + $0x3c] sm:$0xf]
    %s2213 = scalar_lea.vmem %s3, 3
    %v2214 = vld [vmem:[%s2213] sm:$0x1]
    %v2216 = vlaneseq
    %v2217 = vshrl.u32 %v2216, 7
    %v2218 = vsub.s32 0, %v2217
    %v2219 = vrot.slane %v2214, %v2218
    %v2237 = vunpack.c.l.b16 %v2197
    %v2238 = vunpack.c.l.b16 %v2198
    %v2239 = vunpack.c.l.b16 %v2199
    %v2240 = vunpack.c.l.b16 %v2200
    %v2241 = vunpack.c.l.b16 %v2201
    %v2242 = vunpack.c.l.b16 %v2202
    %v2243 = vunpack.c.l.b16 %v2203
    %v2244 = vunpack.c.l.b16 %v2204
    %v2245 = vunpack.c.l.b16 %v2205
    %v2246 = vunpack.c.l.b16 %v2206
    %v2247 = vunpack.c.l.b16 %v2207
    %v2248 = vunpack.c.l.b16 %v2208
    %v2249 = vunpack.c.l.b16 %v2209
    %v2250 = vunpack.c.l.b16 %v2210
    %v2251 = vunpack.c.l.b16 %v2211
    %v2252 = vunpack.c.l.b16 %v2212
    %v2253 = vpack.c.b16 %v2238, %v2237
    %v2254 = vpack.c.b16 %v2240, %v2239
    %v2255 = vpack.c.b16 %v2242, %v2241
    %v2256 = vpack.c.b16 %v2244, %v2243
    %v2257 = vpack.c.b16 %v2246, %v2245
    %v2258 = vpack.c.b16 %v2248, %v2247
    %v2259 = vpack.c.b16 %v2250, %v2249
    %v2260 = vpack.c.b16 %v2252, %v2251
    %2269 = vmatprep.subr.bf16.mxu0 0
    %2270 = vmatpush1.bf16.msra.mxu0 %v2253
    %2271 = vmatprep.subr.bf16.mxu0 0
    %2272 = vmatpush1.bf16.msra.mxu0 %v2254
    %2273 = vmatprep.subr.bf16.mxu0 0
    %2274 = vmatpush1.bf16.msra.mxu0 %v2255
    %2275 = vmatprep.subr.bf16.mxu0 0
    %2276 = vmatpush1.bf16.msra.mxu0 %v2256
    %2277 = vmatprep.subr.bf16.mxu0 0
    %2278 = vmatpush1.bf16.msra.mxu0 %v2257
    %2279 = vmatprep.subr.bf16.mxu0 0
    %2280 = vmatpush1.bf16.msra.mxu0 %v2258
    %2281 = vmatprep.subr.bf16.mxu0 0
    %2282 = vmatpush1.bf16.msra.mxu0 %v2259
    %2283 = vmatprep.subr.bf16.mxu0 0
    %2284 = vmatpush1.bf16.msra.mxu0 %v2260
    %2285 = vmatprep.subr.bf16.mxu0 0
    %2286 = vmatpush1.bf16.msra.mxu0 0
    %2287 = vmatprep.subr.bf16.mxu0 0
    %2288 = vmatpush1.bf16.msra.mxu0 0
    %2289 = vmatprep.subr.bf16.mxu0 0
    %2290 = vmatpush1.bf16.msra.mxu0 0
    %2291 = vmatprep.subr.bf16.mxu0 0
    %2292 = vmatpush1.bf16.msra.mxu0 0
    %2293 = vmatprep.subr.bf16.mxu0 0
    %2294 = vmatpush1.bf16.msra.mxu0 0
    %2295 = vmatprep.subr.bf16.mxu0 0
    %2296 = vmatpush1.bf16.msra.mxu0 0
    %2297 = vmatprep.subr.bf16.mxu0 0
    %2298 = vmatpush1.bf16.msra.mxu0 0
    %2299 = vmatprep.subr.bf16.mxu0 0
    %2300 = vmatpush1.bf16.msra.mxu0 0
    %2301 = vmatprep.mubr.bf16.mxu0 0
    %2302 = vmatmul.mubr.bf16.gmra.mrb[0].mxu0 %v2188
    %v2303 = vpop.f32.mrb[0].mxu0
    %v2304 = vadd.f32 %v2219, %v2303
    %v2305 = vpop.f32.mrb[0].mxu0
    %v2306 = vpop.f32.mrb[0].mxu0
    %v2307 = vadd.f32 %v2219, %v2306
    %v2308 = vpop.f32.mrb[0].mxu0
    %2309 = vmatprep.mubr.bf16.mxu0 0
    %2310 = vmatmul.mubr.bf16.gmra.mrb[0].mxu0 %v2189
    %v2311 = vpop.f32.mrb[0].mxu0
    %v2312 = vadd.f32 %v2219, %v2311
    %v2313 = vpop.f32.mrb[0].mxu0
    %v2314 = vpop.f32.mrb[0].mxu0
    %v2315 = vadd.f32 %v2219, %v2314
    %v2316 = vpop.f32.mrb[0].mxu0
    %2317 = vmatprep.mubr.bf16.mxu0 0
    %2318 = vmatmul.mubr.bf16.gmra.mrb[0].mxu0 %v2190
    %v2319 = vpop.f32.mrb[0].mxu0
    %v2320 = vadd.f32 %v2219, %v2319
    %v2321 = vpop.f32.mrb[0].mxu0
    %v2322 = vpop.f32.mrb[0].mxu0
    %v2323 = vadd.f32 %v2219, %v2322
    %v2324 = vpop.f32.mrb[0].mxu0
    %2325 = vmatprep.mubr.bf16.mxu0 0
    %2326 = vmatmul.mubr.bf16.gmra.mrb[0].mxu0 %v2191
    %v2327 = vpop.f32.mrb[0].mxu0
    %v2328 = vadd.f32 %v2219, %v2327
    %v2329 = vpop.f32.mrb[0].mxu0
    %v2330 = vpop.f32.mrb[0].mxu0
    %v2331 = vadd.f32 %v2219, %v2330
    %v2332 = vpop.f32.mrb[0].mxu0
    %2333 = vmatprep.mubr.bf16.mxu0 0
    %2334 = vmatmul.mubr.bf16.gmra.mrb[0].mxu0 %v2192
    %v2335 = vpop.f32.mrb[0].mxu0
    %v2336 = vadd.f32 %v2219, %v2335
    %v2337 = vpop.f32.mrb[0].mxu0
    %v2338 = vpop.f32.mrb[0].mxu0
    %v2339 = vadd.f32 %v2219, %v2338
    %v2340 = vpop.f32.mrb[0].mxu0
    %2341 = vmatprep.mubr.bf16.mxu0 0
    %2342 = vmatmul.mubr.bf16.gmra.mrb[0].mxu0 %v2193
    %v2343 = vpop.f32.mrb[0].mxu0
    %v2344 = vadd.f32 %v2219, %v2343
    %v2345 = vpop.f32.mrb[0].mxu0
    %v2346 = vpop.f32.mrb[0].mxu0
    %v2347 = vadd.f32 %v2219, %v2346
    %v2348 = vpop.f32.mrb[0].mxu0
    %2349 = vmatprep.mubr.bf16.mxu0 0
    %2350 = vmatmul.mubr.bf16.gmra.mrb[0].mxu0 %v2194
    %v2351 = vpop.f32.mrb[0].mxu0
    %v2352 = vadd.f32 %v2219, %v2351
    %v2353 = vpop.f32.mrb[0].mxu0
    %v2354 = vpop.f32.mrb[0].mxu0
    %v2355 = vadd.f32 %v2219, %v2354
    %v2356 = vpop.f32.mrb[0].mxu0
    %2357 = vmatprep.mubr.bf16.mxu0 0
    %2358 = vmatmul.mubr.bf16.gmra.mrb[0].mxu0 %v2195
    %v2359 = vpop.f32.mrb[0].mxu0
    %v2360 = vadd.f32 %v2219, %v2359
    %v2361 = vpop.f32.mrb[0].mxu0
    %v2362 = vpop.f32.mrb[0].mxu0
    %v2363 = vadd.f32 %v2219, %v2362
    %v2364 = vpop.f32.mrb[0].mxu0
    %2365 = vdwg.mxu0
    %v2366 = vmax.f32 %v2304, 0.0
    %v2367 = vmax.f32 %v2307, 0.0
    %v2368 = vmax.f32 %v2312, 0.0
    %v2369 = vmax.f32 %v2315, 0.0
    %v2370 = vmax.f32 %v2320, 0.0
    %v2371 = vmax.f32 %v2323, 0.0
    %v2372 = vmax.f32 %v2328, 0.0
    %v2373 = vmax.f32 %v2331, 0.0
    %v2374 = vmax.f32 %v2336, 0.0
    %v2375 = vmax.f32 %v2339, 0.0
    %v2376 = vmax.f32 %v2344, 0.0
    %v2377 = vmax.f32 %v2347, 0.0
    %v2378 = vmax.f32 %v2352, 0.0
    %v2379 = vmax.f32 %v2355, 0.0
    %v2380 = vmax.f32 %v2360, 0.0
    %v2381 = vmax.f32 %v2363, 0.0
    %v2382 = vpack.c.bf16 %v2367, %v2366
    %v2383 = vpack.c.bf16 %v2369, %v2368
    %v2384 = vpack.c.bf16 %v2371, %v2370
    %v2385 = vpack.c.bf16 %v2373, %v2372
    %v2386 = vpack.c.bf16 %v2375, %v2374
    %v2387 = vpack.c.bf16 %v2377, %v2376
    %v2388 = vpack.c.bf16 %v2379, %v2378
    %v2389 = vpack.c.bf16 %v2381, %v2380
    %s2390 = scalar_lea.vmem [#allocation8], 192
    %v2391 = vld [vmem:[%s2390] sm:$0xf]
    %v2392 = vld [vmem:[%s2390 + $0x4] sm:$0xf]
    %v2393 = vld [vmem:[%s2390 + $0x8] sm:$0xf]
    %v2394 = vld [vmem:[%s2390 + $0xc] sm:$0xf]
    %v2395 = vld [vmem:[%s2390 + $0x10] sm:$0xf]
    %v2396 = vld [vmem:[%s2390 + $0x14] sm:$0xf]
    %v2397 = vld [vmem:[%s2390 + $0x18] sm:$0xf]
    %v2398 = vld [vmem:[%s2390 + $0x1c] sm:$0xf]
    %v2399 = vld [vmem:[%s2390 + $0x20] sm:$0xf]
    %v2400 = vld [vmem:[%s2390 + $0x24] sm:$0xf]
    %v2401 = vld [vmem:[%s2390 + $0x28] sm:$0xf]
    %v2402 = vld [vmem:[%s2390 + $0x2c] sm:$0xf]
    %v2403 = vld [vmem:[%s2390 + $0x30] sm:$0xf]
    %v2404 = vld [vmem:[%s2390 + $0x34] sm:$0xf]
    %v2405 = vld [vmem:[%s2390 + $0x38] sm:$0xf]
    %v2406 = vld [vmem:[%s2390 + $0x3c] sm:$0xf]
    %s2407 = scalar_lea.vmem %s5, 3
    %v2408 = vld [vmem:[%s2407] sm:$0x1]
    %v2410 = vlaneseq
    %v2411 = vshrl.u32 %v2410, 7
    %v2412 = vsub.s32 0, %v2411
    %v2413 = vrot.slane %v2408, %v2412
    %v2431 = vunpack.c.l.b16 %v2391
    %v2432 = vunpack.c.l.b16 %v2392
    %v2433 = vunpack.c.l.b16 %v2393
    %v2434 = vunpack.c.l.b16 %v2394
    %v2435 = vunpack.c.l.b16 %v2395
    %v2436 = vunpack.c.l.b16 %v2396
    %v2437 = vunpack.c.l.b16 %v2397
    %v2438 = vunpack.c.l.b16 %v2398
    %v2439 = vunpack.c.l.b16 %v2399
    %v2440 = vunpack.c.l.b16 %v2400
    %v2441 = vunpack.c.l.b16 %v2401
    %v2442 = vunpack.c.l.b16 %v2402
    %v2443 = vunpack.c.l.b16 %v2403
    %v2444 = vunpack.c.l.b16 %v2404
    %v2445 = vunpack.c.l.b16 %v2405
    %v2446 = vunpack.c.l.b16 %v2406
    %v2447 = vpack.c.b16 %v2432, %v2431
    %v2448 = vpack.c.b16 %v2434, %v2433
    %v2449 = vpack.c.b16 %v2436, %v2435
    %v2450 = vpack.c.b16 %v2438, %v2437
    %v2451 = vpack.c.b16 %v2440, %v2439
    %v2452 = vpack.c.b16 %v2442, %v2441
    %v2453 = vpack.c.b16 %v2444, %v2443
    %v2454 = vpack.c.b16 %v2446, %v2445
    %2463 = vmatprep.subr.bf16.mxu0 0
    %2464 = vmatpush1.bf16.msra.mxu0 %v2447
    %2465 = vmatprep.subr.bf16.mxu0 0
    %2466 = vmatpush1.bf16.msra.mxu0 %v2448
    %2467 = vmatprep.subr.bf16.mxu0 0
    %2468 = vmatpush1.bf16.msra.mxu0 %v2449
    %2469 = vmatprep.subr.bf16.mxu0 0
    %2470 = vmatpush1.bf16.msra.mxu0 %v2450
    %2471 = vmatprep.subr.bf16.mxu0 0
    %2472 = vmatpush1.bf16.msra.mxu0 %v2451
    %2473 = vmatprep.subr.bf16.mxu0 0
    %2474 = vmatpush1.bf16.msra.mxu0 %v2452
    %2475 = vmatprep.subr.bf16.mxu0 0
    %2476 = vmatpush1.bf16.msra.mxu0 %v2453
    %2477 = vmatprep.subr.bf16.mxu0 0
    %2478 = vmatpush1.bf16.msra.mxu0 %v2454
    %2479 = vmatprep.subr.bf16.mxu0 0
    %2480 = vmatpush1.bf16.msra.mxu0 0
    %2481 = vmatprep.subr.bf16.mxu0 0
    %2482 = vmatpush1.bf16.msra.mxu0 0
    %2483 = vmatprep.subr.bf16.mxu0 0
    %2484 = vmatpush1.bf16.msra.mxu0 0
    %2485 = vmatprep.subr.bf16.mxu0 0
    %2486 = vmatpush1.bf16.msra.mxu0 0
    %2487 = vmatprep.subr.bf16.mxu0 0
    %2488 = vmatpush1.bf16.msra.mxu0 0
    %2489 = vmatprep.subr.bf16.mxu0 0
    %2490 = vmatpush1.bf16.msra.mxu0 0
    %2491 = vmatprep.subr.bf16.mxu0 0
    %2492 = vmatpush1.bf16.msra.mxu0 0
    %2493 = vmatprep.subr.bf16.mxu0 0
    %2494 = vmatpush1.bf16.msra.mxu0 0
    %2495 = vmatprep.mubr.bf16.mxu0 0
    %2496 = vmatmul.mubr.bf16.gmra.mrb[0].mxu0 %v2382
    %v2497 = vpop.f32.mrb[0].mxu0
    %v2498 = vadd.f32 %v2413, %v2497
    %v2499 = vpop.f32.mrb[0].mxu0
    %v2500 = vpop.f32.mrb[0].mxu0
    %v2501 = vadd.f32 %v2413, %v2500
    %v2502 = vpop.f32.mrb[0].mxu0
    %2503 = vmatprep.mubr.bf16.mxu0 0
    %2504 = vmatmul.mubr.bf16.gmra.mrb[0].mxu0 %v2383
    %v2505 = vpop.f32.mrb[0].mxu0
    %v2506 = vadd.f32 %v2413, %v2505
    %v2507 = vpop.f32.mrb[0].mxu0
    %v2508 = vpop.f32.mrb[0].mxu0
    %v2509 = vadd.f32 %v2413, %v2508
    %v2510 = vpop.f32.mrb[0].mxu0
    %2511 = vmatprep.mubr.bf16.mxu0 0
    %2512 = vmatmul.mubr.bf16.gmra.mrb[0].mxu0 %v2384
    %v2513 = vpop.f32.mrb[0].mxu0
    %v2514 = vadd.f32 %v2413, %v2513
    %v2515 = vpop.f32.mrb[0].mxu0
    %v2516 = vpop.f32.mrb[0].mxu0
    %v2517 = vadd.f32 %v2413, %v2516
    %v2518 = vpop.f32.mrb[0].mxu0
    %2519 = vmatprep.mubr.bf16.mxu0 0
    %2520 = vmatmul.mubr.bf16.gmra.mrb[0].mxu0 %v2385
    %v2521 = vpop.f32.mrb[0].mxu0
    %v2522 = vadd.f32 %v2413, %v2521
    %v2523 = vpop.f32.mrb[0].mxu0
    %v2524 = vpop.f32.mrb[0].mxu0
    %v2525 = vadd.f32 %v2413, %v2524
    %v2526 = vpop.f32.mrb[0].mxu0
    %2527 = vmatprep.mubr.bf16.mxu0 0
    %2528 = vmatmul.mubr.bf16.gmra.mrb[0].mxu0 %v2386
    %v2529 = vpop.f32.mrb[0].mxu0
    %v2530 = vadd.f32 %v2413, %v2529
    %v2531 = vpop.f32.mrb[0].mxu0
    %v2532 = vpop.f32.mrb[0].mxu0
    %v2533 = vadd.f32 %v2413, %v2532
    %v2534 = vpop.f32.mrb[0].mxu0
    %2535 = vmatprep.mubr.bf16.mxu0 0
    %2536 = vmatmul.mubr.bf16.gmra.mrb[0].mxu0 %v2387
    %v2537 = vpop.f32.mrb[0].mxu0
    %v2538 = vadd.f32 %v2413, %v2537
    %v2539 = vpop.f32.mrb[0].mxu0
    %v2540 = vpop.f32.mrb[0].mxu0
    %v2541 = vadd.f32 %v2413, %v2540
    %v2542 = vpop.f32.mrb[0].mxu0
    %2543 = vmatprep.mubr.bf16.mxu0 0
    %2544 = vmatmul.mubr.bf16.gmra.mrb[0].mxu0 %v2388
    %v2545 = vpop.f32.mrb[0].mxu0
    %v2546 = vadd.f32 %v2413, %v2545
    %v2547 = vpop.f32.mrb[0].mxu0
    %v2548 = vpop.f32.mrb[0].mxu0
    %v2549 = vadd.f32 %v2413, %v2548
    %v2550 = vpop.f32.mrb[0].mxu0
    %2551 = vmatprep.mubr.bf16.mxu0 0
    %2552 = vmatmul.mubr.bf16.gmra.mrb[0].mxu0 %v2389
    %v2553 = vpop.f32.mrb[0].mxu0
    %v2554 = vadd.f32 %v2413, %v2553
    %v2555 = vpop.f32.mrb[0].mxu0
    %v2556 = vpop.f32.mrb[0].mxu0
    %v2557 = vadd.f32 %v2413, %v2556
    %v2558 = vpop.f32.mrb[0].mxu0
    %2559 = vdwg.mxu0
    %v2560 = vmax.f32 %v2498, 0.0
    %v2561 = vmax.f32 %v2501, 0.0
    %v2562 = vmax.f32 %v2506, 0.0
    %v2563 = vmax.f32 %v2509, 0.0
    %v2564 = vmax.f32 %v2514, 0.0
    %v2565 = vmax.f32 %v2517, 0.0
    %v2566 = vmax.f32 %v2522, 0.0
    %v2567 = vmax.f32 %v2525, 0.0
    %v2568 = vmax.f32 %v2530, 0.0
    %v2569 = vmax.f32 %v2533, 0.0
    %v2570 = vmax.f32 %v2538, 0.0
    %v2571 = vmax.f32 %v2541, 0.0
    %v2572 = vmax.f32 %v2546, 0.0
    %v2573 = vmax.f32 %v2549, 0.0
    %v2574 = vmax.f32 %v2554, 0.0
    %v2575 = vmax.f32 %v2557, 0.0
    %v2576 = vpack.c.bf16 %v2561, %v2560
    %v2577 = vpack.c.bf16 %v2563, %v2562
    %v2578 = vpack.c.bf16 %v2565, %v2564
    %v2579 = vpack.c.bf16 %v2567, %v2566
    %v2580 = vpack.c.bf16 %v2569, %v2568
    %v2581 = vpack.c.bf16 %v2571, %v2570
    %v2582 = vpack.c.bf16 %v2573, %v2572
    %v2583 = vpack.c.bf16 %v2575, %v2574
    %v2592 = vunpack.c.l.b16 %v2576
    %v2593 = vunpack.c.h.b16 %v2576
    %v2594 = vunpack.c.l.b16 %v2577
    %v2595 = vunpack.c.h.b16 %v2577
    %v2596 = vunpack.c.l.b16 %v2578
    %v2597 = vunpack.c.h.b16 %v2578
    %v2598 = vunpack.c.l.b16 %v2579
    %v2599 = vunpack.c.h.b16 %v2579
    %v2600 = vunpack.c.l.b16 %v2580
    %v2601 = vunpack.c.h.b16 %v2580
    %v2602 = vunpack.c.l.b16 %v2581
    %v2603 = vunpack.c.h.b16 %v2581
    %v2604 = vunpack.c.l.b16 %v2582
    %v2605 = vunpack.c.h.b16 %v2582
    %v2606 = vunpack.c.l.b16 %v2583
    %v2607 = vunpack.c.h.b16 %v2583
    %v2608 = vpack.c.b16 %v2592, %v2592
    %v2609 = vpack.c.b16 %v2593, %v2593
    %v2610 = vpack.c.b16 %v2594, %v2594
    %v2611 = vpack.c.b16 %v2595, %v2595
    %v2612 = vpack.c.b16 %v2596, %v2596
    %v2613 = vpack.c.b16 %v2597, %v2597
    %v2614 = vpack.c.b16 %v2598, %v2598
    %v2615 = vpack.c.b16 %v2599, %v2599
    %v2616 = vpack.c.b16 %v2600, %v2600
    %v2617 = vpack.c.b16 %v2601, %v2601
    %v2618 = vpack.c.b16 %v2602, %v2602
    %v2619 = vpack.c.b16 %v2603, %v2603
    %v2620 = vpack.c.b16 %v2604, %v2604
    %v2621 = vpack.c.b16 %v2605, %v2605
    %v2622 = vpack.c.b16 %v2606, %v2606
    %v2623 = vpack.c.b16 %v2607, %v2607
    %2640 = vst [vmem:[#allocation10 + $0xc] sm:$0xf] %v2608
    %2641 = vst [vmem:[#allocation10 + $0x20] sm:$0xf] %v2609
    %2642 = vst [vmem:[#allocation10 + $0x34] sm:$0xf] %v2610
    %2643 = vst [vmem:[#allocation10 + $0x48] sm:$0xf] %v2611
    %2644 = vst [vmem:[#allocation10 + $0x5c] sm:$0xf] %v2612
    %2645 = vst [vmem:[#allocation10 + $0x70] sm:$0xf] %v2613
    %2646 = vst [vmem:[#allocation10 + $0x84] sm:$0xf] %v2614
    %2647 = vst [vmem:[#allocation10 + $0x98] sm:$0xf] %v2615
    %2648 = vst [vmem:[#allocation10 + $0xac] sm:$0xf] %v2616
    %2649 = vst [vmem:[#allocation10 + $0xc0] sm:$0xf] %v2617
    %2650 = vst [vmem:[#allocation10 + $0xd4] sm:$0xf] %v2618
    %2651 = vst [vmem:[#allocation10 + $0xe8] sm:$0xf] %v2619
    %2652 = vst [vmem:[#allocation10 + $0xfc] sm:$0xf] %v2620
    %2653 = vst [vmem:[#allocation10 + $0x110] sm:$0xf] %v2621
    %2654 = vst [vmem:[#allocation10 + $0x124] sm:$0xf] %v2622
    %2655 = vst [vmem:[#allocation10 + $0x138] sm:$0xf] %v2623
    %v2656 = vld [vmem:[#allocation2] sm:$0xf]
    %v2657 = vld [vmem:[#allocation2 + $0x4] sm:$0xf]
    %v2658 = vld [vmem:[#allocation2 + $0x8] sm:$0xf]
    %v2659 = vld [vmem:[#allocation2 + $0xc] sm:$0xf]
    %v2660 = vld [vmem:[#allocation2 + $0x10] sm:$0xf]
    %v2661 = vld [vmem:[#allocation2 + $0x14] sm:$0xf]
    %v2662 = vld [vmem:[#allocation2 + $0x18] sm:$0xf]
    %v2663 = vld [vmem:[#allocation2 + $0x1c] sm:$0xf]
    %v2664 = vld [vmem:[#allocation2 + $0x20] sm:$0xf]
    %v2665 = vld [vmem:[#allocation2 + $0x24] sm:$0xf]
    %v2666 = vld [vmem:[#allocation2 + $0x28] sm:$0xf]
    %v2667 = vld [vmem:[#allocation2 + $0x2c] sm:$0xf]
    %v2668 = vld [vmem:[#allocation2 + $0x30] sm:$0xf]
    %v2669 = vld [vmem:[#allocation2 + $0x34] sm:$0xf]
    %v2670 = vld [vmem:[#allocation2 + $0x38] sm:$0xf]
    %v2671 = vld [vmem:[#allocation2 + $0x3c] sm:$0xf]
    %v2688 = vunpack.c.l.b16 %v2656
    %v2689 = vunpack.c.l.b16 %v2657
    %v2690 = vunpack.c.l.b16 %v2658
    %v2691 = vunpack.c.l.b16 %v2659
    %v2692 = vunpack.c.l.b16 %v2660
    %v2693 = vunpack.c.l.b16 %v2661
    %v2694 = vunpack.c.l.b16 %v2662
    %v2695 = vunpack.c.l.b16 %v2663
    %v2696 = vunpack.c.l.b16 %v2664
    %v2697 = vunpack.c.l.b16 %v2665
    %v2698 = vunpack.c.l.b16 %v2666
    %v2699 = vunpack.c.l.b16 %v2667
    %v2700 = vunpack.c.l.b16 %v2668
    %v2701 = vunpack.c.l.b16 %v2669
    %v2702 = vunpack.c.l.b16 %v2670
    %v2703 = vunpack.c.l.b16 %v2671
    %v2704 = vpack.c.b16 %v2689, %v2688
    %v2705 = vpack.c.b16 %v2691, %v2690
    %v2706 = vpack.c.b16 %v2693, %v2692
    %v2707 = vpack.c.b16 %v2695, %v2694
    %v2708 = vpack.c.b16 %v2697, %v2696
    %v2709 = vpack.c.b16 %v2699, %v2698
    %v2710 = vpack.c.b16 %v2701, %v2700
    %v2711 = vpack.c.b16 %v2703, %v2702
    %2720 = vmatprep.subr.bf16.mxu0 0
    %2721 = vmatpush1.bf16.msra.mxu0 %v2576
    %2722 = vmatprep.subr.bf16.mxu0 0
    %2723 = vmatpush1.bf16.msra.mxu0 %v2577
    %2724 = vmatprep.subr.bf16.mxu0 0
    %2725 = vmatpush1.bf16.msra.mxu0 %v2578
    %2726 = vmatprep.subr.bf16.mxu0 0
    %2727 = vmatpush1.bf16.msra.mxu0 %v2579
    %2728 = vmatprep.subr.bf16.mxu0 0
    %2729 = vmatpush1.bf16.msra.mxu0 %v2580
    %2730 = vmatprep.subr.bf16.mxu0 0
    %2731 = vmatpush1.bf16.msra.mxu0 %v2581
    %2732 = vmatprep.subr.bf16.mxu0 0
    %2733 = vmatpush1.bf16.msra.mxu0 %v2582
    %2734 = vmatprep.subr.bf16.mxu0 0
    %2735 = vmatpush1.bf16.msra.mxu0 %v2583
    %2736 = vmatprep.subr.bf16.mxu0 0
    %2737 = vmatpush1.bf16.msra.mxu0 0
    %2738 = vmatprep.subr.bf16.mxu0 0
    %2739 = vmatpush1.bf16.msra.mxu0 0
    %2740 = vmatprep.subr.bf16.mxu0 0
    %2741 = vmatpush1.bf16.msra.mxu0 0
    %2742 = vmatprep.subr.bf16.mxu0 0
    %2743 = vmatpush1.bf16.msra.mxu0 0
    %2744 = vmatprep.subr.bf16.mxu0 0
    %2745 = vmatpush1.bf16.msra.mxu0 0
    %2746 = vmatprep.subr.bf16.mxu0 0
    %2747 = vmatpush1.bf16.msra.mxu0 0
    %2748 = vmatprep.subr.bf16.mxu0 0
    %2749 = vmatpush1.bf16.msra.mxu0 0
    %2750 = vmatprep.subr.bf16.mxu0 0
    %2751 = vmatpush1.bf16.msra.mxu0 0
    %2752 = vmatprep.mubr.bf16.mxu0 0
    %2753 = vmatmul.mubr.bf16.gmra.mrb[0].mxu0 %v2704
    %v2754 = vpop.f32.mrb[0].mxu0
    %v2755 = vadd.f32 0.0, %v2754
    %v2756 = vpop.f32.mrb[0].mxu0
    %v2757 = vpop.f32.mrb[0].mxu0
    %v2758 = vadd.f32 0.0, %v2757
    %v2759 = vpop.f32.mrb[0].mxu0
    %2760 = vmatprep.mubr.bf16.mxu0 0
    %2761 = vmatmul.mubr.bf16.gmra.mrb[0].mxu0 %v2705
    %v2762 = vpop.f32.mrb[0].mxu0
    %v2763 = vadd.f32 0.0, %v2762
    %v2764 = vpop.f32.mrb[0].mxu0
    %v2765 = vpop.f32.mrb[0].mxu0
    %v2766 = vadd.f32 0.0, %v2765
    %v2767 = vpop.f32.mrb[0].mxu0
    %2768 = vmatprep.mubr.bf16.mxu0 0
    %2769 = vmatmul.mubr.bf16.gmra.mrb[0].mxu0 %v2706
    %v2770 = vpop.f32.mrb[0].mxu0
    %v2771 = vadd.f32 0.0, %v2770
    %v2772 = vpop.f32.mrb[0].mxu0
    %v2773 = vpop.f32.mrb[0].mxu0
    %v2774 = vadd.f32 0.0, %v2773
    %v2775 = vpop.f32.mrb[0].mxu0
    %2776 = vmatprep.mubr.bf16.mxu0 0
    %2777 = vmatmul.mubr.bf16.gmra.mrb[0].mxu0 %v2707
    %v2778 = vpop.f32.mrb[0].mxu0
    %v2779 = vadd.f32 0.0, %v2778
    %v2780 = vpop.f32.mrb[0].mxu0
    %v2781 = vpop.f32.mrb[0].mxu0
    %v2782 = vadd.f32 0.0, %v2781
    %v2783 = vpop.f32.mrb[0].mxu0
    %2784 = vmatprep.mubr.bf16.mxu0 0
    %2785 = vmatmul.mubr.bf16.gmra.mrb[0].mxu0 %v2708
    %v2786 = vpop.f32.mrb[0].mxu0
    %v2787 = vadd.f32 0.0, %v2786
    %v2788 = vpop.f32.mrb[0].mxu0
    %v2789 = vpop.f32.mrb[0].mxu0
    %v2790 = vadd.f32 0.0, %v2789
    %v2791 = vpop.f32.mrb[0].mxu0
    %2792 = vmatprep.mubr.bf16.mxu0 0
    %2793 = vmatmul.mubr.bf16.gmra.mrb[0].mxu0 %v2709
    %v2794 = vpop.f32.mrb[0].mxu0
    %v2795 = vadd.f32 0.0, %v2794
    %v2796 = vpop.f32.mrb[0].mxu0
    %v2797 = vpop.f32.mrb[0].mxu0
    %v2798 = vadd.f32 0.0, %v2797
    %v2799 = vpop.f32.mrb[0].mxu0
    %2800 = vmatprep.mubr.bf16.mxu0 0
    %2801 = vmatmul.mubr.bf16.gmra.mrb[0].mxu0 %v2710
    %v2802 = vpop.f32.mrb[0].mxu0
    %v2803 = vadd.f32 0.0, %v2802
    %v2804 = vpop.f32.mrb[0].mxu0
    %v2805 = vpop.f32.mrb[0].mxu0
    %v2806 = vadd.f32 0.0, %v2805
    %v2807 = vpop.f32.mrb[0].mxu0
    %2808 = vmatprep.mubr.bf16.mxu0 0
    %2809 = vmatmul.mubr.bf16.gmra.mrb[0].mxu0 %v2711
    %v2810 = vpop.f32.mrb[0].mxu0
    %v2811 = vadd.f32 0.0, %v2810
    %v2812 = vpop.f32.mrb[0].mxu0
    %v2813 = vpop.f32.mrb[0].mxu0
    %v2814 = vadd.f32 0.0, %v2813
    %v2815 = vpop.f32.mrb[0].mxu0
    %2816 = vdwg.mxu0
    %v2817 = vpack.c.bf16 %v2758, %v2755
    %v2818 = vpack.c.bf16 %v2766, %v2763
    %v2819 = vpack.c.bf16 %v2774, %v2771
    %v2820 = vpack.c.bf16 %v2782, %v2779
    %v2821 = vpack.c.bf16 %v2790, %v2787
    %v2822 = vpack.c.bf16 %v2798, %v2795
    %v2823 = vpack.c.bf16 %v2806, %v2803
    %v2824 = vpack.c.bf16 %v2814, %v2811
    %s2825 = scalar_lea.vmem [#allocation7], 256
    %v2826 = vld [vmem:[%s2825] sm:$0xf]
    %v2827 = vld [vmem:[%s2825 + $0x4] sm:$0xf]
    %v2828 = vld [vmem:[%s2825 + $0x8] sm:$0xf]
    %v2829 = vld [vmem:[%s2825 + $0xc] sm:$0xf]
    %v2830 = vld [vmem:[%s2825 + $0x10] sm:$0xf]
    %v2831 = vld [vmem:[%s2825 + $0x14] sm:$0xf]
    %v2832 = vld [vmem:[%s2825 + $0x18] sm:$0xf]
    %v2833 = vld [vmem:[%s2825 + $0x1c] sm:$0xf]
    %v2834 = vld [vmem:[%s2825 + $0x20] sm:$0xf]
    %v2835 = vld [vmem:[%s2825 + $0x24] sm:$0xf]
    %v2836 = vld [vmem:[%s2825 + $0x28] sm:$0xf]
    %v2837 = vld [vmem:[%s2825 + $0x2c] sm:$0xf]
    %v2838 = vld [vmem:[%s2825 + $0x30] sm:$0xf]
    %v2839 = vld [vmem:[%s2825 + $0x34] sm:$0xf]
    %v2840 = vld [vmem:[%s2825 + $0x38] sm:$0xf]
    %v2841 = vld [vmem:[%s2825 + $0x3c] sm:$0xf]
    %s2842 = scalar_lea.vmem %s3, 4
    %v2843 = vld [vmem:[%s2842] sm:$0x1]
    %v2845 = vlaneseq
    %v2846 = vshrl.u32 %v2845, 7
    %v2847 = vsub.s32 0, %v2846
    %v2848 = vrot.slane %v2843, %v2847
    %v2866 = vunpack.c.l.b16 %v2826
    %v2867 = vunpack.c.l.b16 %v2827
    %v2868 = vunpack.c.l.b16 %v2828
    %v2869 = vunpack.c.l.b16 %v2829
    %v2870 = vunpack.c.l.b16 %v2830
    %v2871 = vunpack.c.l.b16 %v2831
    %v2872 = vunpack.c.l.b16 %v2832
    %v2873 = vunpack.c.l.b16 %v2833
    %v2874 = vunpack.c.l.b16 %v2834
    %v2875 = vunpack.c.l.b16 %v2835
    %v2876 = vunpack.c.l.b16 %v2836
    %v2877 = vunpack.c.l.b16 %v2837
    %v2878 = vunpack.c.l.b16 %v2838
    %v2879 = vunpack.c.l.b16 %v2839
    %v2880 = vunpack.c.l.b16 %v2840
    %v2881 = vunpack.c.l.b16 %v2841
    %v2882 = vpack.c.b16 %v2867, %v2866
    %v2883 = vpack.c.b16 %v2869, %v2868
    %v2884 = vpack.c.b16 %v2871, %v2870
    %v2885 = vpack.c.b16 %v2873, %v2872
    %v2886 = vpack.c.b16 %v2875, %v2874
    %v2887 = vpack.c.b16 %v2877, %v2876
    %v2888 = vpack.c.b16 %v2879, %v2878
    %v2889 = vpack.c.b16 %v2881, %v2880
    %2898 = vmatprep.subr.bf16.mxu0 0
    %2899 = vmatpush1.bf16.msra.mxu0 %v2882
    %2900 = vmatprep.subr.bf16.mxu0 0
    %2901 = vmatpush1.bf16.msra.mxu0 %v2883
    %2902 = vmatprep.subr.bf16.mxu0 0
    %2903 = vmatpush1.bf16.msra.mxu0 %v2884
    %2904 = vmatprep.subr.bf16.mxu0 0
    %2905 = vmatpush1.bf16.msra.mxu0 %v2885
    %2906 = vmatprep.subr.bf16.mxu0 0
    %2907 = vmatpush1.bf16.msra.mxu0 %v2886
    %2908 = vmatprep.subr.bf16.mxu0 0
    %2909 = vmatpush1.bf16.msra.mxu0 %v2887
    %2910 = vmatprep.subr.bf16.mxu0 0
    %2911 = vmatpush1.bf16.msra.mxu0 %v2888
    %2912 = vmatprep.subr.bf16.mxu0 0
    %2913 = vmatpush1.bf16.msra.mxu0 %v2889
    %2914 = vmatprep.subr.bf16.mxu0 0
    %2915 = vmatpush1.bf16.msra.mxu0 0
    %2916 = vmatprep.subr.bf16.mxu0 0
    %2917 = vmatpush1.bf16.msra.mxu0 0
    %2918 = vmatprep.subr.bf16.mxu0 0
    %2919 = vmatpush1.bf16.msra.mxu0 0
    %2920 = vmatprep.subr.bf16.mxu0 0
    %2921 = vmatpush1.bf16.msra.mxu0 0
    %2922 = vmatprep.subr.bf16.mxu0 0
    %2923 = vmatpush1.bf16.msra.mxu0 0
    %2924 = vmatprep.subr.bf16.mxu0 0
    %2925 = vmatpush1.bf16.msra.mxu0 0
    %2926 = vmatprep.subr.bf16.mxu0 0
    %2927 = vmatpush1.bf16.msra.mxu0 0
    %2928 = vmatprep.subr.bf16.mxu0 0
    %2929 = vmatpush1.bf16.msra.mxu0 0
    %2930 = vmatprep.mubr.bf16.mxu0 0
    %2931 = vmatmul.mubr.bf16.gmra.mrb[0].mxu0 %v2817
    %v2932 = vpop.f32.mrb[0].mxu0
    %v2933 = vadd.f32 %v2848, %v2932
    %v2934 = vpop.f32.mrb[0].mxu0
    %v2935 = vpop.f32.mrb[0].mxu0
    %v2936 = vadd.f32 %v2848, %v2935
    %v2937 = vpop.f32.mrb[0].mxu0
    %2938 = vmatprep.mubr.bf16.mxu0 0
    %2939 = vmatmul.mubr.bf16.gmra.mrb[0].mxu0 %v2818
    %v2940 = vpop.f32.mrb[0].mxu0
    %v2941 = vadd.f32 %v2848, %v2940
    %v2942 = vpop.f32.mrb[0].mxu0
    %v2943 = vpop.f32.mrb[0].mxu0
    %v2944 = vadd.f32 %v2848, %v2943
    %v2945 = vpop.f32.mrb[0].mxu0
    %2946 = vmatprep.mubr.bf16.mxu0 0
    %2947 = vmatmul.mubr.bf16.gmra.mrb[0].mxu0 %v2819
    %v2948 = vpop.f32.mrb[0].mxu0
    %v2949 = vadd.f32 %v2848, %v2948
    %v2950 = vpop.f32.mrb[0].mxu0
    %v2951 = vpop.f32.mrb[0].mxu0
    %v2952 = vadd.f32 %v2848, %v2951
    %v2953 = vpop.f32.mrb[0].mxu0
    %2954 = vmatprep.mubr.bf16.mxu0 0
    %2955 = vmatmul.mubr.bf16.gmra.mrb[0].mxu0 %v2820
    %v2956 = vpop.f32.mrb[0].mxu0
    %v2957 = vadd.f32 %v2848, %v2956
    %v2958 = vpop.f32.mrb[0].mxu0
    %v2959 = vpop.f32.mrb[0].mxu0
    %v2960 = vadd.f32 %v2848, %v2959
    %v2961 = vpop.f32.mrb[0].mxu0
    %2962 = vmatprep.mubr.bf16.mxu0 0
    %2963 = vmatmul.mubr.bf16.gmra.mrb[0].mxu0 %v2821
    %v2964 = vpop.f32.mrb[0].mxu0
    %v2965 = vadd.f32 %v2848, %v2964
    %v2966 = vpop.f32.mrb[0].mxu0
    %v2967 = vpop.f32.mrb[0].mxu0
    %v2968 = vadd.f32 %v2848, %v2967
    %v2969 = vpop.f32.mrb[0].mxu0
    %2970 = vmatprep.mubr.bf16.mxu0 0
    %2971 = vmatmul.mubr.bf16.gmra.mrb[0].mxu0 %v2822
    %v2972 = vpop.f32.mrb[0].mxu0
    %v2973 = vadd.f32 %v2848, %v2972
    %v2974 = vpop.f32.mrb[0].mxu0
    %v2975 = vpop.f32.mrb[0].mxu0
    %v2976 = vadd.f32 %v2848, %v2975
    %v2977 = vpop.f32.mrb[0].mxu0
    %2978 = vmatprep.mubr.bf16.mxu0 0
    %2979 = vmatmul.mubr.bf16.gmra.mrb[0].mxu0 %v2823
    %v2980 = vpop.f32.mrb[0].mxu0
    %v2981 = vadd.f32 %v2848, %v2980
    %v2982 = vpop.f32.mrb[0].mxu0
    %v2983 = vpop.f32.mrb[0].mxu0
    %v2984 = vadd.f32 %v2848, %v2983
    %v2985 = vpop.f32.mrb[0].mxu0
    %2986 = vmatprep.mubr.bf16.mxu0 0
    %2987 = vmatmul.mubr.bf16.gmra.mrb[0].mxu0 %v2824
    %v2988 = vpop.f32.mrb[0].mxu0
    %v2989 = vadd.f32 %v2848, %v2988
    %v2990 = vpop.f32.mrb[0].mxu0
    %v2991 = vpop.f32.mrb[0].mxu0
    %v2992 = vadd.f32 %v2848, %v2991
    %v2993 = vpop.f32.mrb[0].mxu0
    %2994 = vdwg.mxu0
    %v2995 = vmax.f32 %v2933, 0.0
    %v2996 = vmax.f32 %v2936, 0.0
    %v2997 = vmax.f32 %v2941, 0.0
    %v2998 = vmax.f32 %v2944, 0.0
    %v2999 = vmax.f32 %v2949, 0.0
    %v3000 = vmax.f32 %v2952, 0.0
    %v3001 = vmax.f32 %v2957, 0.0
    %v3002 = vmax.f32 %v2960, 0.0
    %v3003 = vmax.f32 %v2965, 0.0
    %v3004 = vmax.f32 %v2968, 0.0
    %v3005 = vmax.f32 %v2973, 0.0
    %v3006 = vmax.f32 %v2976, 0.0
    %v3007 = vmax.f32 %v2981, 0.0
    %v3008 = vmax.f32 %v2984, 0.0
    %v3009 = vmax.f32 %v2989, 0.0
    %v3010 = vmax.f32 %v2992, 0.0
    %v3011 = vpack.c.bf16 %v2996, %v2995
    %v3012 = vpack.c.bf16 %v2998, %v2997
    %v3013 = vpack.c.bf16 %v3000, %v2999
    %v3014 = vpack.c.bf16 %v3002, %v3001
    %v3015 = vpack.c.bf16 %v3004, %v3003
    %v3016 = vpack.c.bf16 %v3006, %v3005
    %v3017 = vpack.c.bf16 %v3008, %v3007
    %v3018 = vpack.c.bf16 %v3010, %v3009
    %s3019 = scalar_lea.vmem [#allocation8], 256
    %v3020 = vld [vmem:[%s3019] sm:$0xf]
    %v3021 = vld [vmem:[%s3019 + $0x4] sm:$0xf]
    %v3022 = vld [vmem:[%s3019 + $0x8] sm:$0xf]
    %v3023 = vld [vmem:[%s3019 + $0xc] sm:$0xf]
    %v3024 = vld [vmem:[%s3019 + $0x10] sm:$0xf]
    %v3025 = vld [vmem:[%s3019 + $0x14] sm:$0xf]
    %v3026 = vld [vmem:[%s3019 + $0x18] sm:$0xf]
    %v3027 = vld [vmem:[%s3019 + $0x1c] sm:$0xf]
    %v3028 = vld [vmem:[%s3019 + $0x20] sm:$0xf]
    %v3029 = vld [vmem:[%s3019 + $0x24] sm:$0xf]
    %v3030 = vld [vmem:[%s3019 + $0x28] sm:$0xf]
    %v3031 = vld [vmem:[%s3019 + $0x2c] sm:$0xf]
    %v3032 = vld [vmem:[%s3019 + $0x30] sm:$0xf]
    %v3033 = vld [vmem:[%s3019 + $0x34] sm:$0xf]
    %v3034 = vld [vmem:[%s3019 + $0x38] sm:$0xf]
    %v3035 = vld [vmem:[%s3019 + $0x3c] sm:$0xf]
    %s3036 = scalar_lea.vmem %s5, 4
    %v3037 = vld [vmem:[%s3036] sm:$0x1]
    %v3039 = vlaneseq
    %v3040 = vshrl.u32 %v3039, 7
    %v3041 = vsub.s32 0, %v3040
    %v3042 = vrot.slane %v3037, %v3041
    %v3060 = vunpack.c.l.b16 %v3020
    %v3061 = vunpack.c.l.b16 %v3021
    %v3062 = vunpack.c.l.b16 %v3022
    %v3063 = vunpack.c.l.b16 %v3023
    %v3064 = vunpack.c.l.b16 %v3024
    %v3065 = vunpack.c.l.b16 %v3025
    %v3066 = vunpack.c.l.b16 %v3026
    %v3067 = vunpack.c.l.b16 %v3027
    %v3068 = vunpack.c.l.b16 %v3028
    %v3069 = vunpack.c.l.b16 %v3029
    %v3070 = vunpack.c.l.b16 %v3030
    %v3071 = vunpack.c.l.b16 %v3031
    %v3072 = vunpack.c.l.b16 %v3032
    %v3073 = vunpack.c.l.b16 %v3033
    %v3074 = vunpack.c.l.b16 %v3034
    %v3075 = vunpack.c.l.b16 %v3035
    %v3076 = vpack.c.b16 %v3061, %v3060
    %v3077 = vpack.c.b16 %v3063, %v3062
    %v3078 = vpack.c.b16 %v3065, %v3064
    %v3079 = vpack.c.b16 %v3067, %v3066
    %v3080 = vpack.c.b16 %v3069, %v3068
    %v3081 = vpack.c.b16 %v3071, %v3070
    %v3082 = vpack.c.b16 %v3073, %v3072
    %v3083 = vpack.c.b16 %v3075, %v3074
    %3092 = vmatprep.subr.bf16.mxu0 0
    %3093 = vmatpush1.bf16.msra.mxu0 %v3076
    %3094 = vmatprep.subr.bf16.mxu0 0
    %3095 = vmatpush1.bf16.msra.mxu0 %v3077
    %3096 = vmatprep.subr.bf16.mxu0 0
    %3097 = vmatpush1.bf16.msra.mxu0 %v3078
    %3098 = vmatprep.subr.bf16.mxu0 0
    %3099 = vmatpush1.bf16.msra.mxu0 %v3079
    %3100 = vmatprep.subr.bf16.mxu0 0
    %3101 = vmatpush1.bf16.msra.mxu0 %v3080
    %3102 = vmatprep.subr.bf16.mxu0 0
    %3103 = vmatpush1.bf16.msra.mxu0 %v3081
    %3104 = vmatprep.subr.bf16.mxu0 0
    %3105 = vmatpush1.bf16.msra.mxu0 %v3082
    %3106 = vmatprep.subr.bf16.mxu0 0
    %3107 = vmatpush1.bf16.msra.mxu0 %v3083
    %3108 = vmatprep.subr.bf16.mxu0 0
    %3109 = vmatpush1.bf16.msra.mxu0 0
    %3110 = vmatprep.subr.bf16.mxu0 0
    %3111 = vmatpush1.bf16.msra.mxu0 0
    %3112 = vmatprep.subr.bf16.mxu0 0
    %3113 = vmatpush1.bf16.msra.mxu0 0
    %3114 = vmatprep.subr.bf16.mxu0 0
    %3115 = vmatpush1.bf16.msra.mxu0 0
    %3116 = vmatprep.subr.bf16.mxu0 0
    %3117 = vmatpush1.bf16.msra.mxu0 0
    %3118 = vmatprep.subr.bf16.mxu0 0
    %3119 = vmatpush1.bf16.msra.mxu0 0
    %3120 = vmatprep.subr.bf16.mxu0 0
    %3121 = vmatpush1.bf16.msra.mxu0 0
    %3122 = vmatprep.subr.bf16.mxu0 0
    %3123 = vmatpush1.bf16.msra.mxu0 0
    %3124 = vmatprep.mubr.bf16.mxu0 0
    %3125 = vmatmul.mubr.bf16.gmra.mrb[0].mxu0 %v3011
    %v3126 = vpop.f32.mrb[0].mxu0
    %v3127 = vadd.f32 %v3042, %v3126
    %v3128 = vpop.f32.mrb[0].mxu0
    %v3129 = vpop.f32.mrb[0].mxu0
    %v3130 = vadd.f32 %v3042, %v3129
    %v3131 = vpop.f32.mrb[0].mxu0
    %3132 = vmatprep.mubr.bf16.mxu0 0
    %3133 = vmatmul.mubr.bf16.gmra.mrb[0].mxu0 %v3012
    %v3134 = vpop.f32.mrb[0].mxu0
    %v3135 = vadd.f32 %v3042, %v3134
    %v3136 = vpop.f32.mrb[0].mxu0
    %v3137 = vpop.f32.mrb[0].mxu0
    %v3138 = vadd.f32 %v3042, %v3137
    %v3139 = vpop.f32.mrb[0].mxu0
    %3140 = vmatprep.mubr.bf16.mxu0 0
    %3141 = vmatmul.mubr.bf16.gmra.mrb[0].mxu0 %v3013
    %v3142 = vpop.f32.mrb[0].mxu0
    %v3143 = vadd.f32 %v3042, %v3142
    %v3144 = vpop.f32.mrb[0].mxu0
    %v3145 = vpop.f32.mrb[0].mxu0
    %v3146 = vadd.f32 %v3042, %v3145
    %v3147 = vpop.f32.mrb[0].mxu0
    %3148 = vmatprep.mubr.bf16.mxu0 0
    %3149 = vmatmul.mubr.bf16.gmra.mrb[0].mxu0 %v3014
    %v3150 = vpop.f32.mrb[0].mxu0
    %v3151 = vadd.f32 %v3042, %v3150
    %v3152 = vpop.f32.mrb[0].mxu0
    %v3153 = vpop.f32.mrb[0].mxu0
    %v3154 = vadd.f32 %v3042, %v3153
    %v3155 = vpop.f32.mrb[0].mxu0
    %3156 = vmatprep.mubr.bf16.mxu0 0
    %3157 = vmatmul.mubr.bf16.gmra.mrb[0].mxu0 %v3015
    %v3158 = vpop.f32.mrb[0].mxu0
    %v3159 = vadd.f32 %v3042, %v3158
    %v3160 = vpop.f32.mrb[0].mxu0
    %v3161 = vpop.f32.mrb[0].mxu0
    %v3162 = vadd.f32 %v3042, %v3161
    %v3163 = vpop.f32.mrb[0].mxu0
    %3164 = vmatprep.mubr.bf16.mxu0 0
    %3165 = vmatmul.mubr.bf16.gmra.mrb[0].mxu0 %v3016
    %v3166 = vpop.f32.mrb[0].mxu0
    %v3167 = vadd.f32 %v3042, %v3166
    %v3168 = vpop.f32.mrb[0].mxu0
    %v3169 = vpop.f32.mrb[0].mxu0
    %v3170 = vadd.f32 %v3042, %v3169
    %v3171 = vpop.f32.mrb[0].mxu0
    %3172 = vmatprep.mubr.bf16.mxu0 0
    %3173 = vmatmul.mubr.bf16.gmra.mrb[0].mxu0 %v3017
    %v3174 = vpop.f32.mrb[0].mxu0
    %v3175 = vadd.f32 %v3042, %v3174
    %v3176 = vpop.f32.mrb[0].mxu0
    %v3177 = vpop.f32.mrb[0].mxu0
    %v3178 = vadd.f32 %v3042, %v3177
    %v3179 = vpop.f32.mrb[0].mxu0
    %3180 = vmatprep.mubr.bf16.mxu0 0
    %3181 = vmatmul.mubr.bf16.gmra.mrb[0].mxu0 %v3018
    %v3182 = vpop.f32.mrb[0].mxu0
    %v3183 = vadd.f32 %v3042, %v3182
    %v3184 = vpop.f32.mrb[0].mxu0
    %v3185 = vpop.f32.mrb[0].mxu0
    %v3186 = vadd.f32 %v3042, %v3185
    %v3187 = vpop.f32.mrb[0].mxu0
    %3188 = vdwg.mxu0
    %v3189 = vpack.c.bf16 %v3130, %v3127
    %v3190 = vpack.c.bf16 %v3138, %v3135
    %v3191 = vpack.c.bf16 %v3146, %v3143
    %v3192 = vpack.c.bf16 %v3154, %v3151
    %v3193 = vpack.c.bf16 %v3162, %v3159
    %v3194 = vpack.c.bf16 %v3170, %v3167
    %v3195 = vpack.c.bf16 %v3178, %v3175
    %v3196 = vpack.c.bf16 %v3186, %v3183
    %v3205 = vunpack.c.l.b16 %v3189
    %v3206 = vunpack.c.h.b16 %v3189
    %v3207 = vunpack.c.l.b16 %v3190
    %v3208 = vunpack.c.h.b16 %v3190
    %v3209 = vunpack.c.l.b16 %v3191
    %v3210 = vunpack.c.h.b16 %v3191
    %v3211 = vunpack.c.l.b16 %v3192
    %v3212 = vunpack.c.h.b16 %v3192
    %v3213 = vunpack.c.l.b16 %v3193
    %v3214 = vunpack.c.h.b16 %v3193
    %v3215 = vunpack.c.l.b16 %v3194
    %v3216 = vunpack.c.h.b16 %v3194
    %v3217 = vunpack.c.l.b16 %v3195
    %v3218 = vunpack.c.h.b16 %v3195
    %v3219 = vunpack.c.l.b16 %v3196
    %v3220 = vunpack.c.h.b16 %v3196
    %v3221 = vpack.c.b16 %v3205, %v3205
    %v3222 = vpack.c.b16 %v3206, %v3206
    %v3223 = vpack.c.b16 %v3207, %v3207
    %v3224 = vpack.c.b16 %v3208, %v3208
    %v3225 = vpack.c.b16 %v3209, %v3209
    %v3226 = vpack.c.b16 %v3210, %v3210
    %v3227 = vpack.c.b16 %v3211, %v3211
    %v3228 = vpack.c.b16 %v3212, %v3212
    %v3229 = vpack.c.b16 %v3213, %v3213
    %v3230 = vpack.c.b16 %v3214, %v3214
    %v3231 = vpack.c.b16 %v3215, %v3215
    %v3232 = vpack.c.b16 %v3216, %v3216
    %v3233 = vpack.c.b16 %v3217, %v3217
    %v3234 = vpack.c.b16 %v3218, %v3218
    %v3235 = vpack.c.b16 %v3219, %v3219
    %v3236 = vpack.c.b16 %v3220, %v3220
    %3253 = vst [vmem:[#allocation10 + $0x10] sm:$0xf] %v3221
    %3254 = vst [vmem:[#allocation10 + $0x24] sm:$0xf] %v3222
    %3255 = vst [vmem:[#allocation10 + $0x38] sm:$0xf] %v3223
    %3256 = vst [vmem:[#allocation10 + $0x4c] sm:$0xf] %v3224
    %3257 = vst [vmem:[#allocation10 + $0x60] sm:$0xf] %v3225
    %3258 = vst [vmem:[#allocation10 + $0x74] sm:$0xf] %v3226
    %3259 = vst [vmem:[#allocation10 + $0x88] sm:$0xf] %v3227
    %3260 = vst [vmem:[#allocation10 + $0x9c] sm:$0xf] %v3228
    %3261 = vst [vmem:[#allocation10 + $0xb0] sm:$0xf] %v3229
    %3262 = vst [vmem:[#allocation10 + $0xc4] sm:$0xf] %v3230
    %3263 = vst [vmem:[#allocation10 + $0xd8] sm:$0xf] %v3231
    %3264 = vst [vmem:[#allocation10 + $0xec] sm:$0xf] %v3232
    %3265 = vst [vmem:[#allocation10 + $0x100] sm:$0xf] %v3233
    %3266 = vst [vmem:[#allocation10 + $0x114] sm:$0xf] %v3234
    %3267 = vst [vmem:[#allocation10 + $0x128] sm:$0xf] %v3235
    %3268 = vst [vmem:[#allocation10 + $0x13c] sm:$0xf] %v3236
    // Predicated region
    $region42: #{tpu_custom_call.1} parent=1 // pred_check
      _
    $region43: #{tpu_custom_call.1} parent=1 // pred_check_branch
      %3270 = sbr.rel (0) target = $region45
    $region44: #{tpu_custom_call.1} parent=1 // pred_region
      %s3272 = ssub.s32 5120, 5120
      %3273 = vsyncadd [#allocation4], %s3272
      %s3274 = sshll.u32 [#allocation10], 4
      %s3275 = int_to_ptr.vmem [resolvable:$true] %s3274
      %3280 = dma.vmem_to_hbm [thread:$0]  %s3275, 5120, %s6, [#allocation4], 320, 320, 20
    $region45: #{tpu_custom_call.1} parent=1 // pred_fallthru
      _
    // Predicated region
    $region46: #{tpu_custom_call.1} parent=1 // pred_check
      _
    $region47: #{tpu_custom_call.1} parent=1 // pred_check_branch
      %3282 = sbr.rel (0) target = $region49
    $region48: #{tpu_custom_call.1} parent=1 // pred_region
      %3283 = dma.done [#allocation4], 5120
    $region49: #{tpu_custom_call.1} parent=1 // pred_fallthru
      _
    %3284 = vsyncpa [#allocation3], 1
    %3285 = vsyncpa [#allocation6], 1
    %3286 = vsyncpa [#allocation9], 1
    %3287 = vsyncpa [#allocation4], 1

</llo_original>
